<compile_context>
chip_gen: v7x
topology: tpu7x:2x2x1
jax: 0.10.0
libtpu: 0.0.40
codegen_flags: <defaults>
</compile_context>

<pallas_src>
import functools

import jax
import jax.numpy as jnp
import numpy as np
from jax.experimental import pallas as pl
from jax.experimental.pallas import tpu as pltpu

LANE = 128


def _round_up(n, m):
    return ((n + m - 1) // m) * m


def _pad2(a, rows, cols):
    return jnp.pad(a, ((0, rows - a.shape[0]), (0, cols - a.shape[1])))


def _rnn_kernel(T,
                x_ref, s0_ref,
                w1x_ref, w1s_ref, b1_ref,
                w2_ref, b2_ref,
                w3l_ref, b3l_ref, w3s_ref, b3s_ref,
                logits_ref, sfinal_ref,
                xw1_scratch):
    # Prologue: batched input-half of layer 1 for all T rows in one MXU matmul.
    xw1_scratch[...] = (
        jnp.dot(x_ref[...], w1x_ref[...], preferred_element_type=jnp.float32)
        + b1_ref[...])

    w1s = w1s_ref[...]
    w2 = w2_ref[...]
    b2 = b2_ref[...]
    w3l = w3l_ref[...]
    b3l = b3l_ref[...]
    w3s = w3s_ref[...]
    b3s = b3s_ref[...]

    def step(t, s):
        # h1 = tanh(x_t @ W1_x + b1 + s @ W1_s)   (x-half precomputed above)
        h1 = jnp.tanh(xw1_scratch[pl.ds(t, 1), :]
                      + jnp.dot(s, w1s, preferred_element_type=jnp.float32))
        h2 = jnp.tanh(jnp.dot(h1, w2, preferred_element_type=jnp.float32) + b2)
        # Logits matmul is off the recurrence critical path; write row t.
        logits_ref[pl.ds(t, 1), :] = (
            jnp.dot(h2, w3l, preferred_element_type=jnp.float32) + b3l)
        # Only the state matmul feeds step t+1.
        return jnp.dot(h2, w3s, preferred_element_type=jnp.float32) + b3s

    s_final = jax.lax.fori_loop(0, T, step, s0_ref[...], unroll=True)
    sfinal_ref[...] = s_final


def rnn_forward(x, params, state=None):
    """x: (b1, b2, vocab) or (1, vocab).  Returns (y, final_state)."""
    w1, b1, w2, b2, w3, b3 = params
    c = w1.shape[0]
    vocab_size = x.shape[-1]
    state_size = c - vocab_size

    single_step = (x.ndim == 2)
    x_flat = x.reshape(-1, vocab_size)
    T = x_flat.shape[0]

    s0 = jnp.zeros((1, state_size), jnp.float32) if state is None else state

    # Padded (lane-dense) sizes.
    c_p = _round_up(c, LANE)
    v_p = _round_up(vocab_size, LANE)
    s_p = _round_up(state_size, LANE)

    # Split weights (W1 by input rows, W3/b3 by output cols) and zero-pad.
    w1x = _pad2(w1[:vocab_size, :], v_p, c_p)
    w1s = _pad2(w1[vocab_size:, :], s_p, c_p)
    b1p = _pad2(b1, 1, c_p)
    w2p = _pad2(w2, c_p, c_p)
    b2p = _pad2(b2, 1, c_p)
    w3l = _pad2(w3[:, :vocab_size], c_p, v_p)
    b3l = _pad2(b3[:, :vocab_size], 1, v_p)
    w3s = _pad2(w3[:, vocab_size:], c_p, s_p)
    b3s = _pad2(b3[:, vocab_size:], 1, s_p)

    x_pad = _pad2(x_flat, T, v_p)
    s0_pad = _pad2(s0, 1, s_p)

    kernel = functools.partial(_rnn_kernel, T)
    const = lambda i: (0, 0)  # every operand is a single full-array block

    logits_pad, sfinal_pad = pl.pallas_call(
        kernel,
        out_shape=(
            jax.ShapeDtypeStruct((T, v_p), jnp.float32),
            jax.ShapeDtypeStruct((1, s_p), jnp.float32),
        ),
        grid_spec=pltpu.PrefetchScalarGridSpec(
            num_scalar_prefetch=0,
            grid=(1,),
            in_specs=[
                pl.BlockSpec((T, v_p), const),   # x (all T rows)
                pl.BlockSpec((1, s_p), const),   # initial state
                pl.BlockSpec((v_p, c_p), const),  # W1_x
                pl.BlockSpec((s_p, c_p), const),  # W1_s
                pl.BlockSpec((1, c_p), const),    # b1
                pl.BlockSpec((c_p, c_p), const),  # W2
                pl.BlockSpec((1, c_p), const),    # b2
                pl.BlockSpec((c_p, v_p), const),  # W3_logits
                pl.BlockSpec((1, v_p), const),    # b3_logits
                pl.BlockSpec((c_p, s_p), const),  # W3_state
                pl.BlockSpec((1, s_p), const),    # b3_state
            ],
            out_specs=[
                pl.BlockSpec((T, v_p), const),    # logits (resident, bulk writeback)
                pl.BlockSpec((1, s_p), const),    # final state
            ],
            scratch_shapes=[pltpu.VMEM((T, c_p), jnp.float32)],  # XW1x + b1
        ),
        compiler_params=pltpu.CompilerParams(
            dimension_semantics=("arbitrary",)),
    )(x_pad, s0_pad, w1x, w1s, b1p, w2p, b2p, w3l, b3l, w3s, b3s)

    logits = logits_pad[:, :vocab_size]
    sfinal = sfinal_pad[:, :state_size]

    if single_step:
        y = logits  # (1, vocab)
    else:
        y = logits.reshape(x.shape[0], x.shape[1], vocab_size)
    return y, sfinal


def init_params(key, vocab_size, state_size):
    """Deterministic init mirroring nn.Linear(c, c) x3 (uniform +-1/sqrt(c))."""
    c = vocab_size + state_size
    bound = 1.0 / np.sqrt(c)
    keys = jax.random.split(key, 6)
    # PyTorch Linear computes x @ W.T + b with W of shape (out, in);
    # store weights already transposed to (in, out).
    w1 = jax.random.uniform(keys[0], (c, c), jnp.float32, -bound, bound)
    b1 = jax.random.uniform(keys[1], (1, c), jnp.float32, -bound, bound)
    w2 = jax.random.uniform(keys[2], (c, c), jnp.float32, -bound, bound)
    b2 = jax.random.uniform(keys[3], (1, c), jnp.float32, -bound, bound)
    w3 = jax.random.uniform(keys[4], (c, c), jnp.float32, -bound, bound)
    b3 = jax.random.uniform(keys[5], (1, c), jnp.float32, -bound, bound)
    return (w1, b1, w2, b2, w3, b3)


def rnn_forward_ref(x, params, state=None):
    """Pure-JAX reference matching the PyTorch loop semantics."""
    w1, b1, w2, b2, w3, b3 = params
    vocab_size = x.shape[-1]
    state_size = w1.shape[0] - vocab_size
    x_flat = x.reshape(-1, vocab_size)
    s = jnp.zeros((1, state_size), jnp.float32) if state is None else state

    def step(s, xt):
        inp = jnp.concatenate([xt[None, :], s], axis=1)
        h1 = jnp.tanh(inp @ w1 + b1)
        h2 = jnp.tanh(h1 @ w2 + b2)
        out = h2 @ w3 + b3
        return out[:, vocab_size:], out[0, :vocab_size]

    s_final, ys = jax.lax.scan(step, s, x_flat)
    return ys.reshape(x.shape[:-1] + (vocab_size,)), s_final


if __name__ == "__main__":
    vocab_size = 16
    state_size = 32
    b1_, b2_ = 2, 8  # sequence batch as in the PyTorch 3-D path

    key = jax.random.PRNGKey(0)
    pkey, xkey, x2key = jax.random.split(key, 3)
    params = init_params(pkey, vocab_size, state_size)
    x = jax.random.normal(xkey, (b1_, b2_, vocab_size), jnp.float32)

    # batched (3-D) path
    y, s_final = rnn_forward(x, params, state=None)
    y = jax.block_until_ready(y)
    s_final = jax.block_until_ready(s_final)

    y_ref, s_ref = rnn_forward_ref(x, params, state=None)
    assert y.shape == (b1_, b2_, vocab_size)
    assert s_final.shape == (1, state_size)
    np.testing.assert_allclose(np.asarray(y), np.asarray(y_ref), rtol=1e-5, atol=1e-5)
    np.testing.assert_allclose(np.asarray(s_final), np.asarray(s_ref), rtol=1e-5, atol=1e-5)

    # single-step (2-D) path
    x2 = jax.random.normal(x2key, (1, vocab_size), jnp.float32)
    y2, s2 = rnn_forward(x2, params, state=None)
    y2 = jax.block_until_ready(y2)
    y2_ref, s2_ref = rnn_forward_ref(x2, params, state=None)
    np.testing.assert_allclose(np.asarray(y2), np.asarray(y2_ref), rtol=1e-5, atol=1e-5)
    np.testing.assert_allclose(np.asarray(s2), np.asarray(s2_ref), rtol=1e-5, atol=1e-5)

    print("KERNEL_OK")
</pallas_src>

<mosaic_0001>
module attributes {stable_mosaic.version = 11 : i64} {
  func.func @_rnn_kernel(%arg0: i32, %arg1: memref<16x128xf32, #tpu.memory_space<vmem>>, %arg2: memref<1x128xf32, #tpu.memory_space<vmem>>, %arg3: memref<128x128xf32, #tpu.memory_space<vmem>>, %arg4: memref<128x128xf32, #tpu.memory_space<vmem>>, %arg5: memref<1x128xf32, #tpu.memory_space<vmem>>, %arg6: memref<128x128xf32, #tpu.memory_space<vmem>>, %arg7: memref<1x128xf32, #tpu.memory_space<vmem>>, %arg8: memref<128x128xf32, #tpu.memory_space<vmem>>, %arg9: memref<1x128xf32, #tpu.memory_space<vmem>>, %arg10: memref<128x128xf32, #tpu.memory_space<vmem>>, %arg11: memref<1x128xf32, #tpu.memory_space<vmem>>, %arg12: memref<16x128xf32, #tpu.memory_space<vmem>>, %arg13: memref<1x128xf32, #tpu.memory_space<vmem>>, %arg14: memref<16x128xf32, #tpu.memory_space<vmem>>) attributes {dimension_semantics = [#tpu.dimension_semantics<arbitrary>], iteration_bounds = array<i64: 1>, scalar_prefetch = 0 : i64, scratch_operands = 1 : i64, tpu.core_type = #tpu.core_type<tc>, window_params = [{pipeline_mode = #tpu.pipeline_mode<synchronous>, transform_indices = @transform_0, window_bounds = array<i64: 16, 128>}, {pipeline_mode = #tpu.pipeline_mode<synchronous>, transform_indices = @transform_1, window_bounds = array<i64: 1, 128>}, {pipeline_mode = #tpu.pipeline_mode<synchronous>, transform_indices = @transform_2, window_bounds = array<i64: 128, 128>}, {pipeline_mode = #tpu.pipeline_mode<synchronous>, transform_indices = @transform_3, window_bounds = array<i64: 128, 128>}, {pipeline_mode = #tpu.pipeline_mode<synchronous>, transform_indices = @transform_4, window_bounds = array<i64: 1, 128>}, {pipeline_mode = #tpu.pipeline_mode<synchronous>, transform_indices = @transform_5, window_bounds = array<i64: 128, 128>}, {pipeline_mode = #tpu.pipeline_mode<synchronous>, transform_indices = @transform_6, window_bounds = array<i64: 1, 128>}, {pipeline_mode = #tpu.pipeline_mode<synchronous>, transform_indices = @transform_7, window_bounds = array<i64: 128, 128>}, {pipeline_mode = #tpu.pipeline_mode<synchronous>, transform_indices = @transform_8, window_bounds = array<i64: 1, 128>}, {pipeline_mode = #tpu.pipeline_mode<synchronous>, transform_indices = @transform_9, window_bounds = array<i64: 128, 128>}, {pipeline_mode = #tpu.pipeline_mode<synchronous>, transform_indices = @transform_10, window_bounds = array<i64: 1, 128>}, {pipeline_mode = #tpu.pipeline_mode<synchronous>, transform_indices = @transform_11, window_bounds = array<i64: 16, 128>}, {pipeline_mode = #tpu.pipeline_mode<synchronous>, transform_indices = @transform_12, window_bounds = array<i64: 1, 128>}]} {
    %c0 = arith.constant 0 : index
    %c0_0 = arith.constant 0 : index
    %0 = vector.load %arg1[%c0, %c0_0] : memref<16x128xf32, #tpu.memory_space<vmem>>, vector<16x128xf32>
    %c0_1 = arith.constant 0 : index
    %c0_2 = arith.constant 0 : index
    %1 = vector.load %arg3[%c0_1, %c0_2] : memref<128x128xf32, #tpu.memory_space<vmem>>, vector<128x128xf32>
    %cst = arith.constant dense<0.000000e+00> : vector<16x128xf32>
    %2 = tpu.matmul %0, %1, %cst {dimension_numbers = #tpu.dot_dimension_numbers<[1], [0], [0], [1], [0, 0, 1, 1], [], []>} : vector<16x128xf32>, vector<128x128xf32>, vector<16x128xf32> -> vector<16x128xf32>
    %c0_3 = arith.constant 0 : index
    %c0_4 = arith.constant 0 : index
    %3 = vector.load %arg5[%c0_3, %c0_4] : memref<1x128xf32, #tpu.memory_space<vmem>>, vector<1x128xf32>
    %4 = vector.broadcast %3 : vector<1x128xf32> to vector<16x128xf32>
    %5 = arith.addf %2, %4 : vector<16x128xf32>
    %c0_5 = arith.constant 0 : index
    %c0_6 = arith.constant 0 : index
    %6 = vector.load %arg14[%c0_5, %c0_6] : memref<16x128xf32, #tpu.memory_space<vmem>>, vector<16x128xf32>
    tpu.vector_store %arg14[%c0_5, %c0_6], %5 {strides = array<i32>} : memref<16x128xf32, #tpu.memory_space<vmem>>, vector<16x128xf32>,
    %c0_7 = arith.constant 0 : index
    %c0_8 = arith.constant 0 : index
    %7 = vector.load %arg4[%c0_7, %c0_8] : memref<128x128xf32, #tpu.memory_space<vmem>>, vector<128x128xf32>
    %c0_9 = arith.constant 0 : index
    %c0_10 = arith.constant 0 : index
    %8 = vector.load %arg6[%c0_9, %c0_10] : memref<128x128xf32, #tpu.memory_space<vmem>>, vector<128x128xf32>
    %c0_11 = arith.constant 0 : index
    %c0_12 = arith.constant 0 : index
    %9 = vector.load %arg7[%c0_11, %c0_12] : memref<1x128xf32, #tpu.memory_space<vmem>>, vector<1x128xf32>
    %c0_13 = arith.constant 0 : index
    %c0_14 = arith.constant 0 : index
    %10 = vector.load %arg8[%c0_13, %c0_14] : memref<128x128xf32, #tpu.memory_space<vmem>>, vector<128x128xf32>
    %c0_15 = arith.constant 0 : index
    %c0_16 = arith.constant 0 : index
    %11 = vector.load %arg9[%c0_15, %c0_16] : memref<1x128xf32, #tpu.memory_space<vmem>>, vector<1x128xf32>
    %c0_17 = arith.constant 0 : index
    %c0_18 = arith.constant 0 : index
    %12 = vector.load %arg10[%c0_17, %c0_18] : memref<128x128xf32, #tpu.memory_space<vmem>>, vector<128x128xf32>
    %c0_19 = arith.constant 0 : index
    %c0_20 = arith.constant 0 : index
    %13 = vector.load %arg11[%c0_19, %c0_20] : memref<1x128xf32, #tpu.memory_space<vmem>>, vector<1x128xf32>
    %c0_21 = arith.constant 0 : index
    %c0_22 = arith.constant 0 : index
    %14 = vector.load %arg2[%c0_21, %c0_22] : memref<1x128xf32, #tpu.memory_space<vmem>>, vector<1x128xf32>
    %c0_i32 = arith.constant 0 : i32
    %15 = arith.index_cast %c0_i32 : i32 to index
    %c0_23 = arith.constant 0 : index
    %16 = vector.load %arg14[%15, %c0_23] : memref<16x128xf32, #tpu.memory_space<vmem>>, vector<1x128xf32>
    %cst_24 = arith.constant dense<0.000000e+00> : vector<1x128xf32>
    %17 = tpu.matmul %14, %7, %cst_24 {dimension_numbers = #tpu.dot_dimension_numbers<[1], [0], [0], [1], [0, 0, 1, 1], [], []>} : vector<1x128xf32>, vector<128x128xf32>, vector<1x128xf32> -> vector<1x128xf32>
    %18 = arith.addf %16, %17 : vector<1x128xf32>
    %19 = math.tanh %18 : vector<1x128xf32>
    %cst_25 = arith.constant dense<0.000000e+00> : vector<1x128xf32>
    %20 = tpu.matmul %19, %8, %cst_25 {dimension_numbers = #tpu.dot_dimension_numbers<[1], [0], [0], [1], [0, 0, 1, 1], [], []>} : vector<1x128xf32>, vector<128x128xf32>, vector<1x128xf32> -> vector<1x128xf32>
    %21 = arith.addf %20, %9 : vector<1x128xf32>
    %22 = math.tanh %21 : vector<1x128xf32>
    %cst_26 = arith.constant dense<0.000000e+00> : vector<1x128xf32>
    %23 = tpu.matmul %22, %10, %cst_26 {dimension_numbers = #tpu.dot_dimension_numbers<[1], [0], [0], [1], [0, 0, 1, 1], [], []>} : vector<1x128xf32>, vector<128x128xf32>, vector<1x128xf32> -> vector<1x128xf32>
    %24 = arith.addf %23, %11 : vector<1x128xf32>
    %25 = arith.index_cast %c0_i32 : i32 to index
    %c0_27 = arith.constant 0 : index
    %26 = vector.load %arg12[%25, %c0_27] : memref<16x128xf32, #tpu.memory_space<vmem>>, vector<1x128xf32>
    tpu.vector_store %arg12[%25, %c0_27], %24 {strides = array<i32>} : memref<16x128xf32, #tpu.memory_space<vmem>>, vector<1x128xf32>,
    %cst_28 = arith.constant dense<0.000000e+00> : vector<1x128xf32>
    %27 = tpu.matmul %22, %12, %cst_28 {dimension_numbers = #tpu.dot_dimension_numbers<[1], [0], [0], [1], [0, 0, 1, 1], [], []>} : vector<1x128xf32>, vector<128x128xf32>, vector<1x128xf32> -> vector<1x128xf32>
    %28 = arith.addf %27, %13 : vector<1x128xf32>
    %c1_i32 = arith.constant 1 : i32
    %29 = arith.index_cast %c1_i32 : i32 to index
    %c0_29 = arith.constant 0 : index
    %30 = vector.load %arg14[%29, %c0_29] : memref<16x128xf32, #tpu.memory_space<vmem>>, vector<1x128xf32>
    %cst_30 = arith.constant dense<0.000000e+00> : vector<1x128xf32>
    %31 = tpu.matmul %28, %7, %cst_30 {dimension_numbers = #tpu.dot_dimension_numbers<[1], [0], [0], [1], [0, 0, 1, 1], [], []>} : vector<1x128xf32>, vector<128x128xf32>, vector<1x128xf32> -> vector<1x128xf32>
    %32 = arith.addf %30, %31 : vector<1x128xf32>
    %33 = math.tanh %32 : vector<1x128xf32>
    %cst_31 = arith.constant dense<0.000000e+00> : vector<1x128xf32>
    %34 = tpu.matmul %33, %8, %cst_31 {dimension_numbers = #tpu.dot_dimension_numbers<[1], [0], [0], [1], [0, 0, 1, 1], [], []>} : vector<1x128xf32>, vector<128x128xf32>, vector<1x128xf32> -> vector<1x128xf32>
    %35 = arith.addf %34, %9 : vector<1x128xf32>
    %36 = math.tanh %35 : vector<1x128xf32>
    %cst_32 = arith.constant dense<0.000000e+00> : vector<1x128xf32>
    %37 = tpu.matmul %36, %10, %cst_32 {dimension_numbers = #tpu.dot_dimension_numbers<[1], [0], [0], [1], [0, 0, 1, 1], [], []>} : vector<1x128xf32>, vector<128x128xf32>, vector<1x128xf32> -> vector<1x128xf32>
    %38 = arith.addf %37, %11 : vector<1x128xf32>
    %39 = arith.index_cast %c1_i32 : i32 to index
    %c0_33 = arith.constant 0 : index
    %40 = vector.load %arg12[%39, %c0_33] : memref<16x128xf32, #tpu.memory_space<vmem>>, vector<1x128xf32>
    tpu.vector_store %arg12[%39, %c0_33], %38 {strides = array<i32>} : memref<16x128xf32, #tpu.memory_space<vmem>>, vector<1x128xf32>,
    %cst_34 = arith.constant dense<0.000000e+00> : vector<1x128xf32>
    %41 = tpu.matmul %36, %12, %cst_34 {dimension_numbers = #tpu.dot_dimension_numbers<[1], [0], [0], [1], [0, 0, 1, 1], [], []>} : vector<1x128xf32>, vector<128x128xf32>, vector<1x128xf32> -> vector<1x128xf32>
    %42 = arith.addf %41, %13 : vector<1x128xf32>
    %c2_i32 = arith.constant 2 : i32
    %43 = arith.index_cast %c2_i32 : i32 to index
    %c0_35 = arith.constant 0 : index
    %44 = vector.load %arg14[%43, %c0_35] : memref<16x128xf32, #tpu.memory_space<vmem>>, vector<1x128xf32>
    %cst_36 = arith.constant dense<0.000000e+00> : vector<1x128xf32>
    %45 = tpu.matmul %42, %7, %cst_36 {dimension_numbers = #tpu.dot_dimension_numbers<[1], [0], [0], [1], [0, 0, 1, 1], [], []>} : vector<1x128xf32>, vector<128x128xf32>, vector<1x128xf32> -> vector<1x128xf32>
    %46 = arith.addf %44, %45 : vector<1x128xf32>
    %47 = math.tanh %46 : vector<1x128xf32>
    %cst_37 = arith.constant dense<0.000000e+00> : vector<1x128xf32>
    %48 = tpu.matmul %47, %8, %cst_37 {dimension_numbers = #tpu.dot_dimension_numbers<[1], [0], [0], [1], [0, 0, 1, 1], [], []>} : vector<1x128xf32>, vector<128x128xf32>, vector<1x128xf32> -> vector<1x128xf32>
    %49 = arith.addf %48, %9 : vector<1x128xf32>
    %50 = math.tanh %49 : vector<1x128xf32>
    %cst_38 = arith.constant dense<0.000000e+00> : vector<1x128xf32>
    %51 = tpu.matmul %50, %10, %cst_38 {dimension_numbers = #tpu.dot_dimension_numbers<[1], [0], [0], [1], [0, 0, 1, 1], [], []>} : vector<1x128xf32>, vector<128x128xf32>, vector<1x128xf32> -> vector<1x128xf32>
    %52 = arith.addf %51, %11 : vector<1x128xf32>
    %53 = arith.index_cast %c2_i32 : i32 to index
    %c0_39 = arith.constant 0 : index
    %54 = vector.load %arg12[%53, %c0_39] : memref<16x128xf32, #tpu.memory_space<vmem>>, vector<1x128xf32>
    tpu.vector_store %arg12[%53, %c0_39], %52 {strides = array<i32>} : memref<16x128xf32, #tpu.memory_space<vmem>>, vector<1x128xf32>,
    %cst_40 = arith.constant dense<0.000000e+00> : vector<1x128xf32>
    %55 = tpu.matmul %50, %12, %cst_40 {dimension_numbers = #tpu.dot_dimension_numbers<[1], [0], [0], [1], [0, 0, 1, 1], [], []>} : vector<1x128xf32>, vector<128x128xf32>, vector<1x128xf32> -> vector<1x128xf32>
    %56 = arith.addf %55, %13 : vector<1x128xf32>
    %c3_i32 = arith.constant 3 : i32
    %57 = arith.index_cast %c3_i32 : i32 to index
    %c0_41 = arith.constant 0 : index
    %58 = vector.load %arg14[%57, %c0_41] : memref<16x128xf32, #tpu.memory_space<vmem>>, vector<1x128xf32>
    %cst_42 = arith.constant dense<0.000000e+00> : vector<1x128xf32>
    %59 = tpu.matmul %56, %7, %cst_42 {dimension_numbers = #tpu.dot_dimension_numbers<[1], [0], [0], [1], [0, 0, 1, 1], [], []>} : vector<1x128xf32>, vector<128x128xf32>, vector<1x128xf32> -> vector<1x128xf32>
    %60 = arith.addf %58, %59 : vector<1x128xf32>
    %61 = math.tanh %60 : vector<1x128xf32>
    %cst_43 = arith.constant dense<0.000000e+00> : vector<1x128xf32>
    %62 = tpu.matmul %61, %8, %cst_43 {dimension_numbers = #tpu.dot_dimension_numbers<[1], [0], [0], [1], [0, 0, 1, 1], [], []>} : vector<1x128xf32>, vector<128x128xf32>, vector<1x128xf32> -> vector<1x128xf32>
    %63 = arith.addf %62, %9 : vector<1x128xf32>
    %64 = math.tanh %63 : vector<1x128xf32>
    %cst_44 = arith.constant dense<0.000000e+00> : vector<1x128xf32>
    %65 = tpu.matmul %64, %10, %cst_44 {dimension_numbers = #tpu.dot_dimension_numbers<[1], [0], [0], [1], [0, 0, 1, 1], [], []>} : vector<1x128xf32>, vector<128x128xf32>, vector<1x128xf32> -> vector<1x128xf32>
    %66 = arith.addf %65, %11 : vector<1x128xf32>
    %67 = arith.index_cast %c3_i32 : i32 to index
    %c0_45 = arith.constant 0 : index
    %68 = vector.load %arg12[%67, %c0_45] : memref<16x128xf32, #tpu.memory_space<vmem>>, vector<1x128xf32>
    tpu.vector_store %arg12[%67, %c0_45], %66 {strides = array<i32>} : memref<16x128xf32, #tpu.memory_space<vmem>>, vector<1x128xf32>,
    %cst_46 = arith.constant dense<0.000000e+00> : vector<1x128xf32>
    %69 = tpu.matmul %64, %12, %cst_46 {dimension_numbers = #tpu.dot_dimension_numbers<[1], [0], [0], [1], [0, 0, 1, 1], [], []>} : vector<1x128xf32>, vector<128x128xf32>, vector<1x128xf32> -> vector<1x128xf32>
    %70 = arith.addf %69, %13 : vector<1x128xf32>
    %c4_i32 = arith.constant 4 : i32
    %71 = arith.index_cast %c4_i32 : i32 to index
    %c0_47 = arith.constant 0 : index
    %72 = vector.load %arg14[%71, %c0_47] : memref<16x128xf32, #tpu.memory_space<vmem>>, vector<1x128xf32>
    %cst_48 = arith.constant dense<0.000000e+00> : vector<1x128xf32>
    %73 = tpu.matmul %70, %7, %cst_48 {dimension_numbers = #tpu.dot_dimension_numbers<[1], [0], [0], [1], [0, 0, 1, 1], [], []>} : vector<1x128xf32>, vector<128x128xf32>, vector<1x128xf32> -> vector<1x128xf32>
    %74 = arith.addf %72, %73 : vector<1x128xf32>
    %75 = math.tanh %74 : vector<1x128xf32>
    %cst_49 = arith.constant dense<0.000000e+00> : vector<1x128xf32>
    %76 = tpu.matmul %75, %8, %cst_49 {dimension_numbers = #tpu.dot_dimension_numbers<[1], [0], [0], [1], [0, 0, 1, 1], [], []>} : vector<1x128xf32>, vector<128x128xf32>, vector<1x128xf32> -> vector<1x128xf32>
    %77 = arith.addf %76, %9 : vector<1x128xf32>
    %78 = math.tanh %77 : vector<1x128xf32>
    %cst_50 = arith.constant dense<0.000000e+00> : vector<1x128xf32>
    %79 = tpu.matmul %78, %10, %cst_50 {dimension_numbers = #tpu.dot_dimension_numbers<[1], [0], [0], [1], [0, 0, 1, 1], [], []>} : vector<1x128xf32>, vector<128x128xf32>, vector<1x128xf32> -> vector<1x128xf32>
    %80 = arith.addf %79, %11 : vector<1x128xf32>
    %81 = arith.index_cast %c4_i32 : i32 to index
    %c0_51 = arith.constant 0 : index
    %82 = vector.load %arg12[%81, %c0_51] : memref<16x128xf32, #tpu.memory_space<vmem>>, vector<1x128xf32>
    tpu.vector_store %arg12[%81, %c0_51], %80 {strides = array<i32>} : memref<16x128xf32, #tpu.memory_space<vmem>>, vector<1x128xf32>,
    %cst_52 = arith.constant dense<0.000000e+00> : vector<1x128xf32>
    %83 = tpu.matmul %78, %12, %cst_52 {dimension_numbers = #tpu.dot_dimension_numbers<[1], [0], [0], [1], [0, 0, 1, 1], [], []>} : vector<1x128xf32>, vector<128x128xf32>, vector<1x128xf32> -> vector<1x128xf32>
    %84 = arith.addf %83, %13 : vector<1x128xf32>
    %c5_i32 = arith.constant 5 : i32
    %85 = arith.index_cast %c5_i32 : i32 to index
    %c0_53 = arith.constant 0 : index
    %86 = vector.load %arg14[%85, %c0_53] : memref<16x128xf32, #tpu.memory_space<vmem>>, vector<1x128xf32>
    %cst_54 = arith.constant dense<0.000000e+00> : vector<1x128xf32>
    %87 = tpu.matmul %84, %7, %cst_54 {dimension_numbers = #tpu.dot_dimension_numbers<[1], [0], [0], [1], [0, 0, 1, 1], [], []>} : vector<1x128xf32>, vector<128x128xf32>, vector<1x128xf32> -> vector<1x128xf32>
    %88 = arith.addf %86, %87 : vector<1x128xf32>
    %89 = math.tanh %88 : vector<1x128xf32>
    %cst_55 = arith.constant dense<0.000000e+00> : vector<1x128xf32>
    %90 = tpu.matmul %89, %8, %cst_55 {dimension_numbers = #tpu.dot_dimension_numbers<[1], [0], [0], [1], [0, 0, 1, 1], [], []>} : vector<1x128xf32>, vector<128x128xf32>, vector<1x128xf32> -> vector<1x128xf32>
    %91 = arith.addf %90, %9 : vector<1x128xf32>
    %92 = math.tanh %91 : vector<1x128xf32>
    %cst_56 = arith.constant dense<0.000000e+00> : vector<1x128xf32>
    %93 = tpu.matmul %92, %10, %cst_56 {dimension_numbers = #tpu.dot_dimension_numbers<[1], [0], [0], [1], [0, 0, 1, 1], [], []>} : vector<1x128xf32>, vector<128x128xf32>, vector<1x128xf32> -> vector<1x128xf32>
    %94 = arith.addf %93, %11 : vector<1x128xf32>
    %95 = arith.index_cast %c5_i32 : i32 to index
    %c0_57 = arith.constant 0 : index
    %96 = vector.load %arg12[%95, %c0_57] : memref<16x128xf32, #tpu.memory_space<vmem>>, vector<1x128xf32>
    tpu.vector_store %arg12[%95, %c0_57], %94 {strides = array<i32>} : memref<16x128xf32, #tpu.memory_space<vmem>>, vector<1x128xf32>,
    %cst_58 = arith.constant dense<0.000000e+00> : vector<1x128xf32>
    %97 = tpu.matmul %92, %12, %cst_58 {dimension_numbers = #tpu.dot_dimension_numbers<[1], [0], [0], [1], [0, 0, 1, 1], [], []>} : vector<1x128xf32>, vector<128x128xf32>, vector<1x128xf32> -> vector<1x128xf32>
    %98 = arith.addf %97, %13 : vector<1x128xf32>
    %c6_i32 = arith.constant 6 : i32
    %99 = arith.index_cast %c6_i32 : i32 to index
    %c0_59 = arith.constant 0 : index
    %100 = vector.load %arg14[%99, %c0_59] : memref<16x128xf32, #tpu.memory_space<vmem>>, vector<1x128xf32>
    %cst_60 = arith.constant dense<0.000000e+00> : vector<1x128xf32>
    %101 = tpu.matmul %98, %7, %cst_60 {dimension_numbers = #tpu.dot_dimension_numbers<[1], [0], [0], [1], [0, 0, 1, 1], [], []>} : vector<1x128xf32>, vector<128x128xf32>, vector<1x128xf32> -> vector<1x128xf32>
    %102 = arith.addf %100, %101 : vector<1x128xf32>
    %103 = math.tanh %102 : vector<1x128xf32>
    %cst_61 = arith.constant dense<0.000000e+00> : vector<1x128xf32>
    %104 = tpu.matmul %103, %8, %cst_61 {dimension_numbers = #tpu.dot_dimension_numbers<[1], [0], [0], [1], [0, 0, 1, 1], [], []>} : vector<1x128xf32>, vector<128x128xf32>, vector<1x128xf32> -> vector<1x128xf32>
    %105 = arith.addf %104, %9 : vector<1x128xf32>
    %106 = math.tanh %105 : vector<1x128xf32>
    %cst_62 = arith.constant dense<0.000000e+00> : vector<1x128xf32>
    %107 = tpu.matmul %106, %10, %cst_62 {dimension_numbers = #tpu.dot_dimension_numbers<[1], [0], [0], [1], [0, 0, 1, 1], [], []>} : vector<1x128xf32>, vector<128x128xf32>, vector<1x128xf32> -> vector<1x128xf32>
    %108 = arith.addf %107, %11 : vector<1x128xf32>
    %109 = arith.index_cast %c6_i32 : i32 to index
    %c0_63 = arith.constant 0 : index
    %110 = vector.load %arg12[%109, %c0_63] : memref<16x128xf32, #tpu.memory_space<vmem>>, vector<1x128xf32>
    tpu.vector_store %arg12[%109, %c0_63], %108 {strides = array<i32>} : memref<16x128xf32, #tpu.memory_space<vmem>>, vector<1x128xf32>,
    %cst_64 = arith.constant dense<0.000000e+00> : vector<1x128xf32>
    %111 = tpu.matmul %106, %12, %cst_64 {dimension_numbers = #tpu.dot_dimension_numbers<[1], [0], [0], [1], [0, 0, 1, 1], [], []>} : vector<1x128xf32>, vector<128x128xf32>, vector<1x128xf32> -> vector<1x128xf32>
    %112 = arith.addf %111, %13 : vector<1x128xf32>
    %c7_i32 = arith.constant 7 : i32
    %113 = arith.index_cast %c7_i32 : i32 to index
    %c0_65 = arith.constant 0 : index
    %114 = vector.load %arg14[%113, %c0_65] : memref<16x128xf32, #tpu.memory_space<vmem>>, vector<1x128xf32>
    %cst_66 = arith.constant dense<0.000000e+00> : vector<1x128xf32>
    %115 = tpu.matmul %112, %7, %cst_66 {dimension_numbers = #tpu.dot_dimension_numbers<[1], [0], [0], [1], [0, 0, 1, 1], [], []>} : vector<1x128xf32>, vector<128x128xf32>, vector<1x128xf32> -> vector<1x128xf32>
    %116 = arith.addf %114, %115 : vector<1x128xf32>
    %117 = math.tanh %116 : vector<1x128xf32>
    %cst_67 = arith.constant dense<0.000000e+00> : vector<1x128xf32>
    %118 = tpu.matmul %117, %8, %cst_67 {dimension_numbers = #tpu.dot_dimension_numbers<[1], [0], [0], [1], [0, 0, 1, 1], [], []>} : vector<1x128xf32>, vector<128x128xf32>, vector<1x128xf32> -> vector<1x128xf32>
    %119 = arith.addf %118, %9 : vector<1x128xf32>
    %120 = math.tanh %119 : vector<1x128xf32>
    %cst_68 = arith.constant dense<0.000000e+00> : vector<1x128xf32>
    %121 = tpu.matmul %120, %10, %cst_68 {dimension_numbers = #tpu.dot_dimension_numbers<[1], [0], [0], [1], [0, 0, 1, 1], [], []>} : vector<1x128xf32>, vector<128x128xf32>, vector<1x128xf32> -> vector<1x128xf32>
    %122 = arith.addf %121, %11 : vector<1x128xf32>
    %123 = arith.index_cast %c7_i32 : i32 to index
    %c0_69 = arith.constant 0 : index
    %124 = vector.load %arg12[%123, %c0_69] : memref<16x128xf32, #tpu.memory_space<vmem>>, vector<1x128xf32>
    tpu.vector_store %arg12[%123, %c0_69], %122 {strides = array<i32>} : memref<16x128xf32, #tpu.memory_space<vmem>>, vector<1x128xf32>,
    %cst_70 = arith.constant dense<0.000000e+00> : vector<1x128xf32>
    %125 = tpu.matmul %120, %12, %cst_70 {dimension_numbers = #tpu.dot_dimension_numbers<[1], [0], [0], [1], [0, 0, 1, 1], [], []>} : vector<1x128xf32>, vector<128x128xf32>, vector<1x128xf32> -> vector<1x128xf32>
    %126 = arith.addf %125, %13 : vector<1x128xf32>
    %c8_i32 = arith.constant 8 : i32
    %127 = arith.index_cast %c8_i32 : i32 to index
    %c0_71 = arith.constant 0 : index
    %128 = vector.load %arg14[%127, %c0_71] : memref<16x128xf32, #tpu.memory_space<vmem>>, vector<1x128xf32>
    %cst_72 = arith.constant dense<0.000000e+00> : vector<1x128xf32>
    %129 = tpu.matmul %126, %7, %cst_72 {dimension_numbers = #tpu.dot_dimension_numbers<[1], [0], [0], [1], [0, 0, 1, 1], [], []>} : vector<1x128xf32>, vector<128x128xf32>, vector<1x128xf32> -> vector<1x128xf32>
    %130 = arith.addf %128, %129 : vector<1x128xf32>
    %131 = math.tanh %130 : vector<1x128xf32>
    %cst_73 = arith.constant dense<0.000000e+00> : vector<1x128xf32>
    %132 = tpu.matmul %131, %8, %cst_73 {dimension_numbers = #tpu.dot_dimension_numbers<[1], [0], [0], [1], [0, 0, 1, 1], [], []>} : vector<1x128xf32>, vector<128x128xf32>, vector<1x128xf32> -> vector<1x128xf32>
    %133 = arith.addf %132, %9 : vector<1x128xf32>
    %134 = math.tanh %133 : vector<1x128xf32>
    %cst_74 = arith.constant dense<0.000000e+00> : vector<1x128xf32>
    %135 = tpu.matmul %134, %10, %cst_74 {dimension_numbers = #tpu.dot_dimension_numbers<[1], [0], [0], [1], [0, 0, 1, 1], [], []>} : vector<1x128xf32>, vector<128x128xf32>, vector<1x128xf32> -> vector<1x128xf32>
    %136 = arith.addf %135, %11 : vector<1x128xf32>
    %137 = arith.index_cast %c8_i32 : i32 to index
    %c0_75 = arith.constant 0 : index
    %138 = vector.load %arg12[%137, %c0_75] : memref<16x128xf32, #tpu.memory_space<vmem>>, vector<1x128xf32>
    tpu.vector_store %arg12[%137, %c0_75], %136 {strides = array<i32>} : memref<16x128xf32, #tpu.memory_space<vmem>>, vector<1x128xf32>,
    %cst_76 = arith.constant dense<0.000000e+00> : vector<1x128xf32>
    %139 = tpu.matmul %134, %12, %cst_76 {dimension_numbers = #tpu.dot_dimension_numbers<[1], [0], [0], [1], [0, 0, 1, 1], [], []>} : vector<1x128xf32>, vector<128x128xf32>, vector<1x128xf32> -> vector<1x128xf32>
    %140 = arith.addf %139, %13 : vector<1x128xf32>
    %c9_i32 = arith.constant 9 : i32
    %141 = arith.index_cast %c9_i32 : i32 to index
    %c0_77 = arith.constant 0 : index
    %142 = vector.load %arg14[%141, %c0_77] : memref<16x128xf32, #tpu.memory_space<vmem>>, vector<1x128xf32>
    %cst_78 = arith.constant dense<0.000000e+00> : vector<1x128xf32>
    %143 = tpu.matmul %140, %7, %cst_78 {dimension_numbers = #tpu.dot_dimension_numbers<[1], [0], [0], [1], [0, 0, 1, 1], [], []>} : vector<1x128xf32>, vector<128x128xf32>, vector<1x128xf32> -> vector<1x128xf32>
    %144 = arith.addf %142, %143 : vector<1x128xf32>
    %145 = math.tanh %144 : vector<1x128xf32>
    %cst_79 = arith.constant dense<0.000000e+00> : vector<1x128xf32>
    %146 = tpu.matmul %145, %8, %cst_79 {dimension_numbers = #tpu.dot_dimension_numbers<[1], [0], [0], [1], [0, 0, 1, 1], [], []>} : vector<1x128xf32>, vector<128x128xf32>, vector<1x128xf32> -> vector<1x128xf32>
    %147 = arith.addf %146, %9 : vector<1x128xf32>
    %148 = math.tanh %147 : vector<1x128xf32>
    %cst_80 = arith.constant dense<0.000000e+00> : vector<1x128xf32>
    %149 = tpu.matmul %148, %10, %cst_80 {dimension_numbers = #tpu.dot_dimension_numbers<[1], [0], [0], [1], [0, 0, 1, 1], [], []>} : vector<1x128xf32>, vector<128x128xf32>, vector<1x128xf32> -> vector<1x128xf32>
    %150 = arith.addf %149, %11 : vector<1x128xf32>
    %151 = arith.index_cast %c9_i32 : i32 to index
    %c0_81 = arith.constant 0 : index
    %152 = vector.load %arg12[%151, %c0_81] : memref<16x128xf32, #tpu.memory_space<vmem>>, vector<1x128xf32>
    tpu.vector_store %arg12[%151, %c0_81], %150 {strides = array<i32>} : memref<16x128xf32, #tpu.memory_space<vmem>>, vector<1x128xf32>,
    %cst_82 = arith.constant dense<0.000000e+00> : vector<1x128xf32>
    %153 = tpu.matmul %148, %12, %cst_82 {dimension_numbers = #tpu.dot_dimension_numbers<[1], [0], [0], [1], [0, 0, 1, 1], [], []>} : vector<1x128xf32>, vector<128x128xf32>, vector<1x128xf32> -> vector<1x128xf32>
    %154 = arith.addf %153, %13 : vector<1x128xf32>
    %c10_i32 = arith.constant 10 : i32
    %155 = arith.index_cast %c10_i32 : i32 to index
    %c0_83 = arith.constant 0 : index
    %156 = vector.load %arg14[%155, %c0_83] : memref<16x128xf32, #tpu.memory_space<vmem>>, vector<1x128xf32>
    %cst_84 = arith.constant dense<0.000000e+00> : vector<1x128xf32>
    %157 = tpu.matmul %154, %7, %cst_84 {dimension_numbers = #tpu.dot_dimension_numbers<[1], [0], [0], [1], [0, 0, 1, 1], [], []>} : vector<1x128xf32>, vector<128x128xf32>, vector<1x128xf32> -> vector<1x128xf32>
    %158 = arith.addf %156, %157 : vector<1x128xf32>
    %159 = math.tanh %158 : vector<1x128xf32>
    %cst_85 = arith.constant dense<0.000000e+00> : vector<1x128xf32>
    %160 = tpu.matmul %159, %8, %cst_85 {dimension_numbers = #tpu.dot_dimension_numbers<[1], [0], [0], [1], [0, 0, 1, 1], [], []>} : vector<1x128xf32>, vector<128x128xf32>, vector<1x128xf32> -> vector<1x128xf32>
    %161 = arith.addf %160, %9 : vector<1x128xf32>
    %162 = math.tanh %161 : vector<1x128xf32>
    %cst_86 = arith.constant dense<0.000000e+00> : vector<1x128xf32>
    %163 = tpu.matmul %162, %10, %cst_86 {dimension_numbers = #tpu.dot_dimension_numbers<[1], [0], [0], [1], [0, 0, 1, 1], [], []>} : vector<1x128xf32>, vector<128x128xf32>, vector<1x128xf32> -> vector<1x128xf32>
    %164 = arith.addf %163, %11 : vector<1x128xf32>
    %165 = arith.index_cast %c10_i32 : i32 to index
    %c0_87 = arith.constant 0 : index
    %166 = vector.load %arg12[%165, %c0_87] : memref<16x128xf32, #tpu.memory_space<vmem>>, vector<1x128xf32>
    tpu.vector_store %arg12[%165, %c0_87], %164 {strides = array<i32>} : memref<16x128xf32, #tpu.memory_space<vmem>>, vector<1x128xf32>,
    %cst_88 = arith.constant dense<0.000000e+00> : vector<1x128xf32>
    %167 = tpu.matmul %162, %12, %cst_88 {dimension_numbers = #tpu.dot_dimension_numbers<[1], [0], [0], [1], [0, 0, 1, 1], [], []>} : vector<1x128xf32>, vector<128x128xf32>, vector<1x128xf32> -> vector<1x128xf32>
    %168 = arith.addf %167, %13 : vector<1x128xf32>
    %c11_i32 = arith.constant 11 : i32
    %169 = arith.index_cast %c11_i32 : i32 to index
    %c0_89 = arith.constant 0 : index
    %170 = vector.load %arg14[%169, %c0_89] : memref<16x128xf32, #tpu.memory_space<vmem>>, vector<1x128xf32>
    %cst_90 = arith.constant dense<0.000000e+00> : vector<1x128xf32>
    %171 = tpu.matmul %168, %7, %cst_90 {dimension_numbers = #tpu.dot_dimension_numbers<[1], [0], [0], [1], [0, 0, 1, 1], [], []>} : vector<1x128xf32>, vector<128x128xf32>, vector<1x128xf32> -> vector<1x128xf32>
    %172 = arith.addf %170, %171 : vector<1x128xf32>
    %173 = math.tanh %172 : vector<1x128xf32>
    %cst_91 = arith.constant dense<0.000000e+00> : vector<1x128xf32>
    %174 = tpu.matmul %173, %8, %cst_91 {dimension_numbers = #tpu.dot_dimension_numbers<[1], [0], [0], [1], [0, 0, 1, 1], [], []>} : vector<1x128xf32>, vector<128x128xf32>, vector<1x128xf32> -> vector<1x128xf32>
    %175 = arith.addf %174, %9 : vector<1x128xf32>
    %176 = math.tanh %175 : vector<1x128xf32>
    %cst_92 = arith.constant dense<0.000000e+00> : vector<1x128xf32>
    %177 = tpu.matmul %176, %10, %cst_92 {dimension_numbers = #tpu.dot_dimension_numbers<[1], [0], [0], [1], [0, 0, 1, 1], [], []>} : vector<1x128xf32>, vector<128x128xf32>, vector<1x128xf32> -> vector<1x128xf32>
    %178 = arith.addf %177, %11 : vector<1x128xf32>
    %179 = arith.index_cast %c11_i32 : i32 to index
    %c0_93 = arith.constant 0 : index
    %180 = vector.load %arg12[%179, %c0_93] : memref<16x128xf32, #tpu.memory_space<vmem>>, vector<1x128xf32>
    tpu.vector_store %arg12[%179, %c0_93], %178 {strides = array<i32>} : memref<16x128xf32, #tpu.memory_space<vmem>>, vector<1x128xf32>,
    %cst_94 = arith.constant dense<0.000000e+00> : vector<1x128xf32>
    %181 = tpu.matmul %176, %12, %cst_94 {dimension_numbers = #tpu.dot_dimension_numbers<[1], [0], [0], [1], [0, 0, 1, 1], [], []>} : vector<1x128xf32>, vector<128x128xf32>, vector<1x128xf32> -> vector<1x128xf32>
    %182 = arith.addf %181, %13 : vector<1x128xf32>
    %c12_i32 = arith.constant 12 : i32
    %183 = arith.index_cast %c12_i32 : i32 to index
    %c0_95 = arith.constant 0 : index
    %184 = vector.load %arg14[%183, %c0_95] : memref<16x128xf32, #tpu.memory_space<vmem>>, vector<1x128xf32>
    %cst_96 = arith.constant dense<0.000000e+00> : vector<1x128xf32>
    %185 = tpu.matmul %182, %7, %cst_96 {dimension_numbers = #tpu.dot_dimension_numbers<[1], [0], [0], [1], [0, 0, 1, 1], [], []>} : vector<1x128xf32>, vector<128x128xf32>, vector<1x128xf32> -> vector<1x128xf32>
    %186 = arith.addf %184, %185 : vector<1x128xf32>
    %187 = math.tanh %186 : vector<1x128xf32>
    %cst_97 = arith.constant dense<0.000000e+00> : vector<1x128xf32>
    %188 = tpu.matmul %187, %8, %cst_97 {dimension_numbers = #tpu.dot_dimension_numbers<[1], [0], [0], [1], [0, 0, 1, 1], [], []>} : vector<1x128xf32>, vector<128x128xf32>, vector<1x128xf32> -> vector<1x128xf32>
    %189 = arith.addf %188, %9 : vector<1x128xf32>
    %190 = math.tanh %189 : vector<1x128xf32>
    %cst_98 = arith.constant dense<0.000000e+00> : vector<1x128xf32>
    %191 = tpu.matmul %190, %10, %cst_98 {dimension_numbers = #tpu.dot_dimension_numbers<[1], [0], [0], [1], [0, 0, 1, 1], [], []>} : vector<1x128xf32>, vector<128x128xf32>, vector<1x128xf32> -> vector<1x128xf32>
    %192 = arith.addf %191, %11 : vector<1x128xf32>
    %193 = arith.index_cast %c12_i32 : i32 to index
    %c0_99 = arith.constant 0 : index
    %194 = vector.load %arg12[%193, %c0_99] : memref<16x128xf32, #tpu.memory_space<vmem>>, vector<1x128xf32>
    tpu.vector_store %arg12[%193, %c0_99], %192 {strides = array<i32>} : memref<16x128xf32, #tpu.memory_space<vmem>>, vector<1x128xf32>,
    %cst_100 = arith.constant dense<0.000000e+00> : vector<1x128xf32>
    %195 = tpu.matmul %190, %12, %cst_100 {dimension_numbers = #tpu.dot_dimension_numbers<[1], [0], [0], [1], [0, 0, 1, 1], [], []>} : vector<1x128xf32>, vector<128x128xf32>, vector<1x128xf32> -> vector<1x128xf32>
    %196 = arith.addf %195, %13 : vector<1x128xf32>
    %c13_i32 = arith.constant 13 : i32
    %197 = arith.index_cast %c13_i32 : i32 to index
    %c0_101 = arith.constant 0 : index
    %198 = vector.load %arg14[%197, %c0_101] : memref<16x128xf32, #tpu.memory_space<vmem>>, vector<1x128xf32>
    %cst_102 = arith.constant dense<0.000000e+00> : vector<1x128xf32>
    %199 = tpu.matmul %196, %7, %cst_102 {dimension_numbers = #tpu.dot_dimension_numbers<[1], [0], [0], [1], [0, 0, 1, 1], [], []>} : vector<1x128xf32>, vector<128x128xf32>, vector<1x128xf32> -> vector<1x128xf32>
    %200 = arith.addf %198, %199 : vector<1x128xf32>
    %201 = math.tanh %200 : vector<1x128xf32>
    %cst_103 = arith.constant dense<0.000000e+00> : vector<1x128xf32>
    %202 = tpu.matmul %201, %8, %cst_103 {dimension_numbers = #tpu.dot_dimension_numbers<[1], [0], [0], [1], [0, 0, 1, 1], [], []>} : vector<1x128xf32>, vector<128x128xf32>, vector<1x128xf32> -> vector<1x128xf32>
    %203 = arith.addf %202, %9 : vector<1x128xf32>
    %204 = math.tanh %203 : vector<1x128xf32>
    %cst_104 = arith.constant dense<0.000000e+00> : vector<1x128xf32>
    %205 = tpu.matmul %204, %10, %cst_104 {dimension_numbers = #tpu.dot_dimension_numbers<[1], [0], [0], [1], [0, 0, 1, 1], [], []>} : vector<1x128xf32>, vector<128x128xf32>, vector<1x128xf32> -> vector<1x128xf32>
    %206 = arith.addf %205, %11 : vector<1x128xf32>
    %207 = arith.index_cast %c13_i32 : i32 to index
    %c0_105 = arith.constant 0 : index
    %208 = vector.load %arg12[%207, %c0_105] : memref<16x128xf32, #tpu.memory_space<vmem>>, vector<1x128xf32>
    tpu.vector_store %arg12[%207, %c0_105], %206 {strides = array<i32>} : memref<16x128xf32, #tpu.memory_space<vmem>>, vector<1x128xf32>,
    %cst_106 = arith.constant dense<0.000000e+00> : vector<1x128xf32>
    %209 = tpu.matmul %204, %12, %cst_106 {dimension_numbers = #tpu.dot_dimension_numbers<[1], [0], [0], [1], [0, 0, 1, 1], [], []>} : vector<1x128xf32>, vector<128x128xf32>, vector<1x128xf32> -> vector<1x128xf32>
    %210 = arith.addf %209, %13 : vector<1x128xf32>
    %c14_i32 = arith.constant 14 : i32
    %211 = arith.index_cast %c14_i32 : i32 to index
    %c0_107 = arith.constant 0 : index
    %212 = vector.load %arg14[%211, %c0_107] : memref<16x128xf32, #tpu.memory_space<vmem>>, vector<1x128xf32>
    %cst_108 = arith.constant dense<0.000000e+00> : vector<1x128xf32>
    %213 = tpu.matmul %210, %7, %cst_108 {dimension_numbers = #tpu.dot_dimension_numbers<[1], [0], [0], [1], [0, 0, 1, 1], [], []>} : vector<1x128xf32>, vector<128x128xf32>, vector<1x128xf32> -> vector<1x128xf32>
    %214 = arith.addf %212, %213 : vector<1x128xf32>
    %215 = math.tanh %214 : vector<1x128xf32>
    %cst_109 = arith.constant dense<0.000000e+00> : vector<1x128xf32>
    %216 = tpu.matmul %215, %8, %cst_109 {dimension_numbers = #tpu.dot_dimension_numbers<[1], [0], [0], [1], [0, 0, 1, 1], [], []>} : vector<1x128xf32>, vector<128x128xf32>, vector<1x128xf32> -> vector<1x128xf32>
    %217 = arith.addf %216, %9 : vector<1x128xf32>
    %218 = math.tanh %217 : vector<1x128xf32>
    %cst_110 = arith.constant dense<0.000000e+00> : vector<1x128xf32>
    %219 = tpu.matmul %218, %10, %cst_110 {dimension_numbers = #tpu.dot_dimension_numbers<[1], [0], [0], [1], [0, 0, 1, 1], [], []>} : vector<1x128xf32>, vector<128x128xf32>, vector<1x128xf32> -> vector<1x128xf32>
    %220 = arith.addf %219, %11 : vector<1x128xf32>
    %221 = arith.index_cast %c14_i32 : i32 to index
    %c0_111 = arith.constant 0 : index
    %222 = vector.load %arg12[%221, %c0_111] : memref<16x128xf32, #tpu.memory_space<vmem>>, vector<1x128xf32>
    tpu.vector_store %arg12[%221, %c0_111], %220 {strides = array<i32>} : memref<16x128xf32, #tpu.memory_space<vmem>>, vector<1x128xf32>,
    %cst_112 = arith.constant dense<0.000000e+00> : vector<1x128xf32>
    %223 = tpu.matmul %218, %12, %cst_112 {dimension_numbers = #tpu.dot_dimension_numbers<[1], [0], [0], [1], [0, 0, 1, 1], [], []>} : vector<1x128xf32>, vector<128x128xf32>, vector<1x128xf32> -> vector<1x128xf32>
    %224 = arith.addf %223, %13 : vector<1x128xf32>
    %c15_i32 = arith.constant 15 : i32
    %225 = arith.index_cast %c15_i32 : i32 to index
    %c0_113 = arith.constant 0 : index
    %226 = vector.load %arg14[%225, %c0_113] : memref<16x128xf32, #tpu.memory_space<vmem>>, vector<1x128xf32>
    %cst_114 = arith.constant dense<0.000000e+00> : vector<1x128xf32>
    %227 = tpu.matmul %224, %7, %cst_114 {dimension_numbers = #tpu.dot_dimension_numbers<[1], [0], [0], [1], [0, 0, 1, 1], [], []>} : vector<1x128xf32>, vector<128x128xf32>, vector<1x128xf32> -> vector<1x128xf32>
    %228 = arith.addf %226, %227 : vector<1x128xf32>
    %229 = math.tanh %228 : vector<1x128xf32>
    %cst_115 = arith.constant dense<0.000000e+00> : vector<1x128xf32>
    %230 = tpu.matmul %229, %8, %cst_115 {dimension_numbers = #tpu.dot_dimension_numbers<[1], [0], [0], [1], [0, 0, 1, 1], [], []>} : vector<1x128xf32>, vector<128x128xf32>, vector<1x128xf32> -> vector<1x128xf32>
    %231 = arith.addf %230, %9 : vector<1x128xf32>
    %232 = math.tanh %231 : vector<1x128xf32>
    %cst_116 = arith.constant dense<0.000000e+00> : vector<1x128xf32>
    %233 = tpu.matmul %232, %10, %cst_116 {dimension_numbers = #tpu.dot_dimension_numbers<[1], [0], [0], [1], [0, 0, 1, 1], [], []>} : vector<1x128xf32>, vector<128x128xf32>, vector<1x128xf32> -> vector<1x128xf32>
    %234 = arith.addf %233, %11 : vector<1x128xf32>
    %235 = arith.index_cast %c15_i32 : i32 to index
    %c0_117 = arith.constant 0 : index
    %236 = vector.load %arg12[%235, %c0_117] : memref<16x128xf32, #tpu.memory_space<vmem>>, vector<1x128xf32>
    tpu.vector_store %arg12[%235, %c0_117], %234 {strides = array<i32>} : memref<16x128xf32, #tpu.memory_space<vmem>>, vector<1x128xf32>,
    %cst_118 = arith.constant dense<0.000000e+00> : vector<1x128xf32>
    %237 = tpu.matmul %232, %12, %cst_118 {dimension_numbers = #tpu.dot_dimension_numbers<[1], [0], [0], [1], [0, 0, 1, 1], [], []>} : vector<1x128xf32>, vector<128x128xf32>, vector<1x128xf32> -> vector<1x128xf32>
    %238 = arith.addf %237, %13 : vector<1x128xf32>
    %c16_i32 = arith.constant 16 : i32
    %c0_119 = arith.constant 0 : index
    %c0_120 = arith.constant 0 : index
    %239 = vector.load %arg13[%c0_119, %c0_120] : memref<1x128xf32, #tpu.memory_space<vmem>>, vector<1x128xf32>
    tpu.vector_store %arg13[%c0_119, %c0_120], %238 {strides = array<i32>} : memref<1x128xf32, #tpu.memory_space<vmem>>, vector<1x128xf32>,
    return
  }
  func.func @transform_0(%arg0: i32) -> (i32, i32) {
    %c0_i32 = arith.constant 0 : i32
    %c0_i32_0 = arith.constant 0 : i32
    %c0_i32_1 = arith.constant 0 : i32
    return %c0_i32, %c0_i32_0 : i32, i32
  }
  func.func @transform_1(%arg0: i32) -> (i32, i32) {
    %c0_i32 = arith.constant 0 : i32
    %c0_i32_0 = arith.constant 0 : i32
    %c0_i32_1 = arith.constant 0 : i32
    return %c0_i32, %c0_i32_0 : i32, i32
  }
  func.func @transform_2(%arg0: i32) -> (i32, i32) {
    %c0_i32 = arith.constant 0 : i32
    %c0_i32_0 = arith.constant 0 : i32
    %c0_i32_1 = arith.constant 0 : i32
    return %c0_i32, %c0_i32_0 : i32, i32
  }
  func.func @transform_3(%arg0: i32) -> (i32, i32) {
    %c0_i32 = arith.constant 0 : i32
    %c0_i32_0 = arith.constant 0 : i32
    %c0_i32_1 = arith.constant 0 : i32
    return %c0_i32, %c0_i32_0 : i32, i32
  }
  func.func @transform_4(%arg0: i32) -> (i32, i32) {
    %c0_i32 = arith.constant 0 : i32
    %c0_i32_0 = arith.constant 0 : i32
    %c0_i32_1 = arith.constant 0 : i32
    return %c0_i32, %c0_i32_0 : i32, i32
  }
  func.func @transform_5(%arg0: i32) -> (i32, i32) {
    %c0_i32 = arith.constant 0 : i32
    %c0_i32_0 = arith.constant 0 : i32
    %c0_i32_1 = arith.constant 0 : i32
    return %c0_i32, %c0_i32_0 : i32, i32
  }
  func.func @transform_6(%arg0: i32) -> (i32, i32) {
    %c0_i32 = arith.constant 0 : i32
    %c0_i32_0 = arith.constant 0 : i32
    %c0_i32_1 = arith.constant 0 : i32
    return %c0_i32, %c0_i32_0 : i32, i32
  }
  func.func @transform_7(%arg0: i32) -> (i32, i32) {
    %c0_i32 = arith.constant 0 : i32
    %c0_i32_0 = arith.constant 0 : i32
    %c0_i32_1 = arith.constant 0 : i32
    return %c0_i32, %c0_i32_0 : i32, i32
  }
  func.func @transform_8(%arg0: i32) -> (i32, i32) {
    %c0_i32 = arith.constant 0 : i32
    %c0_i32_0 = arith.constant 0 : i32
    %c0_i32_1 = arith.constant 0 : i32
    return %c0_i32, %c0_i32_0 : i32, i32
  }
  func.func @transform_9(%arg0: i32) -> (i32, i32) {
    %c0_i32 = arith.constant 0 : i32
    %c0_i32_0 = arith.constant 0 : i32
    %c0_i32_1 = arith.constant 0 : i32
    return %c0_i32, %c0_i32_0 : i32, i32
  }
  func.func @transform_10(%arg0: i32) -> (i32, i32) {
    %c0_i32 = arith.constant 0 : i32
    %c0_i32_0 = arith.constant 0 : i32
    %c0_i32_1 = arith.constant 0 : i32
    return %c0_i32, %c0_i32_0 : i32, i32
  }
  func.func @transform_11(%arg0: i32) -> (i32, i32) {
    %c0_i32 = arith.constant 0 : i32
    %c0_i32_0 = arith.constant 0 : i32
    %c0_i32_1 = arith.constant 0 : i32
    return %c0_i32, %c0_i32_0 : i32, i32
  }
  func.func @transform_12(%arg0: i32) -> (i32, i32) {
    %c0_i32 = arith.constant 0 : i32
    %c0_i32_0 = arith.constant 0 : i32
    %c0_i32_1 = arith.constant 0 : i32
    return %c0_i32, %c0_i32_0 : i32, i32
  }
}

</mosaic_0001>

<llo_original>
// kernel: tpu_custom_call.1
$region0: #{tpu_custom_call.1}
  #allocation0 [shape = 'u32[]', space=smem, size = 0x4, offset = 0x4, fixed_abs, tag = 'smem constant byte address 0x4 - core index']
  #allocation1 [shape = 'u32[144,128]{1,0:T(1,128)}', space=vmem, size = 0x12000, scoped, tag = 'internal scratch']
  #allocation2 [shape = 'f32[16,128]{1,0:T(8,128)}', space=vmem, size = 0x2000, scoped, tag = 'scratch operand']
  %s0 = inlined_call_operand.hbm [shape: f32[16,128], index: 0, kind: input, shape index: {}]
  %s1 = inlined_call_operand.vmem [shape: f32[1,128], index: 1, kind: input, shape index: {}]
  %s2 = inlined_call_operand.hbm [shape: f32[128,128], index: 2, kind: input, shape index: {}]
  %s3 = inlined_call_operand.hbm [shape: f32[128,128], index: 3, kind: input, shape index: {}]
  %s4 = inlined_call_operand.vmem [shape: f32[1,128], index: 4, kind: input, shape index: {}]
  %s5 = inlined_call_operand.hbm [shape: f32[128,128], index: 5, kind: input, shape index: {}]
  %s6 = inlined_call_operand.vmem [shape: f32[1,128], index: 6, kind: input, shape index: {}]
  %s7 = inlined_call_operand.hbm [shape: f32[128,128], index: 7, kind: input, shape index: {}]
  %s8 = inlined_call_operand.vmem [shape: f32[1,128], index: 8, kind: input, shape index: {}]
  %s9 = inlined_call_operand.hbm [shape: f32[128,128], index: 9, kind: input, shape index: {}]
  %s10 = inlined_call_operand.vmem [shape: f32[1,128], index: 10, kind: input, shape index: {}]
  %s11 = inlined_call_operand.hbm [shape: f32[16,128], index: 11, kind: output, shape index: {0}]
  %s12 = inlined_call_operand.hbm [shape: f32[1,128], index: 12, kind: output, shape index: {1}]
  %13 = xla_tuple %s11, %s12
  %s14 = sld [smem:[#allocation0]]
  $region86: #{tpu_custom_call.1} parent=0
    _
  %s16 = ssub.s32 1, %s14
  %s17 = scalar_select 0, %s16, %s14
  $region1: #{tpu_custom_call.1} parent=0
    #allocation3 [shape = 'u8[8192]{0}', space=vmem, size = 0x2000, scoped, tag = 'input window, operand 0, single buffered']
    #allocation4 [shape = 's32[1]{0}', space=sflag, size = 0x4, scoped, tag = 'scoped memory for tpu_custom_call.1']
    #allocation5 [shape = 's32[1]{0}', space=sflag, size = 0x4, scoped, tag = 'scoped memory for tpu_custom_call.1']
    #allocation6 [shape = 'u8[65536]{0}', space=vmem, size = 0x10000, scoped, tag = 'input window, operand 2, single buffered']
    #allocation7 [shape = 's32[1]{0}', space=sflag, size = 0x4, scoped, tag = 'scoped memory for tpu_custom_call.1']
    #allocation8 [shape = 'u8[65536]{0}', space=vmem, size = 0x10000, scoped, tag = 'input window, operand 3, single buffered']
    #allocation9 [shape = 'u8[65536]{0}', space=vmem, size = 0x10000, scoped, tag = 'input window, operand 5, single buffered']
    #allocation10 [shape = 's32[1]{0}', space=sflag, size = 0x4, scoped, tag = 'scoped memory for tpu_custom_call.1']
    #allocation11 [shape = 'u8[65536]{0}', space=vmem, size = 0x10000, scoped, tag = 'input window, operand 7, single buffered']
    #allocation12 [shape = 'u8[65536]{0}', space=vmem, size = 0x10000, scoped, tag = 'input window, operand 9, single buffered']
    #allocation13 [shape = 's32[1]{0}', space=sflag, size = 0x4, scoped, tag = 'scoped memory for tpu_custom_call.1']
    #allocation14 [shape = 'u8[8192]{0}', space=vmem, size = 0x2000, scoped, tag = 'output window, operand 0, single buffered']
    #allocation15 [shape = 'u8[512]{0}', space=vmem, size = 0x400, scoped, tag = 'output window, operand 1, single buffered']
    #allocation16 [shape = 's32[1]{0}', space=sflag, size = 0x4, scoped, tag = 'scoped memory for tpu_custom_call.1']
    %18 = vsyncpa [#allocation4], 0
    %19 = vsyncpa [#allocation7], 0
    %20 = vsyncpa [#allocation10], 0
    %21 = vsyncpa [#allocation13], 0
    %22 = vsyncpa [#allocation5], 0
    %23 = vsyncpa [#allocation16], 0
    // Predicated region
    $region2: #{tpu_custom_call.1} parent=1 // pred_check
      _
    $region3: #{tpu_custom_call.1} parent=1 // pred_check_branch
      %25 = sbr.rel (0) target = $region5
    $region4: #{tpu_custom_call.1} parent=1 // pred_region
      %s27 = ssub.s32 256, 256
      %28 = vsyncadd [#allocation4], %s27
      %s29 = sshll.u32 [#allocation3], 4
      %s30 = int_to_ptr.vmem [resolvable:$true] %s29
      %35 = dma.hbm_to_vmem [thread:$0]  %s0, 256, %s30, [#allocation4], 128, 128, 8
    $region5: #{tpu_custom_call.1} parent=1 // pred_fallthru
      _
    // Predicated region
    $region6: #{tpu_custom_call.1} parent=1 // pred_check
      _
    $region7: #{tpu_custom_call.1} parent=1 // pred_check_branch
      %37 = sbr.rel (0) target = $region9
    $region8: #{tpu_custom_call.1} parent=1 // pred_region
      _
    $region9: #{tpu_custom_call.1} parent=1 // pred_fallthru
      _
    // Predicated region
    $region10: #{tpu_custom_call.1} parent=1 // pred_check
      _
    $region11: #{tpu_custom_call.1} parent=1 // pred_check_branch
      %39 = sbr.rel (0) target = $region13
    $region12: #{tpu_custom_call.1} parent=1 // pred_region
      %s41 = ssub.s32 2048, 2048
      %42 = vsyncadd [#allocation7], %s41
      %s43 = sshll.u32 [#allocation6], 4
      %s44 = int_to_ptr.vmem [resolvable:$true] %s43
      %49 = dma.hbm_to_vmem [thread:$0]  %s2, 2048, %s44, [#allocation7], 128, 128, 8
    $region13: #{tpu_custom_call.1} parent=1 // pred_fallthru
      _
    // Predicated region
    $region14: #{tpu_custom_call.1} parent=1 // pred_check
      _
    $region15: #{tpu_custom_call.1} parent=1 // pred_check_branch
      %51 = sbr.rel (0) target = $region17
    $region16: #{tpu_custom_call.1} parent=1 // pred_region
      %s53 = ssub.s32 2048, 2048
      %54 = vsyncadd [#allocation7], %s53
      %s55 = sshll.u32 [#allocation8], 4
      %s56 = int_to_ptr.vmem [resolvable:$true] %s55
      %61 = dma.hbm_to_vmem [thread:$0]  %s3, 2048, %s56, [#allocation7], 128, 128, 8
    $region17: #{tpu_custom_call.1} parent=1 // pred_fallthru
      _
    // Predicated region
    $region18: #{tpu_custom_call.1} parent=1 // pred_check
      _
    $region19: #{tpu_custom_call.1} parent=1 // pred_check_branch
      %63 = sbr.rel (0) target = $region21
    $region20: #{tpu_custom_call.1} parent=1 // pred_region
      _
    $region21: #{tpu_custom_call.1} parent=1 // pred_fallthru
      _
    // Predicated region
    $region22: #{tpu_custom_call.1} parent=1 // pred_check
      _
    $region23: #{tpu_custom_call.1} parent=1 // pred_check_branch
      %65 = sbr.rel (0) target = $region25
    $region24: #{tpu_custom_call.1} parent=1 // pred_region
      %s67 = ssub.s32 2048, 2048
      %68 = vsyncadd [#allocation10], %s67
      %s69 = sshll.u32 [#allocation9], 4
      %s70 = int_to_ptr.vmem [resolvable:$true] %s69
      %75 = dma.hbm_to_vmem [thread:$0]  %s5, 2048, %s70, [#allocation10], 128, 128, 8
    $region25: #{tpu_custom_call.1} parent=1 // pred_fallthru
      _
    // Predicated region
    $region26: #{tpu_custom_call.1} parent=1 // pred_check
      _
    $region27: #{tpu_custom_call.1} parent=1 // pred_check_branch
      %77 = sbr.rel (0) target = $region29
    $region28: #{tpu_custom_call.1} parent=1 // pred_region
      _
    $region29: #{tpu_custom_call.1} parent=1 // pred_fallthru
      _
    // Predicated region
    $region30: #{tpu_custom_call.1} parent=1 // pred_check
      _
    $region31: #{tpu_custom_call.1} parent=1 // pred_check_branch
      %79 = sbr.rel (0) target = $region33
    $region32: #{tpu_custom_call.1} parent=1 // pred_region
      %s81 = ssub.s32 2048, 2048
      %82 = vsyncadd [#allocation10], %s81
      %s83 = sshll.u32 [#allocation11], 4
      %s84 = int_to_ptr.vmem [resolvable:$true] %s83
      %89 = dma.hbm_to_vmem [thread:$0]  %s7, 2048, %s84, [#allocation10], 128, 128, 8
    $region33: #{tpu_custom_call.1} parent=1 // pred_fallthru
      _
    // Predicated region
    $region34: #{tpu_custom_call.1} parent=1 // pred_check
      _
    $region35: #{tpu_custom_call.1} parent=1 // pred_check_branch
      %91 = sbr.rel (0) target = $region37
    $region36: #{tpu_custom_call.1} parent=1 // pred_region
      _
    $region37: #{tpu_custom_call.1} parent=1 // pred_fallthru
      _
    // Predicated region
    $region38: #{tpu_custom_call.1} parent=1 // pred_check
      _
    $region39: #{tpu_custom_call.1} parent=1 // pred_check_branch
      %93 = sbr.rel (0) target = $region41
    $region40: #{tpu_custom_call.1} parent=1 // pred_region
      %s95 = ssub.s32 2048, 2048
      %96 = vsyncadd [#allocation13], %s95
      %s97 = sshll.u32 [#allocation12], 4
      %s98 = int_to_ptr.vmem [resolvable:$true] %s97
      %103 = dma.hbm_to_vmem [thread:$0]  %s9, 2048, %s98, [#allocation13], 128, 128, 8
    $region41: #{tpu_custom_call.1} parent=1 // pred_fallthru
      _
    // Predicated region
    $region42: #{tpu_custom_call.1} parent=1 // pred_check
      _
    $region43: #{tpu_custom_call.1} parent=1 // pred_check_branch
      %105 = sbr.rel (0) target = $region45
    $region44: #{tpu_custom_call.1} parent=1 // pred_region
      _
    $region45: #{tpu_custom_call.1} parent=1 // pred_fallthru
      _
    // Predicated region
    $region46: #{tpu_custom_call.1} parent=1 // pred_check
      _
    $region47: #{tpu_custom_call.1} parent=1 // pred_check_branch
      %107 = sbr.rel (0) target = $region49
    $region48: #{tpu_custom_call.1} parent=1 // pred_region
      %108 = dma.done [#allocation4], 256
    $region49: #{tpu_custom_call.1} parent=1 // pred_fallthru
      _
    // Predicated region
    $region50: #{tpu_custom_call.1} parent=1 // pred_check
      _
    $region51: #{tpu_custom_call.1} parent=1 // pred_check_branch
      %110 = sbr.rel (0) target = $region53
    $region52: #{tpu_custom_call.1} parent=1 // pred_region
      %111 = dma.done [#allocation7], 2048
    $region53: #{tpu_custom_call.1} parent=1 // pred_fallthru
      _
    // Predicated region
    $region54: #{tpu_custom_call.1} parent=1 // pred_check
      _
    $region55: #{tpu_custom_call.1} parent=1 // pred_check_branch
      %113 = sbr.rel (0) target = $region57
    $region56: #{tpu_custom_call.1} parent=1 // pred_region
      %114 = dma.done [#allocation7], 2048
    $region57: #{tpu_custom_call.1} parent=1 // pred_fallthru
      _
    // Predicated region
    $region58: #{tpu_custom_call.1} parent=1 // pred_check
      _
    $region59: #{tpu_custom_call.1} parent=1 // pred_check_branch
      %116 = sbr.rel (0) target = $region61
    $region60: #{tpu_custom_call.1} parent=1 // pred_region
      %117 = dma.done [#allocation10], 2048
    $region61: #{tpu_custom_call.1} parent=1 // pred_fallthru
      _
    // Predicated region
    $region62: #{tpu_custom_call.1} parent=1 // pred_check
      _
    $region63: #{tpu_custom_call.1} parent=1 // pred_check_branch
      %119 = sbr.rel (0) target = $region65
    $region64: #{tpu_custom_call.1} parent=1 // pred_region
      %120 = dma.done [#allocation10], 2048
    $region65: #{tpu_custom_call.1} parent=1 // pred_fallthru
      _
    // Predicated region
    $region66: #{tpu_custom_call.1} parent=1 // pred_check
      _
    $region67: #{tpu_custom_call.1} parent=1 // pred_check_branch
      %122 = sbr.rel (0) target = $region69
    $region68: #{tpu_custom_call.1} parent=1 // pred_region
      %123 = dma.done [#allocation13], 2048
    $region69: #{tpu_custom_call.1} parent=1 // pred_fallthru
      _
    %v124 = vld [vmem:[#allocation3] sm:$0xff]
    %v125 = vld [vmem:[#allocation3 + $0x8] sm:$0xff]
    %v126 = vld [vmem:[#allocation6] sm:$0xff]
    %v127 = vld [vmem:[#allocation6 + $0x8] sm:$0xff]
    %v128 = vld [vmem:[#allocation6 + $0x10] sm:$0xff]
    %v129 = vld [vmem:[#allocation6 + $0x18] sm:$0xff]
    %v130 = vld [vmem:[#allocation6 + $0x20] sm:$0xff]
    %v131 = vld [vmem:[#allocation6 + $0x28] sm:$0xff]
    %v132 = vld [vmem:[#allocation6 + $0x30] sm:$0xff]
    %v133 = vld [vmem:[#allocation6 + $0x38] sm:$0xff]
    %v134 = vld [vmem:[#allocation6 + $0x40] sm:$0xff]
    %v135 = vld [vmem:[#allocation6 + $0x48] sm:$0xff]
    %v136 = vld [vmem:[#allocation6 + $0x50] sm:$0xff]
    %v137 = vld [vmem:[#allocation6 + $0x58] sm:$0xff]
    %v138 = vld [vmem:[#allocation6 + $0x60] sm:$0xff]
    %v139 = vld [vmem:[#allocation6 + $0x68] sm:$0xff]
    %v140 = vld [vmem:[#allocation6 + $0x70] sm:$0xff]
    %v141 = vld [vmem:[#allocation6 + $0x78] sm:$0xff]
    %v142 = vld [vmem:[%s4] sm:$0x1]
    %v144 = vlaneseq
    %v145 = vshrl.u32 %v144, 7
    %v146 = vsub.s32 0, %v145
    %v147 = vrot.slane %v142, %v146
    %149 = vmatprep.subr.mxu0 0.0
    %150 = vmatpush1.msra.mxu0 %v126
    %151 = vmatprep.subr.mxu0 0.0
    %152 = vmatpush1.msra.mxu0 %v127
    %153 = vmatprep.subr.mxu0 0.0
    %154 = vmatpush1.msra.mxu0 %v128
    %155 = vmatprep.subr.mxu0 0.0
    %156 = vmatpush1.msra.mxu0 %v129
    %157 = vmatprep.subr.mxu0 0.0
    %158 = vmatpush1.msra.mxu0 %v130
    %159 = vmatprep.subr.mxu0 0.0
    %160 = vmatpush1.msra.mxu0 %v131
    %161 = vmatprep.subr.mxu0 0.0
    %162 = vmatpush1.msra.mxu0 %v132
    %163 = vmatprep.subr.mxu0 0.0
    %164 = vmatpush1.msra.mxu0 %v133
    %165 = vmatprep.subr.mxu0 0.0
    %166 = vmatpush1.msra.mxu0 %v134
    %167 = vmatprep.subr.mxu0 0.0
    %168 = vmatpush1.msra.mxu0 %v135
    %169 = vmatprep.subr.mxu0 0.0
    %170 = vmatpush1.msra.mxu0 %v136
    %171 = vmatprep.subr.mxu0 0.0
    %172 = vmatpush1.msra.mxu0 %v137
    %173 = vmatprep.subr.mxu0 0.0
    %174 = vmatpush1.msra.mxu0 %v138
    %175 = vmatprep.subr.mxu0 0.0
    %176 = vmatpush1.msra.mxu0 %v139
    %177 = vmatprep.subr.mxu0 0.0
    %178 = vmatpush1.msra.mxu0 %v140
    %179 = vmatprep.subr.mxu0 0.0
    %180 = vmatpush1.msra.mxu0 %v141
    %181 = vmatprep.subr.mxu0 0.0
    %182 = vmatpush1.msra.mxu0 0.0
    %183 = vmatprep.subr.mxu0 0.0
    %184 = vmatpush1.msra.mxu0 0.0
    %185 = vmatprep.subr.mxu0 0.0
    %186 = vmatpush1.msra.mxu0 0.0
    %187 = vmatprep.subr.mxu0 0.0
    %188 = vmatpush1.msra.mxu0 0.0
    %189 = vmatprep.subr.mxu0 0.0
    %190 = vmatpush1.msra.mxu0 0.0
    %191 = vmatprep.subr.mxu0 0.0
    %192 = vmatpush1.msra.mxu0 0.0
    %193 = vmatprep.subr.mxu0 0.0
    %194 = vmatpush1.msra.mxu0 0.0
    %195 = vmatprep.subr.mxu0 0.0
    %196 = vmatpush1.msra.mxu0 0.0
    %197 = vmatprep.subr.mxu0 0.0
    %198 = vmatpush1.msra.mxu0 0.0
    %199 = vmatprep.subr.mxu0 0.0
    %200 = vmatpush1.msra.mxu0 0.0
    %201 = vmatprep.subr.mxu0 0.0
    %202 = vmatpush1.msra.mxu0 0.0
    %203 = vmatprep.subr.mxu0 0.0
    %204 = vmatpush1.msra.mxu0 0.0
    %205 = vmatprep.subr.mxu0 0.0
    %206 = vmatpush1.msra.mxu0 0.0
    %207 = vmatprep.subr.mxu0 0.0
    %208 = vmatpush1.msra.mxu0 0.0
    %209 = vmatprep.subr.mxu0 0.0
    %210 = vmatpush1.msra.mxu0 0.0
    %211 = vmatprep.subr.mxu0 0.0
    %212 = vmatpush1.msra.mxu0 0.0
    %213 = vmatprep.mubr.f32.mxu0 0.0
    %214 = vmatmul.mubr.f32.gmra.mrb[0].mxu0 %v124
    %v215 = vpop.f32.mrb[0].mxu0
    %v216 = vadd.f32 %v147, %v215
    %v217 = vpop.f32.mrb[0].mxu0
    %218 = vmatprep.mubr.f32.mxu0 0.0
    %219 = vmatmul.mubr.f32.gmra.mrb[0].mxu0 %v125
    %v220 = vpop.f32.mrb[0].mxu0
    %v221 = vadd.f32 %v147, %v220
    %v222 = vpop.f32.mrb[0].mxu0
    %223 = vdwg.mxu0
    %224 = vst [vmem:[#allocation2] sm:$0xff] %v216
    %225 = vst [vmem:[#allocation2 + $0x8] sm:$0xff] %v221
    %v226 = vld [vmem:[#allocation8] sm:$0xff]
    %v227 = vld [vmem:[#allocation8 + $0x8] sm:$0xff]
    %v228 = vld [vmem:[#allocation8 + $0x10] sm:$0xff]
    %v229 = vld [vmem:[#allocation8 + $0x18] sm:$0xff]
    %v230 = vld [vmem:[#allocation8 + $0x20] sm:$0xff]
    %v231 = vld [vmem:[#allocation8 + $0x28] sm:$0xff]
    %v232 = vld [vmem:[#allocation8 + $0x30] sm:$0xff]
    %v233 = vld [vmem:[#allocation8 + $0x38] sm:$0xff]
    %v234 = vld [vmem:[#allocation8 + $0x40] sm:$0xff]
    %v235 = vld [vmem:[#allocation8 + $0x48] sm:$0xff]
    %v236 = vld [vmem:[#allocation8 + $0x50] sm:$0xff]
    %v237 = vld [vmem:[#allocation8 + $0x58] sm:$0xff]
    %v238 = vld [vmem:[#allocation8 + $0x60] sm:$0xff]
    %v239 = vld [vmem:[#allocation8 + $0x68] sm:$0xff]
    %v240 = vld [vmem:[#allocation8 + $0x70] sm:$0xff]
    %v241 = vld [vmem:[#allocation8 + $0x78] sm:$0xff]
    %v242 = vld [vmem:[#allocation9] sm:$0xff]
    %v243 = vld [vmem:[#allocation9 + $0x8] sm:$0xff]
    %v244 = vld [vmem:[#allocation9 + $0x10] sm:$0xff]
    %v245 = vld [vmem:[#allocation9 + $0x18] sm:$0xff]
    %v246 = vld [vmem:[#allocation9 + $0x20] sm:$0xff]
    %v247 = vld [vmem:[#allocation9 + $0x28] sm:$0xff]
    %v248 = vld [vmem:[#allocation9 + $0x30] sm:$0xff]
    %v249 = vld [vmem:[#allocation9 + $0x38] sm:$0xff]
    %v250 = vld [vmem:[#allocation9 + $0x40] sm:$0xff]
    %v251 = vld [vmem:[#allocation9 + $0x48] sm:$0xff]
    %v252 = vld [vmem:[#allocation9 + $0x50] sm:$0xff]
    %v253 = vld [vmem:[#allocation9 + $0x58] sm:$0xff]
    %v254 = vld [vmem:[#allocation9 + $0x60] sm:$0xff]
    %v255 = vld [vmem:[#allocation9 + $0x68] sm:$0xff]
    %v256 = vld [vmem:[#allocation9 + $0x70] sm:$0xff]
    %v257 = vld [vmem:[#allocation9 + $0x78] sm:$0xff]
    %v258 = vld [vmem:[%s6] sm:$0x1]
    %v259 = vld [vmem:[#allocation11] sm:$0xff]
    %v260 = vld [vmem:[#allocation11 + $0x8] sm:$0xff]
    %v261 = vld [vmem:[#allocation11 + $0x10] sm:$0xff]
    %v262 = vld [vmem:[#allocation11 + $0x18] sm:$0xff]
    %v263 = vld [vmem:[#allocation11 + $0x20] sm:$0xff]
    %v264 = vld [vmem:[#allocation11 + $0x28] sm:$0xff]
    %v265 = vld [vmem:[#allocation11 + $0x30] sm:$0xff]
    %v266 = vld [vmem:[#allocation11 + $0x38] sm:$0xff]
    %v267 = vld [vmem:[#allocation11 + $0x40] sm:$0xff]
    %v268 = vld [vmem:[#allocation11 + $0x48] sm:$0xff]
    %v269 = vld [vmem:[#allocation11 + $0x50] sm:$0xff]
    %v270 = vld [vmem:[#allocation11 + $0x58] sm:$0xff]
    %v271 = vld [vmem:[#allocation11 + $0x60] sm:$0xff]
    %v272 = vld [vmem:[#allocation11 + $0x68] sm:$0xff]
    %v273 = vld [vmem:[#allocation11 + $0x70] sm:$0xff]
    %v274 = vld [vmem:[#allocation11 + $0x78] sm:$0xff]
    %v275 = vld [vmem:[%s8] sm:$0x1]
    %v276 = vld [vmem:[#allocation12] sm:$0xff]
    %v277 = vld [vmem:[#allocation12 + $0x8] sm:$0xff]
    %v278 = vld [vmem:[#allocation12 + $0x10] sm:$0xff]
    %v279 = vld [vmem:[#allocation12 + $0x18] sm:$0xff]
    %v280 = vld [vmem:[#allocation12 + $0x20] sm:$0xff]
    %v281 = vld [vmem:[#allocation12 + $0x28] sm:$0xff]
    %v282 = vld [vmem:[#allocation12 + $0x30] sm:$0xff]
    %v283 = vld [vmem:[#allocation12 + $0x38] sm:$0xff]
    %v284 = vld [vmem:[#allocation12 + $0x40] sm:$0xff]
    %v285 = vld [vmem:[#allocation12 + $0x48] sm:$0xff]
    %v286 = vld [vmem:[#allocation12 + $0x50] sm:$0xff]
    %v287 = vld [vmem:[#allocation12 + $0x58] sm:$0xff]
    %v288 = vld [vmem:[#allocation12 + $0x60] sm:$0xff]
    %v289 = vld [vmem:[#allocation12 + $0x68] sm:$0xff]
    %v290 = vld [vmem:[#allocation12 + $0x70] sm:$0xff]
    %v291 = vld [vmem:[#allocation12 + $0x78] sm:$0xff]
    %v292 = vld [vmem:[%s10] sm:$0x1]
    %v293 = vld [vmem:[%s1] sm:$0x1]
    %v294 = vld [vmem:[#allocation2] sm:$0x1]
    %295 = vmatprep.subr.mxu0 0.0
    %296 = vmatpush1.msra.mxu0 %v226
    %297 = vmatprep.subr.mxu0 0.0
    %298 = vmatpush1.msra.mxu0 %v227
    %299 = vmatprep.subr.mxu0 0.0
    %300 = vmatpush1.msra.mxu0 %v228
    %301 = vmatprep.subr.mxu0 0.0
    %302 = vmatpush1.msra.mxu0 %v229
    %303 = vmatprep.subr.mxu0 0.0
    %304 = vmatpush1.msra.mxu0 %v230
    %305 = vmatprep.subr.mxu0 0.0
    %306 = vmatpush1.msra.mxu0 %v231
    %307 = vmatprep.subr.mxu0 0.0
    %308 = vmatpush1.msra.mxu0 %v232
    %309 = vmatprep.subr.mxu0 0.0
    %310 = vmatpush1.msra.mxu0 %v233
    %311 = vmatprep.subr.mxu0 0.0
    %312 = vmatpush1.msra.mxu0 %v234
    %313 = vmatprep.subr.mxu0 0.0
    %314 = vmatpush1.msra.mxu0 %v235
    %315 = vmatprep.subr.mxu0 0.0
    %316 = vmatpush1.msra.mxu0 %v236
    %317 = vmatprep.subr.mxu0 0.0
    %318 = vmatpush1.msra.mxu0 %v237
    %319 = vmatprep.subr.mxu0 0.0
    %320 = vmatpush1.msra.mxu0 %v238
    %321 = vmatprep.subr.mxu0 0.0
    %322 = vmatpush1.msra.mxu0 %v239
    %323 = vmatprep.subr.mxu0 0.0
    %324 = vmatpush1.msra.mxu0 %v240
    %325 = vmatprep.subr.mxu0 0.0
    %326 = vmatpush1.msra.mxu0 %v241
    %327 = vmatprep.subr.mxu0 0.0
    %328 = vmatpush1.msra.mxu0 0.0
    %329 = vmatprep.subr.mxu0 0.0
    %330 = vmatpush1.msra.mxu0 0.0
    %331 = vmatprep.subr.mxu0 0.0
    %332 = vmatpush1.msra.mxu0 0.0
    %333 = vmatprep.subr.mxu0 0.0
    %334 = vmatpush1.msra.mxu0 0.0
    %335 = vmatprep.subr.mxu0 0.0
    %336 = vmatpush1.msra.mxu0 0.0
    %337 = vmatprep.subr.mxu0 0.0
    %338 = vmatpush1.msra.mxu0 0.0
    %339 = vmatprep.subr.mxu0 0.0
    %340 = vmatpush1.msra.mxu0 0.0
    %341 = vmatprep.subr.mxu0 0.0
    %342 = vmatpush1.msra.mxu0 0.0
    %343 = vmatprep.subr.mxu0 0.0
    %344 = vmatpush1.msra.mxu0 0.0
    %345 = vmatprep.subr.mxu0 0.0
    %346 = vmatpush1.msra.mxu0 0.0
    %347 = vmatprep.subr.mxu0 0.0
    %348 = vmatpush1.msra.mxu0 0.0
    %349 = vmatprep.subr.mxu0 0.0
    %350 = vmatpush1.msra.mxu0 0.0
    %351 = vmatprep.subr.mxu0 0.0
    %352 = vmatpush1.msra.mxu0 0.0
    %353 = vmatprep.subr.mxu0 0.0
    %354 = vmatpush1.msra.mxu0 0.0
    %355 = vmatprep.subr.mxu0 0.0
    %356 = vmatpush1.msra.mxu0 0.0
    %357 = vmatprep.subr.mxu0 0.0
    %358 = vmatpush1.msra.mxu0 0.0
    %359 = vmatprep.mubr.f32.mxu0 0.0
    %360 = vmatmul.mubr.f32.gmra.mrb[0].mxu0 %v293
    %v361 = vpop.f32.mrb[0].mxu0
    %v362 = vadd.f32 0.0, %v361
    %v363 = vpop.f32.mrb[0].mxu0
    %364 = vdwg.mxu0
    %v365 = vadd.f32 %v294, %v362
    %v366 = vtanh.pop %v365
    %367 = vmatprep.subr.mxu0 0.0
    %368 = vmatpush1.msra.mxu0 %v242
    %369 = vmatprep.subr.mxu0 0.0
    %370 = vmatpush1.msra.mxu0 %v243
    %371 = vmatprep.subr.mxu0 0.0
    %372 = vmatpush1.msra.mxu0 %v244
    %373 = vmatprep.subr.mxu0 0.0
    %374 = vmatpush1.msra.mxu0 %v245
    %375 = vmatprep.subr.mxu0 0.0
    %376 = vmatpush1.msra.mxu0 %v246
    %377 = vmatprep.subr.mxu0 0.0
    %378 = vmatpush1.msra.mxu0 %v247
    %379 = vmatprep.subr.mxu0 0.0
    %380 = vmatpush1.msra.mxu0 %v248
    %381 = vmatprep.subr.mxu0 0.0
    %382 = vmatpush1.msra.mxu0 %v249
    %383 = vmatprep.subr.mxu0 0.0
    %384 = vmatpush1.msra.mxu0 %v250
    %385 = vmatprep.subr.mxu0 0.0
    %386 = vmatpush1.msra.mxu0 %v251
    %387 = vmatprep.subr.mxu0 0.0
    %388 = vmatpush1.msra.mxu0 %v252
    %389 = vmatprep.subr.mxu0 0.0
    %390 = vmatpush1.msra.mxu0 %v253
    %391 = vmatprep.subr.mxu0 0.0
    %392 = vmatpush1.msra.mxu0 %v254
    %393 = vmatprep.subr.mxu0 0.0
    %394 = vmatpush1.msra.mxu0 %v255
    %395 = vmatprep.subr.mxu0 0.0
    %396 = vmatpush1.msra.mxu0 %v256
    %397 = vmatprep.subr.mxu0 0.0
    %398 = vmatpush1.msra.mxu0 %v257
    %399 = vmatprep.subr.mxu0 0.0
    %400 = vmatpush1.msra.mxu0 0.0
    %401 = vmatprep.subr.mxu0 0.0
    %402 = vmatpush1.msra.mxu0 0.0
    %403 = vmatprep.subr.mxu0 0.0
    %404 = vmatpush1.msra.mxu0 0.0
    %405 = vmatprep.subr.mxu0 0.0
    %406 = vmatpush1.msra.mxu0 0.0
    %407 = vmatprep.subr.mxu0 0.0
    %408 = vmatpush1.msra.mxu0 0.0
    %409 = vmatprep.subr.mxu0 0.0
    %410 = vmatpush1.msra.mxu0 0.0
    %411 = vmatprep.subr.mxu0 0.0
    %412 = vmatpush1.msra.mxu0 0.0
    %413 = vmatprep.subr.mxu0 0.0
    %414 = vmatpush1.msra.mxu0 0.0
    %415 = vmatprep.subr.mxu0 0.0
    %416 = vmatpush1.msra.mxu0 0.0
    %417 = vmatprep.subr.mxu0 0.0
    %418 = vmatpush1.msra.mxu0 0.0
    %419 = vmatprep.subr.mxu0 0.0
    %420 = vmatpush1.msra.mxu0 0.0
    %421 = vmatprep.subr.mxu0 0.0
    %422 = vmatpush1.msra.mxu0 0.0
    %423 = vmatprep.subr.mxu0 0.0
    %424 = vmatpush1.msra.mxu0 0.0
    %425 = vmatprep.subr.mxu0 0.0
    %426 = vmatpush1.msra.mxu0 0.0
    %427 = vmatprep.subr.mxu0 0.0
    %428 = vmatpush1.msra.mxu0 0.0
    %429 = vmatprep.subr.mxu0 0.0
    %430 = vmatpush1.msra.mxu0 0.0
    %431 = vmatprep.mubr.f32.mxu0 0.0
    %432 = vmatmul.mubr.f32.gmra.mrb[0].mxu0 %v366
    %v433 = vpop.f32.mrb[0].mxu0
    %v434 = vadd.f32 %v258, %v433
    %v435 = vpop.f32.mrb[0].mxu0
    %436 = vdwg.mxu0
    %v437 = vtanh.pop %v434
    %438 = vmatprep.subr.mxu0 0.0
    %439 = vmatpush1.msra.mxu0 %v259
    %440 = vmatprep.subr.mxu0 0.0
    %441 = vmatpush1.msra.mxu0 %v260
    %442 = vmatprep.subr.mxu0 0.0
    %443 = vmatpush1.msra.mxu0 %v261
    %444 = vmatprep.subr.mxu0 0.0
    %445 = vmatpush1.msra.mxu0 %v262
    %446 = vmatprep.subr.mxu0 0.0
    %447 = vmatpush1.msra.mxu0 %v263
    %448 = vmatprep.subr.mxu0 0.0
    %449 = vmatpush1.msra.mxu0 %v264
    %450 = vmatprep.subr.mxu0 0.0
    %451 = vmatpush1.msra.mxu0 %v265
    %452 = vmatprep.subr.mxu0 0.0
    %453 = vmatpush1.msra.mxu0 %v266
    %454 = vmatprep.subr.mxu0 0.0
    %455 = vmatpush1.msra.mxu0 %v267
    %456 = vmatprep.subr.mxu0 0.0
    %457 = vmatpush1.msra.mxu0 %v268
    %458 = vmatprep.subr.mxu0 0.0
    %459 = vmatpush1.msra.mxu0 %v269
    %460 = vmatprep.subr.mxu0 0.0
    %461 = vmatpush1.msra.mxu0 %v270
    %462 = vmatprep.subr.mxu0 0.0
    %463 = vmatpush1.msra.mxu0 %v271
    %464 = vmatprep.subr.mxu0 0.0
    %465 = vmatpush1.msra.mxu0 %v272
    %466 = vmatprep.subr.mxu0 0.0
    %467 = vmatpush1.msra.mxu0 %v273
    %468 = vmatprep.subr.mxu0 0.0
    %469 = vmatpush1.msra.mxu0 %v274
    %470 = vmatprep.subr.mxu0 0.0
    %471 = vmatpush1.msra.mxu0 0.0
    %472 = vmatprep.subr.mxu0 0.0
    %473 = vmatpush1.msra.mxu0 0.0
    %474 = vmatprep.subr.mxu0 0.0
    %475 = vmatpush1.msra.mxu0 0.0
    %476 = vmatprep.subr.mxu0 0.0
    %477 = vmatpush1.msra.mxu0 0.0
    %478 = vmatprep.subr.mxu0 0.0
    %479 = vmatpush1.msra.mxu0 0.0
    %480 = vmatprep.subr.mxu0 0.0
    %481 = vmatpush1.msra.mxu0 0.0
    %482 = vmatprep.subr.mxu0 0.0
    %483 = vmatpush1.msra.mxu0 0.0
    %484 = vmatprep.subr.mxu0 0.0
    %485 = vmatpush1.msra.mxu0 0.0
    %486 = vmatprep.subr.mxu0 0.0
    %487 = vmatpush1.msra.mxu0 0.0
    %488 = vmatprep.subr.mxu0 0.0
    %489 = vmatpush1.msra.mxu0 0.0
    %490 = vmatprep.subr.mxu0 0.0
    %491 = vmatpush1.msra.mxu0 0.0
    %492 = vmatprep.subr.mxu0 0.0
    %493 = vmatpush1.msra.mxu0 0.0
    %494 = vmatprep.subr.mxu0 0.0
    %495 = vmatpush1.msra.mxu0 0.0
    %496 = vmatprep.subr.mxu0 0.0
    %497 = vmatpush1.msra.mxu0 0.0
    %498 = vmatprep.subr.mxu0 0.0
    %499 = vmatpush1.msra.mxu0 0.0
    %500 = vmatprep.subr.mxu0 0.0
    %501 = vmatpush1.msra.mxu0 0.0
    %502 = vmatprep.mubr.f32.mxu0 0.0
    %503 = vmatmul.mubr.f32.gmra.mrb[0].mxu0 %v437
    %v504 = vpop.f32.mrb[0].mxu0
    %v505 = vadd.f32 %v275, %v504
    %v506 = vpop.f32.mrb[0].mxu0
    %507 = vdwg.mxu0
    %508 = vst [vmem:[#allocation14] sm:$0x1] %v505
    %509 = vmatprep.subr.mxu0 0.0
    %510 = vmatpush1.msra.mxu0 %v276
    %511 = vmatprep.subr.mxu0 0.0
    %512 = vmatpush1.msra.mxu0 %v277
    %513 = vmatprep.subr.mxu0 0.0
    %514 = vmatpush1.msra.mxu0 %v278
    %515 = vmatprep.subr.mxu0 0.0
    %516 = vmatpush1.msra.mxu0 %v279
    %517 = vmatprep.subr.mxu0 0.0
    %518 = vmatpush1.msra.mxu0 %v280
    %519 = vmatprep.subr.mxu0 0.0
    %520 = vmatpush1.msra.mxu0 %v281
    %521 = vmatprep.subr.mxu0 0.0
    %522 = vmatpush1.msra.mxu0 %v282
    %523 = vmatprep.subr.mxu0 0.0
    %524 = vmatpush1.msra.mxu0 %v283
    %525 = vmatprep.subr.mxu0 0.0
    %526 = vmatpush1.msra.mxu0 %v284
    %527 = vmatprep.subr.mxu0 0.0
    %528 = vmatpush1.msra.mxu0 %v285
    %529 = vmatprep.subr.mxu0 0.0
    %530 = vmatpush1.msra.mxu0 %v286
    %531 = vmatprep.subr.mxu0 0.0
    %532 = vmatpush1.msra.mxu0 %v287
    %533 = vmatprep.subr.mxu0 0.0
    %534 = vmatpush1.msra.mxu0 %v288
    %535 = vmatprep.subr.mxu0 0.0
    %536 = vmatpush1.msra.mxu0 %v289
    %537 = vmatprep.subr.mxu0 0.0
    %538 = vmatpush1.msra.mxu0 %v290
    %539 = vmatprep.subr.mxu0 0.0
    %540 = vmatpush1.msra.mxu0 %v291
    %541 = vmatprep.subr.mxu0 0.0
    %542 = vmatpush1.msra.mxu0 0.0
    %543 = vmatprep.subr.mxu0 0.0
    %544 = vmatpush1.msra.mxu0 0.0
    %545 = vmatprep.subr.mxu0 0.0
    %546 = vmatpush1.msra.mxu0 0.0
    %547 = vmatprep.subr.mxu0 0.0
    %548 = vmatpush1.msra.mxu0 0.0
    %549 = vmatprep.subr.mxu0 0.0
    %550 = vmatpush1.msra.mxu0 0.0
    %551 = vmatprep.subr.mxu0 0.0
    %552 = vmatpush1.msra.mxu0 0.0
    %553 = vmatprep.subr.mxu0 0.0
    %554 = vmatpush1.msra.mxu0 0.0
    %555 = vmatprep.subr.mxu0 0.0
    %556 = vmatpush1.msra.mxu0 0.0
    %557 = vmatprep.subr.mxu0 0.0
    %558 = vmatpush1.msra.mxu0 0.0
    %559 = vmatprep.subr.mxu0 0.0
    %560 = vmatpush1.msra.mxu0 0.0
    %561 = vmatprep.subr.mxu0 0.0
    %562 = vmatpush1.msra.mxu0 0.0
    %563 = vmatprep.subr.mxu0 0.0
    %564 = vmatpush1.msra.mxu0 0.0
    %565 = vmatprep.subr.mxu0 0.0
    %566 = vmatpush1.msra.mxu0 0.0
    %567 = vmatprep.subr.mxu0 0.0
    %568 = vmatpush1.msra.mxu0 0.0
    %569 = vmatprep.subr.mxu0 0.0
    %570 = vmatpush1.msra.mxu0 0.0
    %571 = vmatprep.subr.mxu0 0.0
    %572 = vmatpush1.msra.mxu0 0.0
    %573 = vmatprep.mubr.f32.mxu0 0.0
    %574 = vmatmul.mubr.f32.gmra.mrb[0].mxu0 %v437
    %v575 = vpop.f32.mrb[0].mxu0
    %v576 = vadd.f32 %v292, %v575
    %v577 = vpop.f32.mrb[0].mxu0
    %578 = vdwg.mxu0
    %v579 = vld [vmem:[#allocation2 + $0x1] sm:$0x1]
    %580 = vmatprep.subr.mxu0 0.0
    %581 = vmatpush1.msra.mxu0 %v226
    %582 = vmatprep.subr.mxu0 0.0
    %583 = vmatpush1.msra.mxu0 %v227
    %584 = vmatprep.subr.mxu0 0.0
    %585 = vmatpush1.msra.mxu0 %v228
    %586 = vmatprep.subr.mxu0 0.0
    %587 = vmatpush1.msra.mxu0 %v229
    %588 = vmatprep.subr.mxu0 0.0
    %589 = vmatpush1.msra.mxu0 %v230
    %590 = vmatprep.subr.mxu0 0.0
    %591 = vmatpush1.msra.mxu0 %v231
    %592 = vmatprep.subr.mxu0 0.0
    %593 = vmatpush1.msra.mxu0 %v232
    %594 = vmatprep.subr.mxu0 0.0
    %595 = vmatpush1.msra.mxu0 %v233
    %596 = vmatprep.subr.mxu0 0.0
    %597 = vmatpush1.msra.mxu0 %v234
    %598 = vmatprep.subr.mxu0 0.0
    %599 = vmatpush1.msra.mxu0 %v235
    %600 = vmatprep.subr.mxu0 0.0
    %601 = vmatpush1.msra.mxu0 %v236
    %602 = vmatprep.subr.mxu0 0.0
    %603 = vmatpush1.msra.mxu0 %v237
    %604 = vmatprep.subr.mxu0 0.0
    %605 = vmatpush1.msra.mxu0 %v238
    %606 = vmatprep.subr.mxu0 0.0
    %607 = vmatpush1.msra.mxu0 %v239
    %608 = vmatprep.subr.mxu0 0.0
    %609 = vmatpush1.msra.mxu0 %v240
    %610 = vmatprep.subr.mxu0 0.0
    %611 = vmatpush1.msra.mxu0 %v241
    %612 = vmatprep.subr.mxu0 0.0
    %613 = vmatpush1.msra.mxu0 0.0
    %614 = vmatprep.subr.mxu0 0.0
    %615 = vmatpush1.msra.mxu0 0.0
    %616 = vmatprep.subr.mxu0 0.0
    %617 = vmatpush1.msra.mxu0 0.0
    %618 = vmatprep.subr.mxu0 0.0
    %619 = vmatpush1.msra.mxu0 0.0
    %620 = vmatprep.subr.mxu0 0.0
    %621 = vmatpush1.msra.mxu0 0.0
    %622 = vmatprep.subr.mxu0 0.0
    %623 = vmatpush1.msra.mxu0 0.0
    %624 = vmatprep.subr.mxu0 0.0
    %625 = vmatpush1.msra.mxu0 0.0
    %626 = vmatprep.subr.mxu0 0.0
    %627 = vmatpush1.msra.mxu0 0.0
    %628 = vmatprep.subr.mxu0 0.0
    %629 = vmatpush1.msra.mxu0 0.0
    %630 = vmatprep.subr.mxu0 0.0
    %631 = vmatpush1.msra.mxu0 0.0
    %632 = vmatprep.subr.mxu0 0.0
    %633 = vmatpush1.msra.mxu0 0.0
    %634 = vmatprep.subr.mxu0 0.0
    %635 = vmatpush1.msra.mxu0 0.0
    %636 = vmatprep.subr.mxu0 0.0
    %637 = vmatpush1.msra.mxu0 0.0
    %638 = vmatprep.subr.mxu0 0.0
    %639 = vmatpush1.msra.mxu0 0.0
    %640 = vmatprep.subr.mxu0 0.0
    %641 = vmatpush1.msra.mxu0 0.0
    %642 = vmatprep.subr.mxu0 0.0
    %643 = vmatpush1.msra.mxu0 0.0
    %644 = vmatprep.mubr.f32.mxu0 0.0
    %645 = vmatmul.mubr.f32.gmra.mrb[0].mxu0 %v576
    %v646 = vpop.f32.mrb[0].mxu0
    %v647 = vadd.f32 0.0, %v646
    %v648 = vpop.f32.mrb[0].mxu0
    %649 = vdwg.mxu0
    %v650 = vadd.f32 %v579, %v647
    %v651 = vtanh.pop %v650
    %652 = vmatprep.subr.mxu0 0.0
    %653 = vmatpush1.msra.mxu0 %v242
    %654 = vmatprep.subr.mxu0 0.0
    %655 = vmatpush1.msra.mxu0 %v243
    %656 = vmatprep.subr.mxu0 0.0
    %657 = vmatpush1.msra.mxu0 %v244
    %658 = vmatprep.subr.mxu0 0.0
    %659 = vmatpush1.msra.mxu0 %v245
    %660 = vmatprep.subr.mxu0 0.0
    %661 = vmatpush1.msra.mxu0 %v246
    %662 = vmatprep.subr.mxu0 0.0
    %663 = vmatpush1.msra.mxu0 %v247
    %664 = vmatprep.subr.mxu0 0.0
    %665 = vmatpush1.msra.mxu0 %v248
    %666 = vmatprep.subr.mxu0 0.0
    %667 = vmatpush1.msra.mxu0 %v249
    %668 = vmatprep.subr.mxu0 0.0
    %669 = vmatpush1.msra.mxu0 %v250
    %670 = vmatprep.subr.mxu0 0.0
    %671 = vmatpush1.msra.mxu0 %v251
    %672 = vmatprep.subr.mxu0 0.0
    %673 = vmatpush1.msra.mxu0 %v252
    %674 = vmatprep.subr.mxu0 0.0
    %675 = vmatpush1.msra.mxu0 %v253
    %676 = vmatprep.subr.mxu0 0.0
    %677 = vmatpush1.msra.mxu0 %v254
    %678 = vmatprep.subr.mxu0 0.0
    %679 = vmatpush1.msra.mxu0 %v255
    %680 = vmatprep.subr.mxu0 0.0
    %681 = vmatpush1.msra.mxu0 %v256
    %682 = vmatprep.subr.mxu0 0.0
    %683 = vmatpush1.msra.mxu0 %v257
    %684 = vmatprep.subr.mxu0 0.0
    %685 = vmatpush1.msra.mxu0 0.0
    %686 = vmatprep.subr.mxu0 0.0
    %687 = vmatpush1.msra.mxu0 0.0
    %688 = vmatprep.subr.mxu0 0.0
    %689 = vmatpush1.msra.mxu0 0.0
    %690 = vmatprep.subr.mxu0 0.0
    %691 = vmatpush1.msra.mxu0 0.0
    %692 = vmatprep.subr.mxu0 0.0
    %693 = vmatpush1.msra.mxu0 0.0
    %694 = vmatprep.subr.mxu0 0.0
    %695 = vmatpush1.msra.mxu0 0.0
    %696 = vmatprep.subr.mxu0 0.0
    %697 = vmatpush1.msra.mxu0 0.0
    %698 = vmatprep.subr.mxu0 0.0
    %699 = vmatpush1.msra.mxu0 0.0
    %700 = vmatprep.subr.mxu0 0.0
    %701 = vmatpush1.msra.mxu0 0.0
    %702 = vmatprep.subr.mxu0 0.0
    %703 = vmatpush1.msra.mxu0 0.0
    %704 = vmatprep.subr.mxu0 0.0
    %705 = vmatpush1.msra.mxu0 0.0
    %706 = vmatprep.subr.mxu0 0.0
    %707 = vmatpush1.msra.mxu0 0.0
    %708 = vmatprep.subr.mxu0 0.0
    %709 = vmatpush1.msra.mxu0 0.0
    %710 = vmatprep.subr.mxu0 0.0
    %711 = vmatpush1.msra.mxu0 0.0
    %712 = vmatprep.subr.mxu0 0.0
    %713 = vmatpush1.msra.mxu0 0.0
    %714 = vmatprep.subr.mxu0 0.0
    %715 = vmatpush1.msra.mxu0 0.0
    %716 = vmatprep.mubr.f32.mxu0 0.0
    %717 = vmatmul.mubr.f32.gmra.mrb[0].mxu0 %v651
    %v718 = vpop.f32.mrb[0].mxu0
    %v719 = vadd.f32 %v258, %v718
    %v720 = vpop.f32.mrb[0].mxu0
    %721 = vdwg.mxu0
    %v722 = vtanh.pop %v719
    %723 = vmatprep.subr.mxu0 0.0
    %724 = vmatpush1.msra.mxu0 %v259
    %725 = vmatprep.subr.mxu0 0.0
    %726 = vmatpush1.msra.mxu0 %v260
    %727 = vmatprep.subr.mxu0 0.0
    %728 = vmatpush1.msra.mxu0 %v261
    %729 = vmatprep.subr.mxu0 0.0
    %730 = vmatpush1.msra.mxu0 %v262
    %731 = vmatprep.subr.mxu0 0.0
    %732 = vmatpush1.msra.mxu0 %v263
    %733 = vmatprep.subr.mxu0 0.0
    %734 = vmatpush1.msra.mxu0 %v264
    %735 = vmatprep.subr.mxu0 0.0
    %736 = vmatpush1.msra.mxu0 %v265
    %737 = vmatprep.subr.mxu0 0.0
    %738 = vmatpush1.msra.mxu0 %v266
    %739 = vmatprep.subr.mxu0 0.0
    %740 = vmatpush1.msra.mxu0 %v267
    %741 = vmatprep.subr.mxu0 0.0
    %742 = vmatpush1.msra.mxu0 %v268
    %743 = vmatprep.subr.mxu0 0.0
    %744 = vmatpush1.msra.mxu0 %v269
    %745 = vmatprep.subr.mxu0 0.0
    %746 = vmatpush1.msra.mxu0 %v270
    %747 = vmatprep.subr.mxu0 0.0
    %748 = vmatpush1.msra.mxu0 %v271
    %749 = vmatprep.subr.mxu0 0.0
    %750 = vmatpush1.msra.mxu0 %v272
    %751 = vmatprep.subr.mxu0 0.0
    %752 = vmatpush1.msra.mxu0 %v273
    %753 = vmatprep.subr.mxu0 0.0
    %754 = vmatpush1.msra.mxu0 %v274
    %755 = vmatprep.subr.mxu0 0.0
    %756 = vmatpush1.msra.mxu0 0.0
    %757 = vmatprep.subr.mxu0 0.0
    %758 = vmatpush1.msra.mxu0 0.0
    %759 = vmatprep.subr.mxu0 0.0
    %760 = vmatpush1.msra.mxu0 0.0
    %761 = vmatprep.subr.mxu0 0.0
    %762 = vmatpush1.msra.mxu0 0.0
    %763 = vmatprep.subr.mxu0 0.0
    %764 = vmatpush1.msra.mxu0 0.0
    %765 = vmatprep.subr.mxu0 0.0
    %766 = vmatpush1.msra.mxu0 0.0
    %767 = vmatprep.subr.mxu0 0.0
    %768 = vmatpush1.msra.mxu0 0.0
    %769 = vmatprep.subr.mxu0 0.0
    %770 = vmatpush1.msra.mxu0 0.0
    %771 = vmatprep.subr.mxu0 0.0
    %772 = vmatpush1.msra.mxu0 0.0
    %773 = vmatprep.subr.mxu0 0.0
    %774 = vmatpush1.msra.mxu0 0.0
    %775 = vmatprep.subr.mxu0 0.0
    %776 = vmatpush1.msra.mxu0 0.0
    %777 = vmatprep.subr.mxu0 0.0
    %778 = vmatpush1.msra.mxu0 0.0
    %779 = vmatprep.subr.mxu0 0.0
    %780 = vmatpush1.msra.mxu0 0.0
    %781 = vmatprep.subr.mxu0 0.0
    %782 = vmatpush1.msra.mxu0 0.0
    %783 = vmatprep.subr.mxu0 0.0
    %784 = vmatpush1.msra.mxu0 0.0
    %785 = vmatprep.subr.mxu0 0.0
    %786 = vmatpush1.msra.mxu0 0.0
    %787 = vmatprep.mubr.f32.mxu0 0.0
    %788 = vmatmul.mubr.f32.gmra.mrb[0].mxu0 %v722
    %v789 = vpop.f32.mrb[0].mxu0
    %v790 = vadd.f32 %v275, %v789
    %v791 = vpop.f32.mrb[0].mxu0
    %792 = vdwg.mxu0
    %793 = vst [vmem:[#allocation14 + $0x1] sm:$0x1] %v790
    %794 = vmatprep.subr.mxu0 0.0
    %795 = vmatpush1.msra.mxu0 %v276
    %796 = vmatprep.subr.mxu0 0.0
    %797 = vmatpush1.msra.mxu0 %v277
    %798 = vmatprep.subr.mxu0 0.0
    %799 = vmatpush1.msra.mxu0 %v278
    %800 = vmatprep.subr.mxu0 0.0
    %801 = vmatpush1.msra.mxu0 %v279
    %802 = vmatprep.subr.mxu0 0.0
    %803 = vmatpush1.msra.mxu0 %v280
    %804 = vmatprep.subr.mxu0 0.0
    %805 = vmatpush1.msra.mxu0 %v281
    %806 = vmatprep.subr.mxu0 0.0
    %807 = vmatpush1.msra.mxu0 %v282
    %808 = vmatprep.subr.mxu0 0.0
    %809 = vmatpush1.msra.mxu0 %v283
    %810 = vmatprep.subr.mxu0 0.0
    %811 = vmatpush1.msra.mxu0 %v284
    %812 = vmatprep.subr.mxu0 0.0
    %813 = vmatpush1.msra.mxu0 %v285
    %814 = vmatprep.subr.mxu0 0.0
    %815 = vmatpush1.msra.mxu0 %v286
    %816 = vmatprep.subr.mxu0 0.0
    %817 = vmatpush1.msra.mxu0 %v287
    %818 = vmatprep.subr.mxu0 0.0
    %819 = vmatpush1.msra.mxu0 %v288
    %820 = vmatprep.subr.mxu0 0.0
    %821 = vmatpush1.msra.mxu0 %v289
    %822 = vmatprep.subr.mxu0 0.0
    %823 = vmatpush1.msra.mxu0 %v290
    %824 = vmatprep.subr.mxu0 0.0
    %825 = vmatpush1.msra.mxu0 %v291
    %826 = vmatprep.subr.mxu0 0.0
    %827 = vmatpush1.msra.mxu0 0.0
    %828 = vmatprep.subr.mxu0 0.0
    %829 = vmatpush1.msra.mxu0 0.0
    %830 = vmatprep.subr.mxu0 0.0
    %831 = vmatpush1.msra.mxu0 0.0
    %832 = vmatprep.subr.mxu0 0.0
    %833 = vmatpush1.msra.mxu0 0.0
    %834 = vmatprep.subr.mxu0 0.0
    %835 = vmatpush1.msra.mxu0 0.0
    %836 = vmatprep.subr.mxu0 0.0
    %837 = vmatpush1.msra.mxu0 0.0
    %838 = vmatprep.subr.mxu0 0.0
    %839 = vmatpush1.msra.mxu0 0.0
    %840 = vmatprep.subr.mxu0 0.0
    %841 = vmatpush1.msra.mxu0 0.0
    %842 = vmatprep.subr.mxu0 0.0
    %843 = vmatpush1.msra.mxu0 0.0
    %844 = vmatprep.subr.mxu0 0.0
    %845 = vmatpush1.msra.mxu0 0.0
    %846 = vmatprep.subr.mxu0 0.0
    %847 = vmatpush1.msra.mxu0 0.0
    %848 = vmatprep.subr.mxu0 0.0
    %849 = vmatpush1.msra.mxu0 0.0
    %850 = vmatprep.subr.mxu0 0.0
    %851 = vmatpush1.msra.mxu0 0.0
    %852 = vmatprep.subr.mxu0 0.0
    %853 = vmatpush1.msra.mxu0 0.0
    %854 = vmatprep.subr.mxu0 0.0
    %855 = vmatpush1.msra.mxu0 0.0
    %856 = vmatprep.subr.mxu0 0.0
    %857 = vmatpush1.msra.mxu0 0.0
    %858 = vmatprep.mubr.f32.mxu0 0.0
    %859 = vmatmul.mubr.f32.gmra.mrb[0].mxu0 %v722
    %v860 = vpop.f32.mrb[0].mxu0
    %v861 = vadd.f32 %v292, %v860
    %v862 = vpop.f32.mrb[0].mxu0
    %863 = vdwg.mxu0
    %v864 = vld [vmem:[#allocation2 + $0x2] sm:$0x1]
    %865 = vmatprep.subr.mxu0 0.0
    %866 = vmatpush1.msra.mxu0 %v226
    %867 = vmatprep.subr.mxu0 0.0
    %868 = vmatpush1.msra.mxu0 %v227
    %869 = vmatprep.subr.mxu0 0.0
    %870 = vmatpush1.msra.mxu0 %v228
    %871 = vmatprep.subr.mxu0 0.0
    %872 = vmatpush1.msra.mxu0 %v229
    %873 = vmatprep.subr.mxu0 0.0
    %874 = vmatpush1.msra.mxu0 %v230
    %875 = vmatprep.subr.mxu0 0.0
    %876 = vmatpush1.msra.mxu0 %v231
    %877 = vmatprep.subr.mxu0 0.0
    %878 = vmatpush1.msra.mxu0 %v232
    %879 = vmatprep.subr.mxu0 0.0
    %880 = vmatpush1.msra.mxu0 %v233
    %881 = vmatprep.subr.mxu0 0.0
    %882 = vmatpush1.msra.mxu0 %v234
    %883 = vmatprep.subr.mxu0 0.0
    %884 = vmatpush1.msra.mxu0 %v235
    %885 = vmatprep.subr.mxu0 0.0
    %886 = vmatpush1.msra.mxu0 %v236
    %887 = vmatprep.subr.mxu0 0.0
    %888 = vmatpush1.msra.mxu0 %v237
    %889 = vmatprep.subr.mxu0 0.0
    %890 = vmatpush1.msra.mxu0 %v238
    %891 = vmatprep.subr.mxu0 0.0
    %892 = vmatpush1.msra.mxu0 %v239
    %893 = vmatprep.subr.mxu0 0.0
    %894 = vmatpush1.msra.mxu0 %v240
    %895 = vmatprep.subr.mxu0 0.0
    %896 = vmatpush1.msra.mxu0 %v241
    %897 = vmatprep.subr.mxu0 0.0
    %898 = vmatpush1.msra.mxu0 0.0
    %899 = vmatprep.subr.mxu0 0.0
    %900 = vmatpush1.msra.mxu0 0.0
    %901 = vmatprep.subr.mxu0 0.0
    %902 = vmatpush1.msra.mxu0 0.0
    %903 = vmatprep.subr.mxu0 0.0
    %904 = vmatpush1.msra.mxu0 0.0
    %905 = vmatprep.subr.mxu0 0.0
    %906 = vmatpush1.msra.mxu0 0.0
    %907 = vmatprep.subr.mxu0 0.0
    %908 = vmatpush1.msra.mxu0 0.0
    %909 = vmatprep.subr.mxu0 0.0
    %910 = vmatpush1.msra.mxu0 0.0
    %911 = vmatprep.subr.mxu0 0.0
    %912 = vmatpush1.msra.mxu0 0.0
    %913 = vmatprep.subr.mxu0 0.0
    %914 = vmatpush1.msra.mxu0 0.0
    %915 = vmatprep.subr.mxu0 0.0
    %916 = vmatpush1.msra.mxu0 0.0
    %917 = vmatprep.subr.mxu0 0.0
    %918 = vmatpush1.msra.mxu0 0.0
    %919 = vmatprep.subr.mxu0 0.0
    %920 = vmatpush1.msra.mxu0 0.0
    %921 = vmatprep.subr.mxu0 0.0
    %922 = vmatpush1.msra.mxu0 0.0
    %923 = vmatprep.subr.mxu0 0.0
    %924 = vmatpush1.msra.mxu0 0.0
    %925 = vmatprep.subr.mxu0 0.0
    %926 = vmatpush1.msra.mxu0 0.0
    %927 = vmatprep.subr.mxu0 0.0
    %928 = vmatpush1.msra.mxu0 0.0
    %929 = vmatprep.mubr.f32.mxu0 0.0
    %930 = vmatmul.mubr.f32.gmra.mrb[0].mxu0 %v861
    %v931 = vpop.f32.mrb[0].mxu0
    %v932 = vadd.f32 0.0, %v931
    %v933 = vpop.f32.mrb[0].mxu0
    %934 = vdwg.mxu0
    %v935 = vadd.f32 %v864, %v932
    %v936 = vtanh.pop %v935
    %937 = vmatprep.subr.mxu0 0.0
    %938 = vmatpush1.msra.mxu0 %v242
    %939 = vmatprep.subr.mxu0 0.0
    %940 = vmatpush1.msra.mxu0 %v243
    %941 = vmatprep.subr.mxu0 0.0
    %942 = vmatpush1.msra.mxu0 %v244
    %943 = vmatprep.subr.mxu0 0.0
    %944 = vmatpush1.msra.mxu0 %v245
    %945 = vmatprep.subr.mxu0 0.0
    %946 = vmatpush1.msra.mxu0 %v246
    %947 = vmatprep.subr.mxu0 0.0
    %948 = vmatpush1.msra.mxu0 %v247
    %949 = vmatprep.subr.mxu0 0.0
    %950 = vmatpush1.msra.mxu0 %v248
    %951 = vmatprep.subr.mxu0 0.0
    %952 = vmatpush1.msra.mxu0 %v249
    %953 = vmatprep.subr.mxu0 0.0
    %954 = vmatpush1.msra.mxu0 %v250
    %955 = vmatprep.subr.mxu0 0.0
    %956 = vmatpush1.msra.mxu0 %v251
    %957 = vmatprep.subr.mxu0 0.0
    %958 = vmatpush1.msra.mxu0 %v252
    %959 = vmatprep.subr.mxu0 0.0
    %960 = vmatpush1.msra.mxu0 %v253
    %961 = vmatprep.subr.mxu0 0.0
    %962 = vmatpush1.msra.mxu0 %v254
    %963 = vmatprep.subr.mxu0 0.0
    %964 = vmatpush1.msra.mxu0 %v255
    %965 = vmatprep.subr.mxu0 0.0
    %966 = vmatpush1.msra.mxu0 %v256
    %967 = vmatprep.subr.mxu0 0.0
    %968 = vmatpush1.msra.mxu0 %v257
    %969 = vmatprep.subr.mxu0 0.0
    %970 = vmatpush1.msra.mxu0 0.0
    %971 = vmatprep.subr.mxu0 0.0
    %972 = vmatpush1.msra.mxu0 0.0
    %973 = vmatprep.subr.mxu0 0.0
    %974 = vmatpush1.msra.mxu0 0.0
    %975 = vmatprep.subr.mxu0 0.0
    %976 = vmatpush1.msra.mxu0 0.0
    %977 = vmatprep.subr.mxu0 0.0
    %978 = vmatpush1.msra.mxu0 0.0
    %979 = vmatprep.subr.mxu0 0.0
    %980 = vmatpush1.msra.mxu0 0.0
    %981 = vmatprep.subr.mxu0 0.0
    %982 = vmatpush1.msra.mxu0 0.0
    %983 = vmatprep.subr.mxu0 0.0
    %984 = vmatpush1.msra.mxu0 0.0
    %985 = vmatprep.subr.mxu0 0.0
    %986 = vmatpush1.msra.mxu0 0.0
    %987 = vmatprep.subr.mxu0 0.0
    %988 = vmatpush1.msra.mxu0 0.0
    %989 = vmatprep.subr.mxu0 0.0
    %990 = vmatpush1.msra.mxu0 0.0
    %991 = vmatprep.subr.mxu0 0.0
    %992 = vmatpush1.msra.mxu0 0.0
    %993 = vmatprep.subr.mxu0 0.0
    %994 = vmatpush1.msra.mxu0 0.0
    %995 = vmatprep.subr.mxu0 0.0
    %996 = vmatpush1.msra.mxu0 0.0
    %997 = vmatprep.subr.mxu0 0.0
    %998 = vmatpush1.msra.mxu0 0.0
    %999 = vmatprep.subr.mxu0 0.0
    %1000 = vmatpush1.msra.mxu0 0.0
    %1001 = vmatprep.mubr.f32.mxu0 0.0
    %1002 = vmatmul.mubr.f32.gmra.mrb[0].mxu0 %v936
    %v1003 = vpop.f32.mrb[0].mxu0
    %v1004 = vadd.f32 %v258, %v1003
    %v1005 = vpop.f32.mrb[0].mxu0
    %1006 = vdwg.mxu0
    %v1007 = vtanh.pop %v1004
    %1008 = vmatprep.subr.mxu0 0.0
    %1009 = vmatpush1.msra.mxu0 %v259
    %1010 = vmatprep.subr.mxu0 0.0
    %1011 = vmatpush1.msra.mxu0 %v260
    %1012 = vmatprep.subr.mxu0 0.0
    %1013 = vmatpush1.msra.mxu0 %v261
    %1014 = vmatprep.subr.mxu0 0.0
    %1015 = vmatpush1.msra.mxu0 %v262
    %1016 = vmatprep.subr.mxu0 0.0
    %1017 = vmatpush1.msra.mxu0 %v263
    %1018 = vmatprep.subr.mxu0 0.0
    %1019 = vmatpush1.msra.mxu0 %v264
    %1020 = vmatprep.subr.mxu0 0.0
    %1021 = vmatpush1.msra.mxu0 %v265
    %1022 = vmatprep.subr.mxu0 0.0
    %1023 = vmatpush1.msra.mxu0 %v266
    %1024 = vmatprep.subr.mxu0 0.0
    %1025 = vmatpush1.msra.mxu0 %v267
    %1026 = vmatprep.subr.mxu0 0.0
    %1027 = vmatpush1.msra.mxu0 %v268
    %1028 = vmatprep.subr.mxu0 0.0
    %1029 = vmatpush1.msra.mxu0 %v269
    %1030 = vmatprep.subr.mxu0 0.0
    %1031 = vmatpush1.msra.mxu0 %v270
    %1032 = vmatprep.subr.mxu0 0.0
    %1033 = vmatpush1.msra.mxu0 %v271
    %1034 = vmatprep.subr.mxu0 0.0
    %1035 = vmatpush1.msra.mxu0 %v272
    %1036 = vmatprep.subr.mxu0 0.0
    %1037 = vmatpush1.msra.mxu0 %v273
    %1038 = vmatprep.subr.mxu0 0.0
    %1039 = vmatpush1.msra.mxu0 %v274
    %1040 = vmatprep.subr.mxu0 0.0
    %1041 = vmatpush1.msra.mxu0 0.0
    %1042 = vmatprep.subr.mxu0 0.0
    %1043 = vmatpush1.msra.mxu0 0.0
    %1044 = vmatprep.subr.mxu0 0.0
    %1045 = vmatpush1.msra.mxu0 0.0
    %1046 = vmatprep.subr.mxu0 0.0
    %1047 = vmatpush1.msra.mxu0 0.0
    %1048 = vmatprep.subr.mxu0 0.0
    %1049 = vmatpush1.msra.mxu0 0.0
    %1050 = vmatprep.subr.mxu0 0.0
    %1051 = vmatpush1.msra.mxu0 0.0
    %1052 = vmatprep.subr.mxu0 0.0
    %1053 = vmatpush1.msra.mxu0 0.0
    %1054 = vmatprep.subr.mxu0 0.0
    %1055 = vmatpush1.msra.mxu0 0.0
    %1056 = vmatprep.subr.mxu0 0.0
    %1057 = vmatpush1.msra.mxu0 0.0
    %1058 = vmatprep.subr.mxu0 0.0
    %1059 = vmatpush1.msra.mxu0 0.0
    %1060 = vmatprep.subr.mxu0 0.0
    %1061 = vmatpush1.msra.mxu0 0.0
    %1062 = vmatprep.subr.mxu0 0.0
    %1063 = vmatpush1.msra.mxu0 0.0
    %1064 = vmatprep.subr.mxu0 0.0
    %1065 = vmatpush1.msra.mxu0 0.0
    %1066 = vmatprep.subr.mxu0 0.0
    %1067 = vmatpush1.msra.mxu0 0.0
    %1068 = vmatprep.subr.mxu0 0.0
    %1069 = vmatpush1.msra.mxu0 0.0
    %1070 = vmatprep.subr.mxu0 0.0
    %1071 = vmatpush1.msra.mxu0 0.0
    %1072 = vmatprep.mubr.f32.mxu0 0.0
    %1073 = vmatmul.mubr.f32.gmra.mrb[0].mxu0 %v1007
    %v1074 = vpop.f32.mrb[0].mxu0
    %v1075 = vadd.f32 %v275, %v1074
    %v1076 = vpop.f32.mrb[0].mxu0
    %1077 = vdwg.mxu0
    %1078 = vst [vmem:[#allocation14 + $0x2] sm:$0x1] %v1075
    %1079 = vmatprep.subr.mxu0 0.0
    %1080 = vmatpush1.msra.mxu0 %v276
    %1081 = vmatprep.subr.mxu0 0.0
    %1082 = vmatpush1.msra.mxu0 %v277
    %1083 = vmatprep.subr.mxu0 0.0
    %1084 = vmatpush1.msra.mxu0 %v278
    %1085 = vmatprep.subr.mxu0 0.0
    %1086 = vmatpush1.msra.mxu0 %v279
    %1087 = vmatprep.subr.mxu0 0.0
    %1088 = vmatpush1.msra.mxu0 %v280
    %1089 = vmatprep.subr.mxu0 0.0
    %1090 = vmatpush1.msra.mxu0 %v281
    %1091 = vmatprep.subr.mxu0 0.0
    %1092 = vmatpush1.msra.mxu0 %v282
    %1093 = vmatprep.subr.mxu0 0.0
    %1094 = vmatpush1.msra.mxu0 %v283
    %1095 = vmatprep.subr.mxu0 0.0
    %1096 = vmatpush1.msra.mxu0 %v284
    %1097 = vmatprep.subr.mxu0 0.0
    %1098 = vmatpush1.msra.mxu0 %v285
    %1099 = vmatprep.subr.mxu0 0.0
    %1100 = vmatpush1.msra.mxu0 %v286
    %1101 = vmatprep.subr.mxu0 0.0
    %1102 = vmatpush1.msra.mxu0 %v287
    %1103 = vmatprep.subr.mxu0 0.0
    %1104 = vmatpush1.msra.mxu0 %v288
    %1105 = vmatprep.subr.mxu0 0.0
    %1106 = vmatpush1.msra.mxu0 %v289
    %1107 = vmatprep.subr.mxu0 0.0
    %1108 = vmatpush1.msra.mxu0 %v290
    %1109 = vmatprep.subr.mxu0 0.0
    %1110 = vmatpush1.msra.mxu0 %v291
    %1111 = vmatprep.subr.mxu0 0.0
    %1112 = vmatpush1.msra.mxu0 0.0
    %1113 = vmatprep.subr.mxu0 0.0
    %1114 = vmatpush1.msra.mxu0 0.0
    %1115 = vmatprep.subr.mxu0 0.0
    %1116 = vmatpush1.msra.mxu0 0.0
    %1117 = vmatprep.subr.mxu0 0.0
    %1118 = vmatpush1.msra.mxu0 0.0
    %1119 = vmatprep.subr.mxu0 0.0
    %1120 = vmatpush1.msra.mxu0 0.0
    %1121 = vmatprep.subr.mxu0 0.0
    %1122 = vmatpush1.msra.mxu0 0.0
    %1123 = vmatprep.subr.mxu0 0.0
    %1124 = vmatpush1.msra.mxu0 0.0
    %1125 = vmatprep.subr.mxu0 0.0
    %1126 = vmatpush1.msra.mxu0 0.0
    %1127 = vmatprep.subr.mxu0 0.0
    %1128 = vmatpush1.msra.mxu0 0.0
    %1129 = vmatprep.subr.mxu0 0.0
    %1130 = vmatpush1.msra.mxu0 0.0
    %1131 = vmatprep.subr.mxu0 0.0
    %1132 = vmatpush1.msra.mxu0 0.0
    %1133 = vmatprep.subr.mxu0 0.0
    %1134 = vmatpush1.msra.mxu0 0.0
    %1135 = vmatprep.subr.mxu0 0.0
    %1136 = vmatpush1.msra.mxu0 0.0
    %1137 = vmatprep.subr.mxu0 0.0
    %1138 = vmatpush1.msra.mxu0 0.0
    %1139 = vmatprep.subr.mxu0 0.0
    %1140 = vmatpush1.msra.mxu0 0.0
    %1141 = vmatprep.subr.mxu0 0.0
    %1142 = vmatpush1.msra.mxu0 0.0
    %1143 = vmatprep.mubr.f32.mxu0 0.0
    %1144 = vmatmul.mubr.f32.gmra.mrb[0].mxu0 %v1007
    %v1145 = vpop.f32.mrb[0].mxu0
    %v1146 = vadd.f32 %v292, %v1145
    %v1147 = vpop.f32.mrb[0].mxu0
    %1148 = vdwg.mxu0
    %v1149 = vld [vmem:[#allocation2 + $0x3] sm:$0x1]
    %1150 = vmatprep.subr.mxu0 0.0
    %1151 = vmatpush1.msra.mxu0 %v226
    %1152 = vmatprep.subr.mxu0 0.0
    %1153 = vmatpush1.msra.mxu0 %v227
    %1154 = vmatprep.subr.mxu0 0.0
    %1155 = vmatpush1.msra.mxu0 %v228
    %1156 = vmatprep.subr.mxu0 0.0
    %1157 = vmatpush1.msra.mxu0 %v229
    %1158 = vmatprep.subr.mxu0 0.0
    %1159 = vmatpush1.msra.mxu0 %v230
    %1160 = vmatprep.subr.mxu0 0.0
    %1161 = vmatpush1.msra.mxu0 %v231
    %1162 = vmatprep.subr.mxu0 0.0
    %1163 = vmatpush1.msra.mxu0 %v232
    %1164 = vmatprep.subr.mxu0 0.0
    %1165 = vmatpush1.msra.mxu0 %v233
    %1166 = vmatprep.subr.mxu0 0.0
    %1167 = vmatpush1.msra.mxu0 %v234
    %1168 = vmatprep.subr.mxu0 0.0
    %1169 = vmatpush1.msra.mxu0 %v235
    %1170 = vmatprep.subr.mxu0 0.0
    %1171 = vmatpush1.msra.mxu0 %v236
    %1172 = vmatprep.subr.mxu0 0.0
    %1173 = vmatpush1.msra.mxu0 %v237
    %1174 = vmatprep.subr.mxu0 0.0
    %1175 = vmatpush1.msra.mxu0 %v238
    %1176 = vmatprep.subr.mxu0 0.0
    %1177 = vmatpush1.msra.mxu0 %v239
    %1178 = vmatprep.subr.mxu0 0.0
    %1179 = vmatpush1.msra.mxu0 %v240
    %1180 = vmatprep.subr.mxu0 0.0
    %1181 = vmatpush1.msra.mxu0 %v241
    %1182 = vmatprep.subr.mxu0 0.0
    %1183 = vmatpush1.msra.mxu0 0.0
    %1184 = vmatprep.subr.mxu0 0.0
    %1185 = vmatpush1.msra.mxu0 0.0
    %1186 = vmatprep.subr.mxu0 0.0
    %1187 = vmatpush1.msra.mxu0 0.0
    %1188 = vmatprep.subr.mxu0 0.0
    %1189 = vmatpush1.msra.mxu0 0.0
    %1190 = vmatprep.subr.mxu0 0.0
    %1191 = vmatpush1.msra.mxu0 0.0
    %1192 = vmatprep.subr.mxu0 0.0
    %1193 = vmatpush1.msra.mxu0 0.0
    %1194 = vmatprep.subr.mxu0 0.0
    %1195 = vmatpush1.msra.mxu0 0.0
    %1196 = vmatprep.subr.mxu0 0.0
    %1197 = vmatpush1.msra.mxu0 0.0
    %1198 = vmatprep.subr.mxu0 0.0
    %1199 = vmatpush1.msra.mxu0 0.0
    %1200 = vmatprep.subr.mxu0 0.0
    %1201 = vmatpush1.msra.mxu0 0.0
    %1202 = vmatprep.subr.mxu0 0.0
    %1203 = vmatpush1.msra.mxu0 0.0
    %1204 = vmatprep.subr.mxu0 0.0
    %1205 = vmatpush1.msra.mxu0 0.0
    %1206 = vmatprep.subr.mxu0 0.0
    %1207 = vmatpush1.msra.mxu0 0.0
    %1208 = vmatprep.subr.mxu0 0.0
    %1209 = vmatpush1.msra.mxu0 0.0
    %1210 = vmatprep.subr.mxu0 0.0
    %1211 = vmatpush1.msra.mxu0 0.0
    %1212 = vmatprep.subr.mxu0 0.0
    %1213 = vmatpush1.msra.mxu0 0.0
    %1214 = vmatprep.mubr.f32.mxu0 0.0
    %1215 = vmatmul.mubr.f32.gmra.mrb[0].mxu0 %v1146
    %v1216 = vpop.f32.mrb[0].mxu0
    %v1217 = vadd.f32 0.0, %v1216
    %v1218 = vpop.f32.mrb[0].mxu0
    %1219 = vdwg.mxu0
    %v1220 = vadd.f32 %v1149, %v1217
    %v1221 = vtanh.pop %v1220
    %1222 = vmatprep.subr.mxu0 0.0
    %1223 = vmatpush1.msra.mxu0 %v242
    %1224 = vmatprep.subr.mxu0 0.0
    %1225 = vmatpush1.msra.mxu0 %v243
    %1226 = vmatprep.subr.mxu0 0.0
    %1227 = vmatpush1.msra.mxu0 %v244
    %1228 = vmatprep.subr.mxu0 0.0
    %1229 = vmatpush1.msra.mxu0 %v245
    %1230 = vmatprep.subr.mxu0 0.0
    %1231 = vmatpush1.msra.mxu0 %v246
    %1232 = vmatprep.subr.mxu0 0.0
    %1233 = vmatpush1.msra.mxu0 %v247
    %1234 = vmatprep.subr.mxu0 0.0
    %1235 = vmatpush1.msra.mxu0 %v248
    %1236 = vmatprep.subr.mxu0 0.0
    %1237 = vmatpush1.msra.mxu0 %v249
    %1238 = vmatprep.subr.mxu0 0.0
    %1239 = vmatpush1.msra.mxu0 %v250
    %1240 = vmatprep.subr.mxu0 0.0
    %1241 = vmatpush1.msra.mxu0 %v251
    %1242 = vmatprep.subr.mxu0 0.0
    %1243 = vmatpush1.msra.mxu0 %v252
    %1244 = vmatprep.subr.mxu0 0.0
    %1245 = vmatpush1.msra.mxu0 %v253
    %1246 = vmatprep.subr.mxu0 0.0
    %1247 = vmatpush1.msra.mxu0 %v254
    %1248 = vmatprep.subr.mxu0 0.0
    %1249 = vmatpush1.msra.mxu0 %v255
    %1250 = vmatprep.subr.mxu0 0.0
    %1251 = vmatpush1.msra.mxu0 %v256
    %1252 = vmatprep.subr.mxu0 0.0
    %1253 = vmatpush1.msra.mxu0 %v257
    %1254 = vmatprep.subr.mxu0 0.0
    %1255 = vmatpush1.msra.mxu0 0.0
    %1256 = vmatprep.subr.mxu0 0.0
    %1257 = vmatpush1.msra.mxu0 0.0
    %1258 = vmatprep.subr.mxu0 0.0
    %1259 = vmatpush1.msra.mxu0 0.0
    %1260 = vmatprep.subr.mxu0 0.0
    %1261 = vmatpush1.msra.mxu0 0.0
    %1262 = vmatprep.subr.mxu0 0.0
    %1263 = vmatpush1.msra.mxu0 0.0
    %1264 = vmatprep.subr.mxu0 0.0
    %1265 = vmatpush1.msra.mxu0 0.0
    %1266 = vmatprep.subr.mxu0 0.0
    %1267 = vmatpush1.msra.mxu0 0.0
    %1268 = vmatprep.subr.mxu0 0.0
    %1269 = vmatpush1.msra.mxu0 0.0
    %1270 = vmatprep.subr.mxu0 0.0
    %1271 = vmatpush1.msra.mxu0 0.0
    %1272 = vmatprep.subr.mxu0 0.0
    %1273 = vmatpush1.msra.mxu0 0.0
    %1274 = vmatprep.subr.mxu0 0.0
    %1275 = vmatpush1.msra.mxu0 0.0
    %1276 = vmatprep.subr.mxu0 0.0
    %1277 = vmatpush1.msra.mxu0 0.0
    %1278 = vmatprep.subr.mxu0 0.0
    %1279 = vmatpush1.msra.mxu0 0.0
    %1280 = vmatprep.subr.mxu0 0.0
    %1281 = vmatpush1.msra.mxu0 0.0
    %1282 = vmatprep.subr.mxu0 0.0
    %1283 = vmatpush1.msra.mxu0 0.0
    %1284 = vmatprep.subr.mxu0 0.0
    %1285 = vmatpush1.msra.mxu0 0.0
    %1286 = vmatprep.mubr.f32.mxu0 0.0
    %1287 = vmatmul.mubr.f32.gmra.mrb[0].mxu0 %v1221
    %v1288 = vpop.f32.mrb[0].mxu0
    %v1289 = vadd.f32 %v258, %v1288
    %v1290 = vpop.f32.mrb[0].mxu0
    %1291 = vdwg.mxu0
    %v1292 = vtanh.pop %v1289
    %1293 = vmatprep.subr.mxu0 0.0
    %1294 = vmatpush1.msra.mxu0 %v259
    %1295 = vmatprep.subr.mxu0 0.0
    %1296 = vmatpush1.msra.mxu0 %v260
    %1297 = vmatprep.subr.mxu0 0.0
    %1298 = vmatpush1.msra.mxu0 %v261
    %1299 = vmatprep.subr.mxu0 0.0
    %1300 = vmatpush1.msra.mxu0 %v262
    %1301 = vmatprep.subr.mxu0 0.0
    %1302 = vmatpush1.msra.mxu0 %v263
    %1303 = vmatprep.subr.mxu0 0.0
    %1304 = vmatpush1.msra.mxu0 %v264
    %1305 = vmatprep.subr.mxu0 0.0
    %1306 = vmatpush1.msra.mxu0 %v265
    %1307 = vmatprep.subr.mxu0 0.0
    %1308 = vmatpush1.msra.mxu0 %v266
    %1309 = vmatprep.subr.mxu0 0.0
    %1310 = vmatpush1.msra.mxu0 %v267
    %1311 = vmatprep.subr.mxu0 0.0
    %1312 = vmatpush1.msra.mxu0 %v268
    %1313 = vmatprep.subr.mxu0 0.0
    %1314 = vmatpush1.msra.mxu0 %v269
    %1315 = vmatprep.subr.mxu0 0.0
    %1316 = vmatpush1.msra.mxu0 %v270
    %1317 = vmatprep.subr.mxu0 0.0
    %1318 = vmatpush1.msra.mxu0 %v271
    %1319 = vmatprep.subr.mxu0 0.0
    %1320 = vmatpush1.msra.mxu0 %v272
    %1321 = vmatprep.subr.mxu0 0.0
    %1322 = vmatpush1.msra.mxu0 %v273
    %1323 = vmatprep.subr.mxu0 0.0
    %1324 = vmatpush1.msra.mxu0 %v274
    %1325 = vmatprep.subr.mxu0 0.0
    %1326 = vmatpush1.msra.mxu0 0.0
    %1327 = vmatprep.subr.mxu0 0.0
    %1328 = vmatpush1.msra.mxu0 0.0
    %1329 = vmatprep.subr.mxu0 0.0
    %1330 = vmatpush1.msra.mxu0 0.0
    %1331 = vmatprep.subr.mxu0 0.0
    %1332 = vmatpush1.msra.mxu0 0.0
    %1333 = vmatprep.subr.mxu0 0.0
    %1334 = vmatpush1.msra.mxu0 0.0
    %1335 = vmatprep.subr.mxu0 0.0
    %1336 = vmatpush1.msra.mxu0 0.0
    %1337 = vmatprep.subr.mxu0 0.0
    %1338 = vmatpush1.msra.mxu0 0.0
    %1339 = vmatprep.subr.mxu0 0.0
    %1340 = vmatpush1.msra.mxu0 0.0
    %1341 = vmatprep.subr.mxu0 0.0
    %1342 = vmatpush1.msra.mxu0 0.0
    %1343 = vmatprep.subr.mxu0 0.0
    %1344 = vmatpush1.msra.mxu0 0.0
    %1345 = vmatprep.subr.mxu0 0.0
    %1346 = vmatpush1.msra.mxu0 0.0
    %1347 = vmatprep.subr.mxu0 0.0
    %1348 = vmatpush1.msra.mxu0 0.0
    %1349 = vmatprep.subr.mxu0 0.0
    %1350 = vmatpush1.msra.mxu0 0.0
    %1351 = vmatprep.subr.mxu0 0.0
    %1352 = vmatpush1.msra.mxu0 0.0
    %1353 = vmatprep.subr.mxu0 0.0
    %1354 = vmatpush1.msra.mxu0 0.0
    %1355 = vmatprep.subr.mxu0 0.0
    %1356 = vmatpush1.msra.mxu0 0.0
    %1357 = vmatprep.mubr.f32.mxu0 0.0
    %1358 = vmatmul.mubr.f32.gmra.mrb[0].mxu0 %v1292
    %v1359 = vpop.f32.mrb[0].mxu0
    %v1360 = vadd.f32 %v275, %v1359
    %v1361 = vpop.f32.mrb[0].mxu0
    %1362 = vdwg.mxu0
    %1363 = vst [vmem:[#allocation14 + $0x3] sm:$0x1] %v1360
    %1364 = vmatprep.subr.mxu0 0.0
    %1365 = vmatpush1.msra.mxu0 %v276
    %1366 = vmatprep.subr.mxu0 0.0
    %1367 = vmatpush1.msra.mxu0 %v277
    %1368 = vmatprep.subr.mxu0 0.0
    %1369 = vmatpush1.msra.mxu0 %v278
    %1370 = vmatprep.subr.mxu0 0.0
    %1371 = vmatpush1.msra.mxu0 %v279
    %1372 = vmatprep.subr.mxu0 0.0
    %1373 = vmatpush1.msra.mxu0 %v280
    %1374 = vmatprep.subr.mxu0 0.0
    %1375 = vmatpush1.msra.mxu0 %v281
    %1376 = vmatprep.subr.mxu0 0.0
    %1377 = vmatpush1.msra.mxu0 %v282
    %1378 = vmatprep.subr.mxu0 0.0
    %1379 = vmatpush1.msra.mxu0 %v283
    %1380 = vmatprep.subr.mxu0 0.0
    %1381 = vmatpush1.msra.mxu0 %v284
    %1382 = vmatprep.subr.mxu0 0.0
    %1383 = vmatpush1.msra.mxu0 %v285
    %1384 = vmatprep.subr.mxu0 0.0
    %1385 = vmatpush1.msra.mxu0 %v286
    %1386 = vmatprep.subr.mxu0 0.0
    %1387 = vmatpush1.msra.mxu0 %v287
    %1388 = vmatprep.subr.mxu0 0.0
    %1389 = vmatpush1.msra.mxu0 %v288
    %1390 = vmatprep.subr.mxu0 0.0
    %1391 = vmatpush1.msra.mxu0 %v289
    %1392 = vmatprep.subr.mxu0 0.0
    %1393 = vmatpush1.msra.mxu0 %v290
    %1394 = vmatprep.subr.mxu0 0.0
    %1395 = vmatpush1.msra.mxu0 %v291
    %1396 = vmatprep.subr.mxu0 0.0
    %1397 = vmatpush1.msra.mxu0 0.0
    %1398 = vmatprep.subr.mxu0 0.0
    %1399 = vmatpush1.msra.mxu0 0.0
    %1400 = vmatprep.subr.mxu0 0.0
    %1401 = vmatpush1.msra.mxu0 0.0
    %1402 = vmatprep.subr.mxu0 0.0
    %1403 = vmatpush1.msra.mxu0 0.0
    %1404 = vmatprep.subr.mxu0 0.0
    %1405 = vmatpush1.msra.mxu0 0.0
    %1406 = vmatprep.subr.mxu0 0.0
    %1407 = vmatpush1.msra.mxu0 0.0
    %1408 = vmatprep.subr.mxu0 0.0
    %1409 = vmatpush1.msra.mxu0 0.0
    %1410 = vmatprep.subr.mxu0 0.0
    %1411 = vmatpush1.msra.mxu0 0.0
    %1412 = vmatprep.subr.mxu0 0.0
    %1413 = vmatpush1.msra.mxu0 0.0
    %1414 = vmatprep.subr.mxu0 0.0
    %1415 = vmatpush1.msra.mxu0 0.0
    %1416 = vmatprep.subr.mxu0 0.0
    %1417 = vmatpush1.msra.mxu0 0.0
    %1418 = vmatprep.subr.mxu0 0.0
    %1419 = vmatpush1.msra.mxu0 0.0
    %1420 = vmatprep.subr.mxu0 0.0
    %1421 = vmatpush1.msra.mxu0 0.0
    %1422 = vmatprep.subr.mxu0 0.0
    %1423 = vmatpush1.msra.mxu0 0.0
    %1424 = vmatprep.subr.mxu0 0.0
    %1425 = vmatpush1.msra.mxu0 0.0
    %1426 = vmatprep.subr.mxu0 0.0
    %1427 = vmatpush1.msra.mxu0 0.0
    %1428 = vmatprep.mubr.f32.mxu0 0.0
    %1429 = vmatmul.mubr.f32.gmra.mrb[0].mxu0 %v1292
    %v1430 = vpop.f32.mrb[0].mxu0
    %v1431 = vadd.f32 %v292, %v1430
    %v1432 = vpop.f32.mrb[0].mxu0
    %1433 = vdwg.mxu0
    %v1434 = vld [vmem:[#allocation2 + $0x4] sm:$0x1]
    %1435 = vmatprep.subr.mxu0 0.0
    %1436 = vmatpush1.msra.mxu0 %v226
    %1437 = vmatprep.subr.mxu0 0.0
    %1438 = vmatpush1.msra.mxu0 %v227
    %1439 = vmatprep.subr.mxu0 0.0
    %1440 = vmatpush1.msra.mxu0 %v228
    %1441 = vmatprep.subr.mxu0 0.0
    %1442 = vmatpush1.msra.mxu0 %v229
    %1443 = vmatprep.subr.mxu0 0.0
    %1444 = vmatpush1.msra.mxu0 %v230
    %1445 = vmatprep.subr.mxu0 0.0
    %1446 = vmatpush1.msra.mxu0 %v231
    %1447 = vmatprep.subr.mxu0 0.0
    %1448 = vmatpush1.msra.mxu0 %v232
    %1449 = vmatprep.subr.mxu0 0.0
    %1450 = vmatpush1.msra.mxu0 %v233
    %1451 = vmatprep.subr.mxu0 0.0
    %1452 = vmatpush1.msra.mxu0 %v234
    %1453 = vmatprep.subr.mxu0 0.0
    %1454 = vmatpush1.msra.mxu0 %v235
    %1455 = vmatprep.subr.mxu0 0.0
    %1456 = vmatpush1.msra.mxu0 %v236
    %1457 = vmatprep.subr.mxu0 0.0
    %1458 = vmatpush1.msra.mxu0 %v237
    %1459 = vmatprep.subr.mxu0 0.0
    %1460 = vmatpush1.msra.mxu0 %v238
    %1461 = vmatprep.subr.mxu0 0.0
    %1462 = vmatpush1.msra.mxu0 %v239
    %1463 = vmatprep.subr.mxu0 0.0
    %1464 = vmatpush1.msra.mxu0 %v240
    %1465 = vmatprep.subr.mxu0 0.0
    %1466 = vmatpush1.msra.mxu0 %v241
    %1467 = vmatprep.subr.mxu0 0.0
    %1468 = vmatpush1.msra.mxu0 0.0
    %1469 = vmatprep.subr.mxu0 0.0
    %1470 = vmatpush1.msra.mxu0 0.0
    %1471 = vmatprep.subr.mxu0 0.0
    %1472 = vmatpush1.msra.mxu0 0.0
    %1473 = vmatprep.subr.mxu0 0.0
    %1474 = vmatpush1.msra.mxu0 0.0
    %1475 = vmatprep.subr.mxu0 0.0
    %1476 = vmatpush1.msra.mxu0 0.0
    %1477 = vmatprep.subr.mxu0 0.0
    %1478 = vmatpush1.msra.mxu0 0.0
    %1479 = vmatprep.subr.mxu0 0.0
    %1480 = vmatpush1.msra.mxu0 0.0
    %1481 = vmatprep.subr.mxu0 0.0
    %1482 = vmatpush1.msra.mxu0 0.0
    %1483 = vmatprep.subr.mxu0 0.0
    %1484 = vmatpush1.msra.mxu0 0.0
    %1485 = vmatprep.subr.mxu0 0.0
    %1486 = vmatpush1.msra.mxu0 0.0
    %1487 = vmatprep.subr.mxu0 0.0
    %1488 = vmatpush1.msra.mxu0 0.0
    %1489 = vmatprep.subr.mxu0 0.0
    %1490 = vmatpush1.msra.mxu0 0.0
    %1491 = vmatprep.subr.mxu0 0.0
    %1492 = vmatpush1.msra.mxu0 0.0
    %1493 = vmatprep.subr.mxu0 0.0
    %1494 = vmatpush1.msra.mxu0 0.0
    %1495 = vmatprep.subr.mxu0 0.0
    %1496 = vmatpush1.msra.mxu0 0.0
    %1497 = vmatprep.subr.mxu0 0.0
    %1498 = vmatpush1.msra.mxu0 0.0
    %1499 = vmatprep.mubr.f32.mxu0 0.0
    %1500 = vmatmul.mubr.f32.gmra.mrb[0].mxu0 %v1431
    %v1501 = vpop.f32.mrb[0].mxu0
    %v1502 = vadd.f32 0.0, %v1501
    %v1503 = vpop.f32.mrb[0].mxu0
    %1504 = vdwg.mxu0
    %v1505 = vadd.f32 %v1434, %v1502
    %v1506 = vtanh.pop %v1505
    %1507 = vmatprep.subr.mxu0 0.0
    %1508 = vmatpush1.msra.mxu0 %v242
    %1509 = vmatprep.subr.mxu0 0.0
    %1510 = vmatpush1.msra.mxu0 %v243
    %1511 = vmatprep.subr.mxu0 0.0
    %1512 = vmatpush1.msra.mxu0 %v244
    %1513 = vmatprep.subr.mxu0 0.0
    %1514 = vmatpush1.msra.mxu0 %v245
    %1515 = vmatprep.subr.mxu0 0.0
    %1516 = vmatpush1.msra.mxu0 %v246
    %1517 = vmatprep.subr.mxu0 0.0
    %1518 = vmatpush1.msra.mxu0 %v247
    %1519 = vmatprep.subr.mxu0 0.0
    %1520 = vmatpush1.msra.mxu0 %v248
    %1521 = vmatprep.subr.mxu0 0.0
    %1522 = vmatpush1.msra.mxu0 %v249
    %1523 = vmatprep.subr.mxu0 0.0
    %1524 = vmatpush1.msra.mxu0 %v250
    %1525 = vmatprep.subr.mxu0 0.0
    %1526 = vmatpush1.msra.mxu0 %v251
    %1527 = vmatprep.subr.mxu0 0.0
    %1528 = vmatpush1.msra.mxu0 %v252
    %1529 = vmatprep.subr.mxu0 0.0
    %1530 = vmatpush1.msra.mxu0 %v253
    %1531 = vmatprep.subr.mxu0 0.0
    %1532 = vmatpush1.msra.mxu0 %v254
    %1533 = vmatprep.subr.mxu0 0.0
    %1534 = vmatpush1.msra.mxu0 %v255
    %1535 = vmatprep.subr.mxu0 0.0
    %1536 = vmatpush1.msra.mxu0 %v256
    %1537 = vmatprep.subr.mxu0 0.0
    %1538 = vmatpush1.msra.mxu0 %v257
    %1539 = vmatprep.subr.mxu0 0.0
    %1540 = vmatpush1.msra.mxu0 0.0
    %1541 = vmatprep.subr.mxu0 0.0
    %1542 = vmatpush1.msra.mxu0 0.0
    %1543 = vmatprep.subr.mxu0 0.0
    %1544 = vmatpush1.msra.mxu0 0.0
    %1545 = vmatprep.subr.mxu0 0.0
    %1546 = vmatpush1.msra.mxu0 0.0
    %1547 = vmatprep.subr.mxu0 0.0
    %1548 = vmatpush1.msra.mxu0 0.0
    %1549 = vmatprep.subr.mxu0 0.0
    %1550 = vmatpush1.msra.mxu0 0.0
    %1551 = vmatprep.subr.mxu0 0.0
    %1552 = vmatpush1.msra.mxu0 0.0
    %1553 = vmatprep.subr.mxu0 0.0
    %1554 = vmatpush1.msra.mxu0 0.0
    %1555 = vmatprep.subr.mxu0 0.0
    %1556 = vmatpush1.msra.mxu0 0.0
    %1557 = vmatprep.subr.mxu0 0.0
    %1558 = vmatpush1.msra.mxu0 0.0
    %1559 = vmatprep.subr.mxu0 0.0
    %1560 = vmatpush1.msra.mxu0 0.0
    %1561 = vmatprep.subr.mxu0 0.0
    %1562 = vmatpush1.msra.mxu0 0.0
    %1563 = vmatprep.subr.mxu0 0.0
    %1564 = vmatpush1.msra.mxu0 0.0
    %1565 = vmatprep.subr.mxu0 0.0
    %1566 = vmatpush1.msra.mxu0 0.0
    %1567 = vmatprep.subr.mxu0 0.0
    %1568 = vmatpush1.msra.mxu0 0.0
    %1569 = vmatprep.subr.mxu0 0.0
    %1570 = vmatpush1.msra.mxu0 0.0
    %1571 = vmatprep.mubr.f32.mxu0 0.0
    %1572 = vmatmul.mubr.f32.gmra.mrb[0].mxu0 %v1506
    %v1573 = vpop.f32.mrb[0].mxu0
    %v1574 = vadd.f32 %v258, %v1573
    %v1575 = vpop.f32.mrb[0].mxu0
    %1576 = vdwg.mxu0
    %v1577 = vtanh.pop %v1574
    %1578 = vmatprep.subr.mxu0 0.0
    %1579 = vmatpush1.msra.mxu0 %v259
    %1580 = vmatprep.subr.mxu0 0.0
    %1581 = vmatpush1.msra.mxu0 %v260
    %1582 = vmatprep.subr.mxu0 0.0
    %1583 = vmatpush1.msra.mxu0 %v261
    %1584 = vmatprep.subr.mxu0 0.0
    %1585 = vmatpush1.msra.mxu0 %v262
    %1586 = vmatprep.subr.mxu0 0.0
    %1587 = vmatpush1.msra.mxu0 %v263
    %1588 = vmatprep.subr.mxu0 0.0
    %1589 = vmatpush1.msra.mxu0 %v264
    %1590 = vmatprep.subr.mxu0 0.0
    %1591 = vmatpush1.msra.mxu0 %v265
    %1592 = vmatprep.subr.mxu0 0.0
    %1593 = vmatpush1.msra.mxu0 %v266
    %1594 = vmatprep.subr.mxu0 0.0
    %1595 = vmatpush1.msra.mxu0 %v267
    %1596 = vmatprep.subr.mxu0 0.0
    %1597 = vmatpush1.msra.mxu0 %v268
    %1598 = vmatprep.subr.mxu0 0.0
    %1599 = vmatpush1.msra.mxu0 %v269
    %1600 = vmatprep.subr.mxu0 0.0
    %1601 = vmatpush1.msra.mxu0 %v270
    %1602 = vmatprep.subr.mxu0 0.0
    %1603 = vmatpush1.msra.mxu0 %v271
    %1604 = vmatprep.subr.mxu0 0.0
    %1605 = vmatpush1.msra.mxu0 %v272
    %1606 = vmatprep.subr.mxu0 0.0
    %1607 = vmatpush1.msra.mxu0 %v273
    %1608 = vmatprep.subr.mxu0 0.0
    %1609 = vmatpush1.msra.mxu0 %v274
    %1610 = vmatprep.subr.mxu0 0.0
    %1611 = vmatpush1.msra.mxu0 0.0
    %1612 = vmatprep.subr.mxu0 0.0
    %1613 = vmatpush1.msra.mxu0 0.0
    %1614 = vmatprep.subr.mxu0 0.0
    %1615 = vmatpush1.msra.mxu0 0.0
    %1616 = vmatprep.subr.mxu0 0.0
    %1617 = vmatpush1.msra.mxu0 0.0
    %1618 = vmatprep.subr.mxu0 0.0
    %1619 = vmatpush1.msra.mxu0 0.0
    %1620 = vmatprep.subr.mxu0 0.0
    %1621 = vmatpush1.msra.mxu0 0.0
    %1622 = vmatprep.subr.mxu0 0.0
    %1623 = vmatpush1.msra.mxu0 0.0
    %1624 = vmatprep.subr.mxu0 0.0
    %1625 = vmatpush1.msra.mxu0 0.0
    %1626 = vmatprep.subr.mxu0 0.0
    %1627 = vmatpush1.msra.mxu0 0.0
    %1628 = vmatprep.subr.mxu0 0.0
    %1629 = vmatpush1.msra.mxu0 0.0
    %1630 = vmatprep.subr.mxu0 0.0
    %1631 = vmatpush1.msra.mxu0 0.0
    %1632 = vmatprep.subr.mxu0 0.0
    %1633 = vmatpush1.msra.mxu0 0.0
    %1634 = vmatprep.subr.mxu0 0.0
    %1635 = vmatpush1.msra.mxu0 0.0
    %1636 = vmatprep.subr.mxu0 0.0
    %1637 = vmatpush1.msra.mxu0 0.0
    %1638 = vmatprep.subr.mxu0 0.0
    %1639 = vmatpush1.msra.mxu0 0.0
    %1640 = vmatprep.subr.mxu0 0.0
    %1641 = vmatpush1.msra.mxu0 0.0
    %1642 = vmatprep.mubr.f32.mxu0 0.0
    %1643 = vmatmul.mubr.f32.gmra.mrb[0].mxu0 %v1577
    %v1644 = vpop.f32.mrb[0].mxu0
    %v1645 = vadd.f32 %v275, %v1644
    %v1646 = vpop.f32.mrb[0].mxu0
    %1647 = vdwg.mxu0
    %1648 = vst [vmem:[#allocation14 + $0x4] sm:$0x1] %v1645
    %1649 = vmatprep.subr.mxu0 0.0
    %1650 = vmatpush1.msra.mxu0 %v276
    %1651 = vmatprep.subr.mxu0 0.0
    %1652 = vmatpush1.msra.mxu0 %v277
    %1653 = vmatprep.subr.mxu0 0.0
    %1654 = vmatpush1.msra.mxu0 %v278
    %1655 = vmatprep.subr.mxu0 0.0
    %1656 = vmatpush1.msra.mxu0 %v279
    %1657 = vmatprep.subr.mxu0 0.0
    %1658 = vmatpush1.msra.mxu0 %v280
    %1659 = vmatprep.subr.mxu0 0.0
    %1660 = vmatpush1.msra.mxu0 %v281
    %1661 = vmatprep.subr.mxu0 0.0
    %1662 = vmatpush1.msra.mxu0 %v282
    %1663 = vmatprep.subr.mxu0 0.0
    %1664 = vmatpush1.msra.mxu0 %v283
    %1665 = vmatprep.subr.mxu0 0.0
    %1666 = vmatpush1.msra.mxu0 %v284
    %1667 = vmatprep.subr.mxu0 0.0
    %1668 = vmatpush1.msra.mxu0 %v285
    %1669 = vmatprep.subr.mxu0 0.0
    %1670 = vmatpush1.msra.mxu0 %v286
    %1671 = vmatprep.subr.mxu0 0.0
    %1672 = vmatpush1.msra.mxu0 %v287
    %1673 = vmatprep.subr.mxu0 0.0
    %1674 = vmatpush1.msra.mxu0 %v288
    %1675 = vmatprep.subr.mxu0 0.0
    %1676 = vmatpush1.msra.mxu0 %v289
    %1677 = vmatprep.subr.mxu0 0.0
    %1678 = vmatpush1.msra.mxu0 %v290
    %1679 = vmatprep.subr.mxu0 0.0
    %1680 = vmatpush1.msra.mxu0 %v291
    %1681 = vmatprep.subr.mxu0 0.0
    %1682 = vmatpush1.msra.mxu0 0.0
    %1683 = vmatprep.subr.mxu0 0.0
    %1684 = vmatpush1.msra.mxu0 0.0
    %1685 = vmatprep.subr.mxu0 0.0
    %1686 = vmatpush1.msra.mxu0 0.0
    %1687 = vmatprep.subr.mxu0 0.0
    %1688 = vmatpush1.msra.mxu0 0.0
    %1689 = vmatprep.subr.mxu0 0.0
    %1690 = vmatpush1.msra.mxu0 0.0
    %1691 = vmatprep.subr.mxu0 0.0
    %1692 = vmatpush1.msra.mxu0 0.0
    %1693 = vmatprep.subr.mxu0 0.0
    %1694 = vmatpush1.msra.mxu0 0.0
    %1695 = vmatprep.subr.mxu0 0.0
    %1696 = vmatpush1.msra.mxu0 0.0
    %1697 = vmatprep.subr.mxu0 0.0
    %1698 = vmatpush1.msra.mxu0 0.0
    %1699 = vmatprep.subr.mxu0 0.0
    %1700 = vmatpush1.msra.mxu0 0.0
    %1701 = vmatprep.subr.mxu0 0.0
    %1702 = vmatpush1.msra.mxu0 0.0
    %1703 = vmatprep.subr.mxu0 0.0
    %1704 = vmatpush1.msra.mxu0 0.0
    %1705 = vmatprep.subr.mxu0 0.0
    %1706 = vmatpush1.msra.mxu0 0.0
    %1707 = vmatprep.subr.mxu0 0.0
    %1708 = vmatpush1.msra.mxu0 0.0
    %1709 = vmatprep.subr.mxu0 0.0
    %1710 = vmatpush1.msra.mxu0 0.0
    %1711 = vmatprep.subr.mxu0 0.0
    %1712 = vmatpush1.msra.mxu0 0.0
    %1713 = vmatprep.mubr.f32.mxu0 0.0
    %1714 = vmatmul.mubr.f32.gmra.mrb[0].mxu0 %v1577
    %v1715 = vpop.f32.mrb[0].mxu0
    %v1716 = vadd.f32 %v292, %v1715
    %v1717 = vpop.f32.mrb[0].mxu0
    %1718 = vdwg.mxu0
    %v1719 = vld [vmem:[#allocation2 + $0x5] sm:$0x1]
    %1720 = vmatprep.subr.mxu0 0.0
    %1721 = vmatpush1.msra.mxu0 %v226
    %1722 = vmatprep.subr.mxu0 0.0
    %1723 = vmatpush1.msra.mxu0 %v227
    %1724 = vmatprep.subr.mxu0 0.0
    %1725 = vmatpush1.msra.mxu0 %v228
    %1726 = vmatprep.subr.mxu0 0.0
    %1727 = vmatpush1.msra.mxu0 %v229
    %1728 = vmatprep.subr.mxu0 0.0
    %1729 = vmatpush1.msra.mxu0 %v230
    %1730 = vmatprep.subr.mxu0 0.0
    %1731 = vmatpush1.msra.mxu0 %v231
    %1732 = vmatprep.subr.mxu0 0.0
    %1733 = vmatpush1.msra.mxu0 %v232
    %1734 = vmatprep.subr.mxu0 0.0
    %1735 = vmatpush1.msra.mxu0 %v233
    %1736 = vmatprep.subr.mxu0 0.0
    %1737 = vmatpush1.msra.mxu0 %v234
    %1738 = vmatprep.subr.mxu0 0.0
    %1739 = vmatpush1.msra.mxu0 %v235
    %1740 = vmatprep.subr.mxu0 0.0
    %1741 = vmatpush1.msra.mxu0 %v236
    %1742 = vmatprep.subr.mxu0 0.0
    %1743 = vmatpush1.msra.mxu0 %v237
    %1744 = vmatprep.subr.mxu0 0.0
    %1745 = vmatpush1.msra.mxu0 %v238
    %1746 = vmatprep.subr.mxu0 0.0
    %1747 = vmatpush1.msra.mxu0 %v239
    %1748 = vmatprep.subr.mxu0 0.0
    %1749 = vmatpush1.msra.mxu0 %v240
    %1750 = vmatprep.subr.mxu0 0.0
    %1751 = vmatpush1.msra.mxu0 %v241
    %1752 = vmatprep.subr.mxu0 0.0
    %1753 = vmatpush1.msra.mxu0 0.0
    %1754 = vmatprep.subr.mxu0 0.0
    %1755 = vmatpush1.msra.mxu0 0.0
    %1756 = vmatprep.subr.mxu0 0.0
    %1757 = vmatpush1.msra.mxu0 0.0
    %1758 = vmatprep.subr.mxu0 0.0
    %1759 = vmatpush1.msra.mxu0 0.0
    %1760 = vmatprep.subr.mxu0 0.0
    %1761 = vmatpush1.msra.mxu0 0.0
    %1762 = vmatprep.subr.mxu0 0.0
    %1763 = vmatpush1.msra.mxu0 0.0
    %1764 = vmatprep.subr.mxu0 0.0
    %1765 = vmatpush1.msra.mxu0 0.0
    %1766 = vmatprep.subr.mxu0 0.0
    %1767 = vmatpush1.msra.mxu0 0.0
    %1768 = vmatprep.subr.mxu0 0.0
    %1769 = vmatpush1.msra.mxu0 0.0
    %1770 = vmatprep.subr.mxu0 0.0
    %1771 = vmatpush1.msra.mxu0 0.0
    %1772 = vmatprep.subr.mxu0 0.0
    %1773 = vmatpush1.msra.mxu0 0.0
    %1774 = vmatprep.subr.mxu0 0.0
    %1775 = vmatpush1.msra.mxu0 0.0
    %1776 = vmatprep.subr.mxu0 0.0
    %1777 = vmatpush1.msra.mxu0 0.0
    %1778 = vmatprep.subr.mxu0 0.0
    %1779 = vmatpush1.msra.mxu0 0.0
    %1780 = vmatprep.subr.mxu0 0.0
    %1781 = vmatpush1.msra.mxu0 0.0
    %1782 = vmatprep.subr.mxu0 0.0
    %1783 = vmatpush1.msra.mxu0 0.0
    %1784 = vmatprep.mubr.f32.mxu0 0.0
    %1785 = vmatmul.mubr.f32.gmra.mrb[0].mxu0 %v1716
    %v1786 = vpop.f32.mrb[0].mxu0
    %v1787 = vadd.f32 0.0, %v1786
    %v1788 = vpop.f32.mrb[0].mxu0
    %1789 = vdwg.mxu0
    %v1790 = vadd.f32 %v1719, %v1787
    %v1791 = vtanh.pop %v1790
    %1792 = vmatprep.subr.mxu0 0.0
    %1793 = vmatpush1.msra.mxu0 %v242
    %1794 = vmatprep.subr.mxu0 0.0
    %1795 = vmatpush1.msra.mxu0 %v243
    %1796 = vmatprep.subr.mxu0 0.0
    %1797 = vmatpush1.msra.mxu0 %v244
    %1798 = vmatprep.subr.mxu0 0.0
    %1799 = vmatpush1.msra.mxu0 %v245
    %1800 = vmatprep.subr.mxu0 0.0
    %1801 = vmatpush1.msra.mxu0 %v246
    %1802 = vmatprep.subr.mxu0 0.0
    %1803 = vmatpush1.msra.mxu0 %v247
    %1804 = vmatprep.subr.mxu0 0.0
    %1805 = vmatpush1.msra.mxu0 %v248
    %1806 = vmatprep.subr.mxu0 0.0
    %1807 = vmatpush1.msra.mxu0 %v249
    %1808 = vmatprep.subr.mxu0 0.0
    %1809 = vmatpush1.msra.mxu0 %v250
    %1810 = vmatprep.subr.mxu0 0.0
    %1811 = vmatpush1.msra.mxu0 %v251
    %1812 = vmatprep.subr.mxu0 0.0
    %1813 = vmatpush1.msra.mxu0 %v252
    %1814 = vmatprep.subr.mxu0 0.0
    %1815 = vmatpush1.msra.mxu0 %v253
    %1816 = vmatprep.subr.mxu0 0.0
    %1817 = vmatpush1.msra.mxu0 %v254
    %1818 = vmatprep.subr.mxu0 0.0
    %1819 = vmatpush1.msra.mxu0 %v255
    %1820 = vmatprep.subr.mxu0 0.0
    %1821 = vmatpush1.msra.mxu0 %v256
    %1822 = vmatprep.subr.mxu0 0.0
    %1823 = vmatpush1.msra.mxu0 %v257
    %1824 = vmatprep.subr.mxu0 0.0
    %1825 = vmatpush1.msra.mxu0 0.0
    %1826 = vmatprep.subr.mxu0 0.0
    %1827 = vmatpush1.msra.mxu0 0.0
    %1828 = vmatprep.subr.mxu0 0.0
    %1829 = vmatpush1.msra.mxu0 0.0
    %1830 = vmatprep.subr.mxu0 0.0
    %1831 = vmatpush1.msra.mxu0 0.0
    %1832 = vmatprep.subr.mxu0 0.0
    %1833 = vmatpush1.msra.mxu0 0.0
    %1834 = vmatprep.subr.mxu0 0.0
    %1835 = vmatpush1.msra.mxu0 0.0
    %1836 = vmatprep.subr.mxu0 0.0
    %1837 = vmatpush1.msra.mxu0 0.0
    %1838 = vmatprep.subr.mxu0 0.0
    %1839 = vmatpush1.msra.mxu0 0.0
    %1840 = vmatprep.subr.mxu0 0.0
    %1841 = vmatpush1.msra.mxu0 0.0
    %1842 = vmatprep.subr.mxu0 0.0
    %1843 = vmatpush1.msra.mxu0 0.0
    %1844 = vmatprep.subr.mxu0 0.0
    %1845 = vmatpush1.msra.mxu0 0.0
    %1846 = vmatprep.subr.mxu0 0.0
    %1847 = vmatpush1.msra.mxu0 0.0
    %1848 = vmatprep.subr.mxu0 0.0
    %1849 = vmatpush1.msra.mxu0 0.0
    %1850 = vmatprep.subr.mxu0 0.0
    %1851 = vmatpush1.msra.mxu0 0.0
    %1852 = vmatprep.subr.mxu0 0.0
    %1853 = vmatpush1.msra.mxu0 0.0
    %1854 = vmatprep.subr.mxu0 0.0
    %1855 = vmatpush1.msra.mxu0 0.0
    %1856 = vmatprep.mubr.f32.mxu0 0.0
    %1857 = vmatmul.mubr.f32.gmra.mrb[0].mxu0 %v1791
    %v1858 = vpop.f32.mrb[0].mxu0
    %v1859 = vadd.f32 %v258, %v1858
    %v1860 = vpop.f32.mrb[0].mxu0
    %1861 = vdwg.mxu0
    %v1862 = vtanh.pop %v1859
    %1863 = vmatprep.subr.mxu0 0.0
    %1864 = vmatpush1.msra.mxu0 %v259
    %1865 = vmatprep.subr.mxu0 0.0
    %1866 = vmatpush1.msra.mxu0 %v260
    %1867 = vmatprep.subr.mxu0 0.0
    %1868 = vmatpush1.msra.mxu0 %v261
    %1869 = vmatprep.subr.mxu0 0.0
    %1870 = vmatpush1.msra.mxu0 %v262
    %1871 = vmatprep.subr.mxu0 0.0
    %1872 = vmatpush1.msra.mxu0 %v263
    %1873 = vmatprep.subr.mxu0 0.0
    %1874 = vmatpush1.msra.mxu0 %v264
    %1875 = vmatprep.subr.mxu0 0.0
    %1876 = vmatpush1.msra.mxu0 %v265
    %1877 = vmatprep.subr.mxu0 0.0
    %1878 = vmatpush1.msra.mxu0 %v266
    %1879 = vmatprep.subr.mxu0 0.0
    %1880 = vmatpush1.msra.mxu0 %v267
    %1881 = vmatprep.subr.mxu0 0.0
    %1882 = vmatpush1.msra.mxu0 %v268
    %1883 = vmatprep.subr.mxu0 0.0
    %1884 = vmatpush1.msra.mxu0 %v269
    %1885 = vmatprep.subr.mxu0 0.0
    %1886 = vmatpush1.msra.mxu0 %v270
    %1887 = vmatprep.subr.mxu0 0.0
    %1888 = vmatpush1.msra.mxu0 %v271
    %1889 = vmatprep.subr.mxu0 0.0
    %1890 = vmatpush1.msra.mxu0 %v272
    %1891 = vmatprep.subr.mxu0 0.0
    %1892 = vmatpush1.msra.mxu0 %v273
    %1893 = vmatprep.subr.mxu0 0.0
    %1894 = vmatpush1.msra.mxu0 %v274
    %1895 = vmatprep.subr.mxu0 0.0
    %1896 = vmatpush1.msra.mxu0 0.0
    %1897 = vmatprep.subr.mxu0 0.0
    %1898 = vmatpush1.msra.mxu0 0.0
    %1899 = vmatprep.subr.mxu0 0.0
    %1900 = vmatpush1.msra.mxu0 0.0
    %1901 = vmatprep.subr.mxu0 0.0
    %1902 = vmatpush1.msra.mxu0 0.0
    %1903 = vmatprep.subr.mxu0 0.0
    %1904 = vmatpush1.msra.mxu0 0.0
    %1905 = vmatprep.subr.mxu0 0.0
    %1906 = vmatpush1.msra.mxu0 0.0
    %1907 = vmatprep.subr.mxu0 0.0
    %1908 = vmatpush1.msra.mxu0 0.0
    %1909 = vmatprep.subr.mxu0 0.0
    %1910 = vmatpush1.msra.mxu0 0.0
    %1911 = vmatprep.subr.mxu0 0.0
    %1912 = vmatpush1.msra.mxu0 0.0
    %1913 = vmatprep.subr.mxu0 0.0
    %1914 = vmatpush1.msra.mxu0 0.0
    %1915 = vmatprep.subr.mxu0 0.0
    %1916 = vmatpush1.msra.mxu0 0.0
    %1917 = vmatprep.subr.mxu0 0.0
    %1918 = vmatpush1.msra.mxu0 0.0
    %1919 = vmatprep.subr.mxu0 0.0
    %1920 = vmatpush1.msra.mxu0 0.0
    %1921 = vmatprep.subr.mxu0 0.0
    %1922 = vmatpush1.msra.mxu0 0.0
    %1923 = vmatprep.subr.mxu0 0.0
    %1924 = vmatpush1.msra.mxu0 0.0
    %1925 = vmatprep.subr.mxu0 0.0
    %1926 = vmatpush1.msra.mxu0 0.0
    %1927 = vmatprep.mubr.f32.mxu0 0.0
    %1928 = vmatmul.mubr.f32.gmra.mrb[0].mxu0 %v1862
    %v1929 = vpop.f32.mrb[0].mxu0
    %v1930 = vadd.f32 %v275, %v1929
    %v1931 = vpop.f32.mrb[0].mxu0
    %1932 = vdwg.mxu0
    %1933 = vst [vmem:[#allocation14 + $0x5] sm:$0x1] %v1930
    %1934 = vmatprep.subr.mxu0 0.0
    %1935 = vmatpush1.msra.mxu0 %v276
    %1936 = vmatprep.subr.mxu0 0.0
    %1937 = vmatpush1.msra.mxu0 %v277
    %1938 = vmatprep.subr.mxu0 0.0
    %1939 = vmatpush1.msra.mxu0 %v278
    %1940 = vmatprep.subr.mxu0 0.0
    %1941 = vmatpush1.msra.mxu0 %v279
    %1942 = vmatprep.subr.mxu0 0.0
    %1943 = vmatpush1.msra.mxu0 %v280
    %1944 = vmatprep.subr.mxu0 0.0
    %1945 = vmatpush1.msra.mxu0 %v281
    %1946 = vmatprep.subr.mxu0 0.0
    %1947 = vmatpush1.msra.mxu0 %v282
    %1948 = vmatprep.subr.mxu0 0.0
    %1949 = vmatpush1.msra.mxu0 %v283
    %1950 = vmatprep.subr.mxu0 0.0
    %1951 = vmatpush1.msra.mxu0 %v284
    %1952 = vmatprep.subr.mxu0 0.0
    %1953 = vmatpush1.msra.mxu0 %v285
    %1954 = vmatprep.subr.mxu0 0.0
    %1955 = vmatpush1.msra.mxu0 %v286
    %1956 = vmatprep.subr.mxu0 0.0
    %1957 = vmatpush1.msra.mxu0 %v287
    %1958 = vmatprep.subr.mxu0 0.0
    %1959 = vmatpush1.msra.mxu0 %v288
    %1960 = vmatprep.subr.mxu0 0.0
    %1961 = vmatpush1.msra.mxu0 %v289
    %1962 = vmatprep.subr.mxu0 0.0
    %1963 = vmatpush1.msra.mxu0 %v290
    %1964 = vmatprep.subr.mxu0 0.0
    %1965 = vmatpush1.msra.mxu0 %v291
    %1966 = vmatprep.subr.mxu0 0.0
    %1967 = vmatpush1.msra.mxu0 0.0
    %1968 = vmatprep.subr.mxu0 0.0
    %1969 = vmatpush1.msra.mxu0 0.0
    %1970 = vmatprep.subr.mxu0 0.0
    %1971 = vmatpush1.msra.mxu0 0.0
    %1972 = vmatprep.subr.mxu0 0.0
    %1973 = vmatpush1.msra.mxu0 0.0
    %1974 = vmatprep.subr.mxu0 0.0
    %1975 = vmatpush1.msra.mxu0 0.0
    %1976 = vmatprep.subr.mxu0 0.0
    %1977 = vmatpush1.msra.mxu0 0.0
    %1978 = vmatprep.subr.mxu0 0.0
    %1979 = vmatpush1.msra.mxu0 0.0
    %1980 = vmatprep.subr.mxu0 0.0
    %1981 = vmatpush1.msra.mxu0 0.0
    %1982 = vmatprep.subr.mxu0 0.0
    %1983 = vmatpush1.msra.mxu0 0.0
    %1984 = vmatprep.subr.mxu0 0.0
    %1985 = vmatpush1.msra.mxu0 0.0
    %1986 = vmatprep.subr.mxu0 0.0
    %1987 = vmatpush1.msra.mxu0 0.0
    %1988 = vmatprep.subr.mxu0 0.0
    %1989 = vmatpush1.msra.mxu0 0.0
    %1990 = vmatprep.subr.mxu0 0.0
    %1991 = vmatpush1.msra.mxu0 0.0
    %1992 = vmatprep.subr.mxu0 0.0
    %1993 = vmatpush1.msra.mxu0 0.0
    %1994 = vmatprep.subr.mxu0 0.0
    %1995 = vmatpush1.msra.mxu0 0.0
    %1996 = vmatprep.subr.mxu0 0.0
    %1997 = vmatpush1.msra.mxu0 0.0
    %1998 = vmatprep.mubr.f32.mxu0 0.0
    %1999 = vmatmul.mubr.f32.gmra.mrb[0].mxu0 %v1862
    %v2000 = vpop.f32.mrb[0].mxu0
    %v2001 = vadd.f32 %v292, %v2000
    %v2002 = vpop.f32.mrb[0].mxu0
    %2003 = vdwg.mxu0
    %v2004 = vld [vmem:[#allocation2 + $0x6] sm:$0x1]
    %2005 = vmatprep.subr.mxu0 0.0
    %2006 = vmatpush1.msra.mxu0 %v226
    %2007 = vmatprep.subr.mxu0 0.0
    %2008 = vmatpush1.msra.mxu0 %v227
    %2009 = vmatprep.subr.mxu0 0.0
    %2010 = vmatpush1.msra.mxu0 %v228
    %2011 = vmatprep.subr.mxu0 0.0
    %2012 = vmatpush1.msra.mxu0 %v229
    %2013 = vmatprep.subr.mxu0 0.0
    %2014 = vmatpush1.msra.mxu0 %v230
    %2015 = vmatprep.subr.mxu0 0.0
    %2016 = vmatpush1.msra.mxu0 %v231
    %2017 = vmatprep.subr.mxu0 0.0
    %2018 = vmatpush1.msra.mxu0 %v232
    %2019 = vmatprep.subr.mxu0 0.0
    %2020 = vmatpush1.msra.mxu0 %v233
    %2021 = vmatprep.subr.mxu0 0.0
    %2022 = vmatpush1.msra.mxu0 %v234
    %2023 = vmatprep.subr.mxu0 0.0
    %2024 = vmatpush1.msra.mxu0 %v235
    %2025 = vmatprep.subr.mxu0 0.0
    %2026 = vmatpush1.msra.mxu0 %v236
    %2027 = vmatprep.subr.mxu0 0.0
    %2028 = vmatpush1.msra.mxu0 %v237
    %2029 = vmatprep.subr.mxu0 0.0
    %2030 = vmatpush1.msra.mxu0 %v238
    %2031 = vmatprep.subr.mxu0 0.0
    %2032 = vmatpush1.msra.mxu0 %v239
    %2033 = vmatprep.subr.mxu0 0.0
    %2034 = vmatpush1.msra.mxu0 %v240
    %2035 = vmatprep.subr.mxu0 0.0
    %2036 = vmatpush1.msra.mxu0 %v241
    %2037 = vmatprep.subr.mxu0 0.0
    %2038 = vmatpush1.msra.mxu0 0.0
    %2039 = vmatprep.subr.mxu0 0.0
    %2040 = vmatpush1.msra.mxu0 0.0
    %2041 = vmatprep.subr.mxu0 0.0
    %2042 = vmatpush1.msra.mxu0 0.0
    %2043 = vmatprep.subr.mxu0 0.0
    %2044 = vmatpush1.msra.mxu0 0.0
    %2045 = vmatprep.subr.mxu0 0.0
    %2046 = vmatpush1.msra.mxu0 0.0
    %2047 = vmatprep.subr.mxu0 0.0
    %2048 = vmatpush1.msra.mxu0 0.0
    %2049 = vmatprep.subr.mxu0 0.0
    %2050 = vmatpush1.msra.mxu0 0.0
    %2051 = vmatprep.subr.mxu0 0.0
    %2052 = vmatpush1.msra.mxu0 0.0
    %2053 = vmatprep.subr.mxu0 0.0
    %2054 = vmatpush1.msra.mxu0 0.0
    %2055 = vmatprep.subr.mxu0 0.0
    %2056 = vmatpush1.msra.mxu0 0.0
    %2057 = vmatprep.subr.mxu0 0.0
    %2058 = vmatpush1.msra.mxu0 0.0
    %2059 = vmatprep.subr.mxu0 0.0
    %2060 = vmatpush1.msra.mxu0 0.0
    %2061 = vmatprep.subr.mxu0 0.0
    %2062 = vmatpush1.msra.mxu0 0.0
    %2063 = vmatprep.subr.mxu0 0.0
    %2064 = vmatpush1.msra.mxu0 0.0
    %2065 = vmatprep.subr.mxu0 0.0
    %2066 = vmatpush1.msra.mxu0 0.0
    %2067 = vmatprep.subr.mxu0 0.0
    %2068 = vmatpush1.msra.mxu0 0.0
    %2069 = vmatprep.mubr.f32.mxu0 0.0
    %2070 = vmatmul.mubr.f32.gmra.mrb[0].mxu0 %v2001
    %v2071 = vpop.f32.mrb[0].mxu0
    %v2072 = vadd.f32 0.0, %v2071
    %v2073 = vpop.f32.mrb[0].mxu0
    %2074 = vdwg.mxu0
    %v2075 = vadd.f32 %v2004, %v2072
    %v2076 = vtanh.pop %v2075
    %2077 = vmatprep.subr.mxu0 0.0
    %2078 = vmatpush1.msra.mxu0 %v242
    %2079 = vmatprep.subr.mxu0 0.0
    %2080 = vmatpush1.msra.mxu0 %v243
    %2081 = vmatprep.subr.mxu0 0.0
    %2082 = vmatpush1.msra.mxu0 %v244
    %2083 = vmatprep.subr.mxu0 0.0
    %2084 = vmatpush1.msra.mxu0 %v245
    %2085 = vmatprep.subr.mxu0 0.0
    %2086 = vmatpush1.msra.mxu0 %v246
    %2087 = vmatprep.subr.mxu0 0.0
    %2088 = vmatpush1.msra.mxu0 %v247
    %2089 = vmatprep.subr.mxu0 0.0
    %2090 = vmatpush1.msra.mxu0 %v248
    %2091 = vmatprep.subr.mxu0 0.0
    %2092 = vmatpush1.msra.mxu0 %v249
    %2093 = vmatprep.subr.mxu0 0.0
    %2094 = vmatpush1.msra.mxu0 %v250
    %2095 = vmatprep.subr.mxu0 0.0
    %2096 = vmatpush1.msra.mxu0 %v251
    %2097 = vmatprep.subr.mxu0 0.0
    %2098 = vmatpush1.msra.mxu0 %v252
    %2099 = vmatprep.subr.mxu0 0.0
    %2100 = vmatpush1.msra.mxu0 %v253
    %2101 = vmatprep.subr.mxu0 0.0
    %2102 = vmatpush1.msra.mxu0 %v254
    %2103 = vmatprep.subr.mxu0 0.0
    %2104 = vmatpush1.msra.mxu0 %v255
    %2105 = vmatprep.subr.mxu0 0.0
    %2106 = vmatpush1.msra.mxu0 %v256
    %2107 = vmatprep.subr.mxu0 0.0
    %2108 = vmatpush1.msra.mxu0 %v257
    %2109 = vmatprep.subr.mxu0 0.0
    %2110 = vmatpush1.msra.mxu0 0.0
    %2111 = vmatprep.subr.mxu0 0.0
    %2112 = vmatpush1.msra.mxu0 0.0
    %2113 = vmatprep.subr.mxu0 0.0
    %2114 = vmatpush1.msra.mxu0 0.0
    %2115 = vmatprep.subr.mxu0 0.0
    %2116 = vmatpush1.msra.mxu0 0.0
    %2117 = vmatprep.subr.mxu0 0.0
    %2118 = vmatpush1.msra.mxu0 0.0
    %2119 = vmatprep.subr.mxu0 0.0
    %2120 = vmatpush1.msra.mxu0 0.0
    %2121 = vmatprep.subr.mxu0 0.0
    %2122 = vmatpush1.msra.mxu0 0.0
    %2123 = vmatprep.subr.mxu0 0.0
    %2124 = vmatpush1.msra.mxu0 0.0
    %2125 = vmatprep.subr.mxu0 0.0
    %2126 = vmatpush1.msra.mxu0 0.0
    %2127 = vmatprep.subr.mxu0 0.0
    %2128 = vmatpush1.msra.mxu0 0.0
    %2129 = vmatprep.subr.mxu0 0.0
    %2130 = vmatpush1.msra.mxu0 0.0
    %2131 = vmatprep.subr.mxu0 0.0
    %2132 = vmatpush1.msra.mxu0 0.0
    %2133 = vmatprep.subr.mxu0 0.0
    %2134 = vmatpush1.msra.mxu0 0.0
    %2135 = vmatprep.subr.mxu0 0.0
    %2136 = vmatpush1.msra.mxu0 0.0
    %2137 = vmatprep.subr.mxu0 0.0
    %2138 = vmatpush1.msra.mxu0 0.0
    %2139 = vmatprep.subr.mxu0 0.0
    %2140 = vmatpush1.msra.mxu0 0.0
    %2141 = vmatprep.mubr.f32.mxu0 0.0
    %2142 = vmatmul.mubr.f32.gmra.mrb[0].mxu0 %v2076
    %v2143 = vpop.f32.mrb[0].mxu0
    %v2144 = vadd.f32 %v258, %v2143
    %v2145 = vpop.f32.mrb[0].mxu0
    %2146 = vdwg.mxu0
    %v2147 = vtanh.pop %v2144
    %2148 = vmatprep.subr.mxu0 0.0
    %2149 = vmatpush1.msra.mxu0 %v259
    %2150 = vmatprep.subr.mxu0 0.0
    %2151 = vmatpush1.msra.mxu0 %v260
    %2152 = vmatprep.subr.mxu0 0.0
    %2153 = vmatpush1.msra.mxu0 %v261
    %2154 = vmatprep.subr.mxu0 0.0
    %2155 = vmatpush1.msra.mxu0 %v262
    %2156 = vmatprep.subr.mxu0 0.0
    %2157 = vmatpush1.msra.mxu0 %v263
    %2158 = vmatprep.subr.mxu0 0.0
    %2159 = vmatpush1.msra.mxu0 %v264
    %2160 = vmatprep.subr.mxu0 0.0
    %2161 = vmatpush1.msra.mxu0 %v265
    %2162 = vmatprep.subr.mxu0 0.0
    %2163 = vmatpush1.msra.mxu0 %v266
    %2164 = vmatprep.subr.mxu0 0.0
    %2165 = vmatpush1.msra.mxu0 %v267
    %2166 = vmatprep.subr.mxu0 0.0
    %2167 = vmatpush1.msra.mxu0 %v268
    %2168 = vmatprep.subr.mxu0 0.0
    %2169 = vmatpush1.msra.mxu0 %v269
    %2170 = vmatprep.subr.mxu0 0.0
    %2171 = vmatpush1.msra.mxu0 %v270
    %2172 = vmatprep.subr.mxu0 0.0
    %2173 = vmatpush1.msra.mxu0 %v271
    %2174 = vmatprep.subr.mxu0 0.0
    %2175 = vmatpush1.msra.mxu0 %v272
    %2176 = vmatprep.subr.mxu0 0.0
    %2177 = vmatpush1.msra.mxu0 %v273
    %2178 = vmatprep.subr.mxu0 0.0
    %2179 = vmatpush1.msra.mxu0 %v274
    %2180 = vmatprep.subr.mxu0 0.0
    %2181 = vmatpush1.msra.mxu0 0.0
    %2182 = vmatprep.subr.mxu0 0.0
    %2183 = vmatpush1.msra.mxu0 0.0
    %2184 = vmatprep.subr.mxu0 0.0
    %2185 = vmatpush1.msra.mxu0 0.0
    %2186 = vmatprep.subr.mxu0 0.0
    %2187 = vmatpush1.msra.mxu0 0.0
    %2188 = vmatprep.subr.mxu0 0.0
    %2189 = vmatpush1.msra.mxu0 0.0
    %2190 = vmatprep.subr.mxu0 0.0
    %2191 = vmatpush1.msra.mxu0 0.0
    %2192 = vmatprep.subr.mxu0 0.0
    %2193 = vmatpush1.msra.mxu0 0.0
    %2194 = vmatprep.subr.mxu0 0.0
    %2195 = vmatpush1.msra.mxu0 0.0
    %2196 = vmatprep.subr.mxu0 0.0
    %2197 = vmatpush1.msra.mxu0 0.0
    %2198 = vmatprep.subr.mxu0 0.0
    %2199 = vmatpush1.msra.mxu0 0.0
    %2200 = vmatprep.subr.mxu0 0.0
    %2201 = vmatpush1.msra.mxu0 0.0
    %2202 = vmatprep.subr.mxu0 0.0
    %2203 = vmatpush1.msra.mxu0 0.0
    %2204 = vmatprep.subr.mxu0 0.0
    %2205 = vmatpush1.msra.mxu0 0.0
    %2206 = vmatprep.subr.mxu0 0.0
    %2207 = vmatpush1.msra.mxu0 0.0
    %2208 = vmatprep.subr.mxu0 0.0
    %2209 = vmatpush1.msra.mxu0 0.0
    %2210 = vmatprep.subr.mxu0 0.0
    %2211 = vmatpush1.msra.mxu0 0.0
    %2212 = vmatprep.mubr.f32.mxu0 0.0
    %2213 = vmatmul.mubr.f32.gmra.mrb[0].mxu0 %v2147
    %v2214 = vpop.f32.mrb[0].mxu0
    %v2215 = vadd.f32 %v275, %v2214
    %v2216 = vpop.f32.mrb[0].mxu0
    %2217 = vdwg.mxu0
    %2218 = vst [vmem:[#allocation14 + $0x6] sm:$0x1] %v2215
    %2219 = vmatprep.subr.mxu0 0.0
    %2220 = vmatpush1.msra.mxu0 %v276
    %2221 = vmatprep.subr.mxu0 0.0
    %2222 = vmatpush1.msra.mxu0 %v277
    %2223 = vmatprep.subr.mxu0 0.0
    %2224 = vmatpush1.msra.mxu0 %v278
    %2225 = vmatprep.subr.mxu0 0.0
    %2226 = vmatpush1.msra.mxu0 %v279
    %2227 = vmatprep.subr.mxu0 0.0
    %2228 = vmatpush1.msra.mxu0 %v280
    %2229 = vmatprep.subr.mxu0 0.0
    %2230 = vmatpush1.msra.mxu0 %v281
    %2231 = vmatprep.subr.mxu0 0.0
    %2232 = vmatpush1.msra.mxu0 %v282
    %2233 = vmatprep.subr.mxu0 0.0
    %2234 = vmatpush1.msra.mxu0 %v283
    %2235 = vmatprep.subr.mxu0 0.0
    %2236 = vmatpush1.msra.mxu0 %v284
    %2237 = vmatprep.subr.mxu0 0.0
    %2238 = vmatpush1.msra.mxu0 %v285
    %2239 = vmatprep.subr.mxu0 0.0
    %2240 = vmatpush1.msra.mxu0 %v286
    %2241 = vmatprep.subr.mxu0 0.0
    %2242 = vmatpush1.msra.mxu0 %v287
    %2243 = vmatprep.subr.mxu0 0.0
    %2244 = vmatpush1.msra.mxu0 %v288
    %2245 = vmatprep.subr.mxu0 0.0
    %2246 = vmatpush1.msra.mxu0 %v289
    %2247 = vmatprep.subr.mxu0 0.0
    %2248 = vmatpush1.msra.mxu0 %v290
    %2249 = vmatprep.subr.mxu0 0.0
    %2250 = vmatpush1.msra.mxu0 %v291
    %2251 = vmatprep.subr.mxu0 0.0
    %2252 = vmatpush1.msra.mxu0 0.0
    %2253 = vmatprep.subr.mxu0 0.0
    %2254 = vmatpush1.msra.mxu0 0.0
    %2255 = vmatprep.subr.mxu0 0.0
    %2256 = vmatpush1.msra.mxu0 0.0
    %2257 = vmatprep.subr.mxu0 0.0
    %2258 = vmatpush1.msra.mxu0 0.0
    %2259 = vmatprep.subr.mxu0 0.0
    %2260 = vmatpush1.msra.mxu0 0.0
    %2261 = vmatprep.subr.mxu0 0.0
    %2262 = vmatpush1.msra.mxu0 0.0
    %2263 = vmatprep.subr.mxu0 0.0
    %2264 = vmatpush1.msra.mxu0 0.0
    %2265 = vmatprep.subr.mxu0 0.0
    %2266 = vmatpush1.msra.mxu0 0.0
    %2267 = vmatprep.subr.mxu0 0.0
    %2268 = vmatpush1.msra.mxu0 0.0
    %2269 = vmatprep.subr.mxu0 0.0
    %2270 = vmatpush1.msra.mxu0 0.0
    %2271 = vmatprep.subr.mxu0 0.0
    %2272 = vmatpush1.msra.mxu0 0.0
    %2273 = vmatprep.subr.mxu0 0.0
    %2274 = vmatpush1.msra.mxu0 0.0
    %2275 = vmatprep.subr.mxu0 0.0
    %2276 = vmatpush1.msra.mxu0 0.0
    %2277 = vmatprep.subr.mxu0 0.0
    %2278 = vmatpush1.msra.mxu0 0.0
    %2279 = vmatprep.subr.mxu0 0.0
    %2280 = vmatpush1.msra.mxu0 0.0
    %2281 = vmatprep.subr.mxu0 0.0
    %2282 = vmatpush1.msra.mxu0 0.0
    %2283 = vmatprep.mubr.f32.mxu0 0.0
    %2284 = vmatmul.mubr.f32.gmra.mrb[0].mxu0 %v2147
    %v2285 = vpop.f32.mrb[0].mxu0
    %v2286 = vadd.f32 %v292, %v2285
    %v2287 = vpop.f32.mrb[0].mxu0
    %2288 = vdwg.mxu0
    %v2289 = vld [vmem:[#allocation2 + $0x7] sm:$0x1]
    %2290 = vmatprep.subr.mxu0 0.0
    %2291 = vmatpush1.msra.mxu0 %v226
    %2292 = vmatprep.subr.mxu0 0.0
    %2293 = vmatpush1.msra.mxu0 %v227
    %2294 = vmatprep.subr.mxu0 0.0
    %2295 = vmatpush1.msra.mxu0 %v228
    %2296 = vmatprep.subr.mxu0 0.0
    %2297 = vmatpush1.msra.mxu0 %v229
    %2298 = vmatprep.subr.mxu0 0.0
    %2299 = vmatpush1.msra.mxu0 %v230
    %2300 = vmatprep.subr.mxu0 0.0
    %2301 = vmatpush1.msra.mxu0 %v231
    %2302 = vmatprep.subr.mxu0 0.0
    %2303 = vmatpush1.msra.mxu0 %v232
    %2304 = vmatprep.subr.mxu0 0.0
    %2305 = vmatpush1.msra.mxu0 %v233
    %2306 = vmatprep.subr.mxu0 0.0
    %2307 = vmatpush1.msra.mxu0 %v234
    %2308 = vmatprep.subr.mxu0 0.0
    %2309 = vmatpush1.msra.mxu0 %v235
    %2310 = vmatprep.subr.mxu0 0.0
    %2311 = vmatpush1.msra.mxu0 %v236
    %2312 = vmatprep.subr.mxu0 0.0
    %2313 = vmatpush1.msra.mxu0 %v237
    %2314 = vmatprep.subr.mxu0 0.0
    %2315 = vmatpush1.msra.mxu0 %v238
    %2316 = vmatprep.subr.mxu0 0.0
    %2317 = vmatpush1.msra.mxu0 %v239
    %2318 = vmatprep.subr.mxu0 0.0
    %2319 = vmatpush1.msra.mxu0 %v240
    %2320 = vmatprep.subr.mxu0 0.0
    %2321 = vmatpush1.msra.mxu0 %v241
    %2322 = vmatprep.subr.mxu0 0.0
    %2323 = vmatpush1.msra.mxu0 0.0
    %2324 = vmatprep.subr.mxu0 0.0
    %2325 = vmatpush1.msra.mxu0 0.0
    %2326 = vmatprep.subr.mxu0 0.0
    %2327 = vmatpush1.msra.mxu0 0.0
    %2328 = vmatprep.subr.mxu0 0.0
    %2329 = vmatpush1.msra.mxu0 0.0
    %2330 = vmatprep.subr.mxu0 0.0
    %2331 = vmatpush1.msra.mxu0 0.0
    %2332 = vmatprep.subr.mxu0 0.0
    %2333 = vmatpush1.msra.mxu0 0.0
    %2334 = vmatprep.subr.mxu0 0.0
    %2335 = vmatpush1.msra.mxu0 0.0
    %2336 = vmatprep.subr.mxu0 0.0
    %2337 = vmatpush1.msra.mxu0 0.0
    %2338 = vmatprep.subr.mxu0 0.0
    %2339 = vmatpush1.msra.mxu0 0.0
    %2340 = vmatprep.subr.mxu0 0.0
    %2341 = vmatpush1.msra.mxu0 0.0
    %2342 = vmatprep.subr.mxu0 0.0
    %2343 = vmatpush1.msra.mxu0 0.0
    %2344 = vmatprep.subr.mxu0 0.0
    %2345 = vmatpush1.msra.mxu0 0.0
    %2346 = vmatprep.subr.mxu0 0.0
    %2347 = vmatpush1.msra.mxu0 0.0
    %2348 = vmatprep.subr.mxu0 0.0
    %2349 = vmatpush1.msra.mxu0 0.0
    %2350 = vmatprep.subr.mxu0 0.0
    %2351 = vmatpush1.msra.mxu0 0.0
    %2352 = vmatprep.subr.mxu0 0.0
    %2353 = vmatpush1.msra.mxu0 0.0
    %2354 = vmatprep.mubr.f32.mxu0 0.0
    %2355 = vmatmul.mubr.f32.gmra.mrb[0].mxu0 %v2286
    %v2356 = vpop.f32.mrb[0].mxu0
    %v2357 = vadd.f32 0.0, %v2356
    %v2358 = vpop.f32.mrb[0].mxu0
    %2359 = vdwg.mxu0
    %v2360 = vadd.f32 %v2289, %v2357
    %v2361 = vtanh.pop %v2360
    %2362 = vmatprep.subr.mxu0 0.0
    %2363 = vmatpush1.msra.mxu0 %v242
    %2364 = vmatprep.subr.mxu0 0.0
    %2365 = vmatpush1.msra.mxu0 %v243
    %2366 = vmatprep.subr.mxu0 0.0
    %2367 = vmatpush1.msra.mxu0 %v244
    %2368 = vmatprep.subr.mxu0 0.0
    %2369 = vmatpush1.msra.mxu0 %v245
    %2370 = vmatprep.subr.mxu0 0.0
    %2371 = vmatpush1.msra.mxu0 %v246
    %2372 = vmatprep.subr.mxu0 0.0
    %2373 = vmatpush1.msra.mxu0 %v247
    %2374 = vmatprep.subr.mxu0 0.0
    %2375 = vmatpush1.msra.mxu0 %v248
    %2376 = vmatprep.subr.mxu0 0.0
    %2377 = vmatpush1.msra.mxu0 %v249
    %2378 = vmatprep.subr.mxu0 0.0
    %2379 = vmatpush1.msra.mxu0 %v250
    %2380 = vmatprep.subr.mxu0 0.0
    %2381 = vmatpush1.msra.mxu0 %v251
    %2382 = vmatprep.subr.mxu0 0.0
    %2383 = vmatpush1.msra.mxu0 %v252
    %2384 = vmatprep.subr.mxu0 0.0
    %2385 = vmatpush1.msra.mxu0 %v253
    %2386 = vmatprep.subr.mxu0 0.0
    %2387 = vmatpush1.msra.mxu0 %v254
    %2388 = vmatprep.subr.mxu0 0.0
    %2389 = vmatpush1.msra.mxu0 %v255
    %2390 = vmatprep.subr.mxu0 0.0
    %2391 = vmatpush1.msra.mxu0 %v256
    %2392 = vmatprep.subr.mxu0 0.0
    %2393 = vmatpush1.msra.mxu0 %v257
    %2394 = vmatprep.subr.mxu0 0.0
    %2395 = vmatpush1.msra.mxu0 0.0
    %2396 = vmatprep.subr.mxu0 0.0
    %2397 = vmatpush1.msra.mxu0 0.0
    %2398 = vmatprep.subr.mxu0 0.0
    %2399 = vmatpush1.msra.mxu0 0.0
    %2400 = vmatprep.subr.mxu0 0.0
    %2401 = vmatpush1.msra.mxu0 0.0
    %2402 = vmatprep.subr.mxu0 0.0
    %2403 = vmatpush1.msra.mxu0 0.0
    %2404 = vmatprep.subr.mxu0 0.0
    %2405 = vmatpush1.msra.mxu0 0.0
    %2406 = vmatprep.subr.mxu0 0.0
    %2407 = vmatpush1.msra.mxu0 0.0
    %2408 = vmatprep.subr.mxu0 0.0
    %2409 = vmatpush1.msra.mxu0 0.0
    %2410 = vmatprep.subr.mxu0 0.0
    %2411 = vmatpush1.msra.mxu0 0.0
    %2412 = vmatprep.subr.mxu0 0.0
    %2413 = vmatpush1.msra.mxu0 0.0
    %2414 = vmatprep.subr.mxu0 0.0
    %2415 = vmatpush1.msra.mxu0 0.0
    %2416 = vmatprep.subr.mxu0 0.0
    %2417 = vmatpush1.msra.mxu0 0.0
    %2418 = vmatprep.subr.mxu0 0.0
    %2419 = vmatpush1.msra.mxu0 0.0
    %2420 = vmatprep.subr.mxu0 0.0
    %2421 = vmatpush1.msra.mxu0 0.0
    %2422 = vmatprep.subr.mxu0 0.0
    %2423 = vmatpush1.msra.mxu0 0.0
    %2424 = vmatprep.subr.mxu0 0.0
    %2425 = vmatpush1.msra.mxu0 0.0
    %2426 = vmatprep.mubr.f32.mxu0 0.0
    %2427 = vmatmul.mubr.f32.gmra.mrb[0].mxu0 %v2361
    %v2428 = vpop.f32.mrb[0].mxu0
    %v2429 = vadd.f32 %v258, %v2428
    %v2430 = vpop.f32.mrb[0].mxu0
    %2431 = vdwg.mxu0
    %v2432 = vtanh.pop %v2429
    %2433 = vmatprep.subr.mxu0 0.0
    %2434 = vmatpush1.msra.mxu0 %v259
    %2435 = vmatprep.subr.mxu0 0.0
    %2436 = vmatpush1.msra.mxu0 %v260
    %2437 = vmatprep.subr.mxu0 0.0
    %2438 = vmatpush1.msra.mxu0 %v261
    %2439 = vmatprep.subr.mxu0 0.0
    %2440 = vmatpush1.msra.mxu0 %v262
    %2441 = vmatprep.subr.mxu0 0.0
    %2442 = vmatpush1.msra.mxu0 %v263
    %2443 = vmatprep.subr.mxu0 0.0
    %2444 = vmatpush1.msra.mxu0 %v264
    %2445 = vmatprep.subr.mxu0 0.0
    %2446 = vmatpush1.msra.mxu0 %v265
    %2447 = vmatprep.subr.mxu0 0.0
    %2448 = vmatpush1.msra.mxu0 %v266
    %2449 = vmatprep.subr.mxu0 0.0
    %2450 = vmatpush1.msra.mxu0 %v267
    %2451 = vmatprep.subr.mxu0 0.0
    %2452 = vmatpush1.msra.mxu0 %v268
    %2453 = vmatprep.subr.mxu0 0.0
    %2454 = vmatpush1.msra.mxu0 %v269
    %2455 = vmatprep.subr.mxu0 0.0
    %2456 = vmatpush1.msra.mxu0 %v270
    %2457 = vmatprep.subr.mxu0 0.0
    %2458 = vmatpush1.msra.mxu0 %v271
    %2459 = vmatprep.subr.mxu0 0.0
    %2460 = vmatpush1.msra.mxu0 %v272
    %2461 = vmatprep.subr.mxu0 0.0
    %2462 = vmatpush1.msra.mxu0 %v273
    %2463 = vmatprep.subr.mxu0 0.0
    %2464 = vmatpush1.msra.mxu0 %v274
    %2465 = vmatprep.subr.mxu0 0.0
    %2466 = vmatpush1.msra.mxu0 0.0
    %2467 = vmatprep.subr.mxu0 0.0
    %2468 = vmatpush1.msra.mxu0 0.0
    %2469 = vmatprep.subr.mxu0 0.0
    %2470 = vmatpush1.msra.mxu0 0.0
    %2471 = vmatprep.subr.mxu0 0.0
    %2472 = vmatpush1.msra.mxu0 0.0
    %2473 = vmatprep.subr.mxu0 0.0
    %2474 = vmatpush1.msra.mxu0 0.0
    %2475 = vmatprep.subr.mxu0 0.0
    %2476 = vmatpush1.msra.mxu0 0.0
    %2477 = vmatprep.subr.mxu0 0.0
    %2478 = vmatpush1.msra.mxu0 0.0
    %2479 = vmatprep.subr.mxu0 0.0
    %2480 = vmatpush1.msra.mxu0 0.0
    %2481 = vmatprep.subr.mxu0 0.0
    %2482 = vmatpush1.msra.mxu0 0.0
    %2483 = vmatprep.subr.mxu0 0.0
    %2484 = vmatpush1.msra.mxu0 0.0
    %2485 = vmatprep.subr.mxu0 0.0
    %2486 = vmatpush1.msra.mxu0 0.0
    %2487 = vmatprep.subr.mxu0 0.0
    %2488 = vmatpush1.msra.mxu0 0.0
    %2489 = vmatprep.subr.mxu0 0.0
    %2490 = vmatpush1.msra.mxu0 0.0
    %2491 = vmatprep.subr.mxu0 0.0
    %2492 = vmatpush1.msra.mxu0 0.0
    %2493 = vmatprep.subr.mxu0 0.0
    %2494 = vmatpush1.msra.mxu0 0.0
    %2495 = vmatprep.subr.mxu0 0.0
    %2496 = vmatpush1.msra.mxu0 0.0
    %2497 = vmatprep.mubr.f32.mxu0 0.0
    %2498 = vmatmul.mubr.f32.gmra.mrb[0].mxu0 %v2432
    %v2499 = vpop.f32.mrb[0].mxu0
    %v2500 = vadd.f32 %v275, %v2499
    %v2501 = vpop.f32.mrb[0].mxu0
    %2502 = vdwg.mxu0
    %2503 = vst [vmem:[#allocation14 + $0x7] sm:$0x1] %v2500
    %2504 = vmatprep.subr.mxu0 0.0
    %2505 = vmatpush1.msra.mxu0 %v276
    %2506 = vmatprep.subr.mxu0 0.0
    %2507 = vmatpush1.msra.mxu0 %v277
    %2508 = vmatprep.subr.mxu0 0.0
    %2509 = vmatpush1.msra.mxu0 %v278
    %2510 = vmatprep.subr.mxu0 0.0
    %2511 = vmatpush1.msra.mxu0 %v279
    %2512 = vmatprep.subr.mxu0 0.0
    %2513 = vmatpush1.msra.mxu0 %v280
    %2514 = vmatprep.subr.mxu0 0.0
    %2515 = vmatpush1.msra.mxu0 %v281
    %2516 = vmatprep.subr.mxu0 0.0
    %2517 = vmatpush1.msra.mxu0 %v282
    %2518 = vmatprep.subr.mxu0 0.0
    %2519 = vmatpush1.msra.mxu0 %v283
    %2520 = vmatprep.subr.mxu0 0.0
    %2521 = vmatpush1.msra.mxu0 %v284
    %2522 = vmatprep.subr.mxu0 0.0
    %2523 = vmatpush1.msra.mxu0 %v285
    %2524 = vmatprep.subr.mxu0 0.0
    %2525 = vmatpush1.msra.mxu0 %v286
    %2526 = vmatprep.subr.mxu0 0.0
    %2527 = vmatpush1.msra.mxu0 %v287
    %2528 = vmatprep.subr.mxu0 0.0
    %2529 = vmatpush1.msra.mxu0 %v288
    %2530 = vmatprep.subr.mxu0 0.0
    %2531 = vmatpush1.msra.mxu0 %v289
    %2532 = vmatprep.subr.mxu0 0.0
    %2533 = vmatpush1.msra.mxu0 %v290
    %2534 = vmatprep.subr.mxu0 0.0
    %2535 = vmatpush1.msra.mxu0 %v291
    %2536 = vmatprep.subr.mxu0 0.0
    %2537 = vmatpush1.msra.mxu0 0.0
    %2538 = vmatprep.subr.mxu0 0.0
    %2539 = vmatpush1.msra.mxu0 0.0
    %2540 = vmatprep.subr.mxu0 0.0
    %2541 = vmatpush1.msra.mxu0 0.0
    %2542 = vmatprep.subr.mxu0 0.0
    %2543 = vmatpush1.msra.mxu0 0.0
    %2544 = vmatprep.subr.mxu0 0.0
    %2545 = vmatpush1.msra.mxu0 0.0
    %2546 = vmatprep.subr.mxu0 0.0
    %2547 = vmatpush1.msra.mxu0 0.0
    %2548 = vmatprep.subr.mxu0 0.0
    %2549 = vmatpush1.msra.mxu0 0.0
    %2550 = vmatprep.subr.mxu0 0.0
    %2551 = vmatpush1.msra.mxu0 0.0
    %2552 = vmatprep.subr.mxu0 0.0
    %2553 = vmatpush1.msra.mxu0 0.0
    %2554 = vmatprep.subr.mxu0 0.0
    %2555 = vmatpush1.msra.mxu0 0.0
    %2556 = vmatprep.subr.mxu0 0.0
    %2557 = vmatpush1.msra.mxu0 0.0
    %2558 = vmatprep.subr.mxu0 0.0
    %2559 = vmatpush1.msra.mxu0 0.0
    %2560 = vmatprep.subr.mxu0 0.0
    %2561 = vmatpush1.msra.mxu0 0.0
    %2562 = vmatprep.subr.mxu0 0.0
    %2563 = vmatpush1.msra.mxu0 0.0
    %2564 = vmatprep.subr.mxu0 0.0
    %2565 = vmatpush1.msra.mxu0 0.0
    %2566 = vmatprep.subr.mxu0 0.0
    %2567 = vmatpush1.msra.mxu0 0.0
    %2568 = vmatprep.mubr.f32.mxu0 0.0
    %2569 = vmatmul.mubr.f32.gmra.mrb[0].mxu0 %v2432
    %v2570 = vpop.f32.mrb[0].mxu0
    %v2571 = vadd.f32 %v292, %v2570
    %v2572 = vpop.f32.mrb[0].mxu0
    %2573 = vdwg.mxu0
    %v2574 = vld [vmem:[#allocation2 + $0x8] sm:$0x1]
    %2575 = vmatprep.subr.mxu0 0.0
    %2576 = vmatpush1.msra.mxu0 %v226
    %2577 = vmatprep.subr.mxu0 0.0
    %2578 = vmatpush1.msra.mxu0 %v227
    %2579 = vmatprep.subr.mxu0 0.0
    %2580 = vmatpush1.msra.mxu0 %v228
    %2581 = vmatprep.subr.mxu0 0.0
    %2582 = vmatpush1.msra.mxu0 %v229
    %2583 = vmatprep.subr.mxu0 0.0
    %2584 = vmatpush1.msra.mxu0 %v230
    %2585 = vmatprep.subr.mxu0 0.0
    %2586 = vmatpush1.msra.mxu0 %v231
    %2587 = vmatprep.subr.mxu0 0.0
    %2588 = vmatpush1.msra.mxu0 %v232
    %2589 = vmatprep.subr.mxu0 0.0
    %2590 = vmatpush1.msra.mxu0 %v233
    %2591 = vmatprep.subr.mxu0 0.0
    %2592 = vmatpush1.msra.mxu0 %v234
    %2593 = vmatprep.subr.mxu0 0.0
    %2594 = vmatpush1.msra.mxu0 %v235
    %2595 = vmatprep.subr.mxu0 0.0
    %2596 = vmatpush1.msra.mxu0 %v236
    %2597 = vmatprep.subr.mxu0 0.0
    %2598 = vmatpush1.msra.mxu0 %v237
    %2599 = vmatprep.subr.mxu0 0.0
    %2600 = vmatpush1.msra.mxu0 %v238
    %2601 = vmatprep.subr.mxu0 0.0
    %2602 = vmatpush1.msra.mxu0 %v239
    %2603 = vmatprep.subr.mxu0 0.0
    %2604 = vmatpush1.msra.mxu0 %v240
    %2605 = vmatprep.subr.mxu0 0.0
    %2606 = vmatpush1.msra.mxu0 %v241
    %2607 = vmatprep.subr.mxu0 0.0
    %2608 = vmatpush1.msra.mxu0 0.0
    %2609 = vmatprep.subr.mxu0 0.0
    %2610 = vmatpush1.msra.mxu0 0.0
    %2611 = vmatprep.subr.mxu0 0.0
    %2612 = vmatpush1.msra.mxu0 0.0
    %2613 = vmatprep.subr.mxu0 0.0
    %2614 = vmatpush1.msra.mxu0 0.0
    %2615 = vmatprep.subr.mxu0 0.0
    %2616 = vmatpush1.msra.mxu0 0.0
    %2617 = vmatprep.subr.mxu0 0.0
    %2618 = vmatpush1.msra.mxu0 0.0
    %2619 = vmatprep.subr.mxu0 0.0
    %2620 = vmatpush1.msra.mxu0 0.0
    %2621 = vmatprep.subr.mxu0 0.0
    %2622 = vmatpush1.msra.mxu0 0.0
    %2623 = vmatprep.subr.mxu0 0.0
    %2624 = vmatpush1.msra.mxu0 0.0
    %2625 = vmatprep.subr.mxu0 0.0
    %2626 = vmatpush1.msra.mxu0 0.0
    %2627 = vmatprep.subr.mxu0 0.0
    %2628 = vmatpush1.msra.mxu0 0.0
    %2629 = vmatprep.subr.mxu0 0.0
    %2630 = vmatpush1.msra.mxu0 0.0
    %2631 = vmatprep.subr.mxu0 0.0
    %2632 = vmatpush1.msra.mxu0 0.0
    %2633 = vmatprep.subr.mxu0 0.0
    %2634 = vmatpush1.msra.mxu0 0.0
    %2635 = vmatprep.subr.mxu0 0.0
    %2636 = vmatpush1.msra.mxu0 0.0
    %2637 = vmatprep.subr.mxu0 0.0
    %2638 = vmatpush1.msra.mxu0 0.0
    %2639 = vmatprep.mubr.f32.mxu0 0.0
    %2640 = vmatmul.mubr.f32.gmra.mrb[0].mxu0 %v2571
    %v2641 = vpop.f32.mrb[0].mxu0
    %v2642 = vadd.f32 0.0, %v2641
    %v2643 = vpop.f32.mrb[0].mxu0
    %2644 = vdwg.mxu0
    %v2645 = vadd.f32 %v2574, %v2642
    %v2646 = vtanh.pop %v2645
    %2647 = vmatprep.subr.mxu0 0.0
    %2648 = vmatpush1.msra.mxu0 %v242
    %2649 = vmatprep.subr.mxu0 0.0
    %2650 = vmatpush1.msra.mxu0 %v243
    %2651 = vmatprep.subr.mxu0 0.0
    %2652 = vmatpush1.msra.mxu0 %v244
    %2653 = vmatprep.subr.mxu0 0.0
    %2654 = vmatpush1.msra.mxu0 %v245
    %2655 = vmatprep.subr.mxu0 0.0
    %2656 = vmatpush1.msra.mxu0 %v246
    %2657 = vmatprep.subr.mxu0 0.0
    %2658 = vmatpush1.msra.mxu0 %v247
    %2659 = vmatprep.subr.mxu0 0.0
    %2660 = vmatpush1.msra.mxu0 %v248
    %2661 = vmatprep.subr.mxu0 0.0
    %2662 = vmatpush1.msra.mxu0 %v249
    %2663 = vmatprep.subr.mxu0 0.0
    %2664 = vmatpush1.msra.mxu0 %v250
    %2665 = vmatprep.subr.mxu0 0.0
    %2666 = vmatpush1.msra.mxu0 %v251
    %2667 = vmatprep.subr.mxu0 0.0
    %2668 = vmatpush1.msra.mxu0 %v252
    %2669 = vmatprep.subr.mxu0 0.0
    %2670 = vmatpush1.msra.mxu0 %v253
    %2671 = vmatprep.subr.mxu0 0.0
    %2672 = vmatpush1.msra.mxu0 %v254
    %2673 = vmatprep.subr.mxu0 0.0
    %2674 = vmatpush1.msra.mxu0 %v255
    %2675 = vmatprep.subr.mxu0 0.0
    %2676 = vmatpush1.msra.mxu0 %v256
    %2677 = vmatprep.subr.mxu0 0.0
    %2678 = vmatpush1.msra.mxu0 %v257
    %2679 = vmatprep.subr.mxu0 0.0
    %2680 = vmatpush1.msra.mxu0 0.0
    %2681 = vmatprep.subr.mxu0 0.0
    %2682 = vmatpush1.msra.mxu0 0.0
    %2683 = vmatprep.subr.mxu0 0.0
    %2684 = vmatpush1.msra.mxu0 0.0
    %2685 = vmatprep.subr.mxu0 0.0
    %2686 = vmatpush1.msra.mxu0 0.0
    %2687 = vmatprep.subr.mxu0 0.0
    %2688 = vmatpush1.msra.mxu0 0.0
    %2689 = vmatprep.subr.mxu0 0.0
    %2690 = vmatpush1.msra.mxu0 0.0
    %2691 = vmatprep.subr.mxu0 0.0
    %2692 = vmatpush1.msra.mxu0 0.0
    %2693 = vmatprep.subr.mxu0 0.0
    %2694 = vmatpush1.msra.mxu0 0.0
    %2695 = vmatprep.subr.mxu0 0.0
    %2696 = vmatpush1.msra.mxu0 0.0
    %2697 = vmatprep.subr.mxu0 0.0
    %2698 = vmatpush1.msra.mxu0 0.0
    %2699 = vmatprep.subr.mxu0 0.0
    %2700 = vmatpush1.msra.mxu0 0.0
    %2701 = vmatprep.subr.mxu0 0.0
    %2702 = vmatpush1.msra.mxu0 0.0
    %2703 = vmatprep.subr.mxu0 0.0
    %2704 = vmatpush1.msra.mxu0 0.0
    %2705 = vmatprep.subr.mxu0 0.0
    %2706 = vmatpush1.msra.mxu0 0.0
    %2707 = vmatprep.subr.mxu0 0.0
    %2708 = vmatpush1.msra.mxu0 0.0
    %2709 = vmatprep.subr.mxu0 0.0
    %2710 = vmatpush1.msra.mxu0 0.0
    %2711 = vmatprep.mubr.f32.mxu0 0.0
    %2712 = vmatmul.mubr.f32.gmra.mrb[0].mxu0 %v2646
    %v2713 = vpop.f32.mrb[0].mxu0
    %v2714 = vadd.f32 %v258, %v2713
    %v2715 = vpop.f32.mrb[0].mxu0
    %2716 = vdwg.mxu0
    %v2717 = vtanh.pop %v2714
    %2718 = vmatprep.subr.mxu0 0.0
    %2719 = vmatpush1.msra.mxu0 %v259
    %2720 = vmatprep.subr.mxu0 0.0
    %2721 = vmatpush1.msra.mxu0 %v260
    %2722 = vmatprep.subr.mxu0 0.0
    %2723 = vmatpush1.msra.mxu0 %v261
    %2724 = vmatprep.subr.mxu0 0.0
    %2725 = vmatpush1.msra.mxu0 %v262
    %2726 = vmatprep.subr.mxu0 0.0
    %2727 = vmatpush1.msra.mxu0 %v263
    %2728 = vmatprep.subr.mxu0 0.0
    %2729 = vmatpush1.msra.mxu0 %v264
    %2730 = vmatprep.subr.mxu0 0.0
    %2731 = vmatpush1.msra.mxu0 %v265
    %2732 = vmatprep.subr.mxu0 0.0
    %2733 = vmatpush1.msra.mxu0 %v266
    %2734 = vmatprep.subr.mxu0 0.0
    %2735 = vmatpush1.msra.mxu0 %v267
    %2736 = vmatprep.subr.mxu0 0.0
    %2737 = vmatpush1.msra.mxu0 %v268
    %2738 = vmatprep.subr.mxu0 0.0
    %2739 = vmatpush1.msra.mxu0 %v269
    %2740 = vmatprep.subr.mxu0 0.0
    %2741 = vmatpush1.msra.mxu0 %v270
    %2742 = vmatprep.subr.mxu0 0.0
    %2743 = vmatpush1.msra.mxu0 %v271
    %2744 = vmatprep.subr.mxu0 0.0
    %2745 = vmatpush1.msra.mxu0 %v272
    %2746 = vmatprep.subr.mxu0 0.0
    %2747 = vmatpush1.msra.mxu0 %v273
    %2748 = vmatprep.subr.mxu0 0.0
    %2749 = vmatpush1.msra.mxu0 %v274
    %2750 = vmatprep.subr.mxu0 0.0
    %2751 = vmatpush1.msra.mxu0 0.0
    %2752 = vmatprep.subr.mxu0 0.0
    %2753 = vmatpush1.msra.mxu0 0.0
    %2754 = vmatprep.subr.mxu0 0.0
    %2755 = vmatpush1.msra.mxu0 0.0
    %2756 = vmatprep.subr.mxu0 0.0
    %2757 = vmatpush1.msra.mxu0 0.0
    %2758 = vmatprep.subr.mxu0 0.0
    %2759 = vmatpush1.msra.mxu0 0.0
    %2760 = vmatprep.subr.mxu0 0.0
    %2761 = vmatpush1.msra.mxu0 0.0
    %2762 = vmatprep.subr.mxu0 0.0
    %2763 = vmatpush1.msra.mxu0 0.0
    %2764 = vmatprep.subr.mxu0 0.0
    %2765 = vmatpush1.msra.mxu0 0.0
    %2766 = vmatprep.subr.mxu0 0.0
    %2767 = vmatpush1.msra.mxu0 0.0
    %2768 = vmatprep.subr.mxu0 0.0
    %2769 = vmatpush1.msra.mxu0 0.0
    %2770 = vmatprep.subr.mxu0 0.0
    %2771 = vmatpush1.msra.mxu0 0.0
    %2772 = vmatprep.subr.mxu0 0.0
    %2773 = vmatpush1.msra.mxu0 0.0
    %2774 = vmatprep.subr.mxu0 0.0
    %2775 = vmatpush1.msra.mxu0 0.0
    %2776 = vmatprep.subr.mxu0 0.0
    %2777 = vmatpush1.msra.mxu0 0.0
    %2778 = vmatprep.subr.mxu0 0.0
    %2779 = vmatpush1.msra.mxu0 0.0
    %2780 = vmatprep.subr.mxu0 0.0
    %2781 = vmatpush1.msra.mxu0 0.0
    %2782 = vmatprep.mubr.f32.mxu0 0.0
    %2783 = vmatmul.mubr.f32.gmra.mrb[0].mxu0 %v2717
    %v2784 = vpop.f32.mrb[0].mxu0
    %v2785 = vadd.f32 %v275, %v2784
    %v2786 = vpop.f32.mrb[0].mxu0
    %2787 = vdwg.mxu0
    %2788 = vst [vmem:[#allocation14 + $0x8] sm:$0x1] %v2785
    %2789 = vmatprep.subr.mxu0 0.0
    %2790 = vmatpush1.msra.mxu0 %v276
    %2791 = vmatprep.subr.mxu0 0.0
    %2792 = vmatpush1.msra.mxu0 %v277
    %2793 = vmatprep.subr.mxu0 0.0
    %2794 = vmatpush1.msra.mxu0 %v278
    %2795 = vmatprep.subr.mxu0 0.0
    %2796 = vmatpush1.msra.mxu0 %v279
    %2797 = vmatprep.subr.mxu0 0.0
    %2798 = vmatpush1.msra.mxu0 %v280
    %2799 = vmatprep.subr.mxu0 0.0
    %2800 = vmatpush1.msra.mxu0 %v281
    %2801 = vmatprep.subr.mxu0 0.0
    %2802 = vmatpush1.msra.mxu0 %v282
    %2803 = vmatprep.subr.mxu0 0.0
    %2804 = vmatpush1.msra.mxu0 %v283
    %2805 = vmatprep.subr.mxu0 0.0
    %2806 = vmatpush1.msra.mxu0 %v284
    %2807 = vmatprep.subr.mxu0 0.0
    %2808 = vmatpush1.msra.mxu0 %v285
    %2809 = vmatprep.subr.mxu0 0.0
    %2810 = vmatpush1.msra.mxu0 %v286
    %2811 = vmatprep.subr.mxu0 0.0
    %2812 = vmatpush1.msra.mxu0 %v287
    %2813 = vmatprep.subr.mxu0 0.0
    %2814 = vmatpush1.msra.mxu0 %v288
    %2815 = vmatprep.subr.mxu0 0.0
    %2816 = vmatpush1.msra.mxu0 %v289
    %2817 = vmatprep.subr.mxu0 0.0
    %2818 = vmatpush1.msra.mxu0 %v290
    %2819 = vmatprep.subr.mxu0 0.0
    %2820 = vmatpush1.msra.mxu0 %v291
    %2821 = vmatprep.subr.mxu0 0.0
    %2822 = vmatpush1.msra.mxu0 0.0
    %2823 = vmatprep.subr.mxu0 0.0
    %2824 = vmatpush1.msra.mxu0 0.0
    %2825 = vmatprep.subr.mxu0 0.0
    %2826 = vmatpush1.msra.mxu0 0.0
    %2827 = vmatprep.subr.mxu0 0.0
    %2828 = vmatpush1.msra.mxu0 0.0
    %2829 = vmatprep.subr.mxu0 0.0
    %2830 = vmatpush1.msra.mxu0 0.0
    %2831 = vmatprep.subr.mxu0 0.0
    %2832 = vmatpush1.msra.mxu0 0.0
    %2833 = vmatprep.subr.mxu0 0.0
    %2834 = vmatpush1.msra.mxu0 0.0
    %2835 = vmatprep.subr.mxu0 0.0
    %2836 = vmatpush1.msra.mxu0 0.0
    %2837 = vmatprep.subr.mxu0 0.0
    %2838 = vmatpush1.msra.mxu0 0.0
    %2839 = vmatprep.subr.mxu0 0.0
    %2840 = vmatpush1.msra.mxu0 0.0
    %2841 = vmatprep.subr.mxu0 0.0
    %2842 = vmatpush1.msra.mxu0 0.0
    %2843 = vmatprep.subr.mxu0 0.0
    %2844 = vmatpush1.msra.mxu0 0.0
    %2845 = vmatprep.subr.mxu0 0.0
    %2846 = vmatpush1.msra.mxu0 0.0
    %2847 = vmatprep.subr.mxu0 0.0
    %2848 = vmatpush1.msra.mxu0 0.0
    %2849 = vmatprep.subr.mxu0 0.0
    %2850 = vmatpush1.msra.mxu0 0.0
    %2851 = vmatprep.subr.mxu0 0.0
    %2852 = vmatpush1.msra.mxu0 0.0
    %2853 = vmatprep.mubr.f32.mxu0 0.0
    %2854 = vmatmul.mubr.f32.gmra.mrb[0].mxu0 %v2717
    %v2855 = vpop.f32.mrb[0].mxu0
    %v2856 = vadd.f32 %v292, %v2855
    %v2857 = vpop.f32.mrb[0].mxu0
    %2858 = vdwg.mxu0
    %v2859 = vld [vmem:[#allocation2 + $0x9] sm:$0x1]
    %2860 = vmatprep.subr.mxu0 0.0
    %2861 = vmatpush1.msra.mxu0 %v226
    %2862 = vmatprep.subr.mxu0 0.0
    %2863 = vmatpush1.msra.mxu0 %v227
    %2864 = vmatprep.subr.mxu0 0.0
    %2865 = vmatpush1.msra.mxu0 %v228
    %2866 = vmatprep.subr.mxu0 0.0
    %2867 = vmatpush1.msra.mxu0 %v229
    %2868 = vmatprep.subr.mxu0 0.0
    %2869 = vmatpush1.msra.mxu0 %v230
    %2870 = vmatprep.subr.mxu0 0.0
    %2871 = vmatpush1.msra.mxu0 %v231
    %2872 = vmatprep.subr.mxu0 0.0
    %2873 = vmatpush1.msra.mxu0 %v232
    %2874 = vmatprep.subr.mxu0 0.0
    %2875 = vmatpush1.msra.mxu0 %v233
    %2876 = vmatprep.subr.mxu0 0.0
    %2877 = vmatpush1.msra.mxu0 %v234
    %2878 = vmatprep.subr.mxu0 0.0
    %2879 = vmatpush1.msra.mxu0 %v235
    %2880 = vmatprep.subr.mxu0 0.0
    %2881 = vmatpush1.msra.mxu0 %v236
    %2882 = vmatprep.subr.mxu0 0.0
    %2883 = vmatpush1.msra.mxu0 %v237
    %2884 = vmatprep.subr.mxu0 0.0
    %2885 = vmatpush1.msra.mxu0 %v238
    %2886 = vmatprep.subr.mxu0 0.0
    %2887 = vmatpush1.msra.mxu0 %v239
    %2888 = vmatprep.subr.mxu0 0.0
    %2889 = vmatpush1.msra.mxu0 %v240
    %2890 = vmatprep.subr.mxu0 0.0
    %2891 = vmatpush1.msra.mxu0 %v241
    %2892 = vmatprep.subr.mxu0 0.0
    %2893 = vmatpush1.msra.mxu0 0.0
    %2894 = vmatprep.subr.mxu0 0.0
    %2895 = vmatpush1.msra.mxu0 0.0
    %2896 = vmatprep.subr.mxu0 0.0
    %2897 = vmatpush1.msra.mxu0 0.0
    %2898 = vmatprep.subr.mxu0 0.0
    %2899 = vmatpush1.msra.mxu0 0.0
    %2900 = vmatprep.subr.mxu0 0.0
    %2901 = vmatpush1.msra.mxu0 0.0
    %2902 = vmatprep.subr.mxu0 0.0
    %2903 = vmatpush1.msra.mxu0 0.0
    %2904 = vmatprep.subr.mxu0 0.0
    %2905 = vmatpush1.msra.mxu0 0.0
    %2906 = vmatprep.subr.mxu0 0.0
    %2907 = vmatpush1.msra.mxu0 0.0
    %2908 = vmatprep.subr.mxu0 0.0
    %2909 = vmatpush1.msra.mxu0 0.0
    %2910 = vmatprep.subr.mxu0 0.0
    %2911 = vmatpush1.msra.mxu0 0.0
    %2912 = vmatprep.subr.mxu0 0.0
    %2913 = vmatpush1.msra.mxu0 0.0
    %2914 = vmatprep.subr.mxu0 0.0
    %2915 = vmatpush1.msra.mxu0 0.0
    %2916 = vmatprep.subr.mxu0 0.0
    %2917 = vmatpush1.msra.mxu0 0.0
    %2918 = vmatprep.subr.mxu0 0.0
    %2919 = vmatpush1.msra.mxu0 0.0
    %2920 = vmatprep.subr.mxu0 0.0
    %2921 = vmatpush1.msra.mxu0 0.0
    %2922 = vmatprep.subr.mxu0 0.0
    %2923 = vmatpush1.msra.mxu0 0.0
    %2924 = vmatprep.mubr.f32.mxu0 0.0
    %2925 = vmatmul.mubr.f32.gmra.mrb[0].mxu0 %v2856
    %v2926 = vpop.f32.mrb[0].mxu0
    %v2927 = vadd.f32 0.0, %v2926
    %v2928 = vpop.f32.mrb[0].mxu0
    %2929 = vdwg.mxu0
    %v2930 = vadd.f32 %v2859, %v2927
    %v2931 = vtanh.pop %v2930
    %2932 = vmatprep.subr.mxu0 0.0
    %2933 = vmatpush1.msra.mxu0 %v242
    %2934 = vmatprep.subr.mxu0 0.0
    %2935 = vmatpush1.msra.mxu0 %v243
    %2936 = vmatprep.subr.mxu0 0.0
    %2937 = vmatpush1.msra.mxu0 %v244
    %2938 = vmatprep.subr.mxu0 0.0
    %2939 = vmatpush1.msra.mxu0 %v245
    %2940 = vmatprep.subr.mxu0 0.0
    %2941 = vmatpush1.msra.mxu0 %v246
    %2942 = vmatprep.subr.mxu0 0.0
    %2943 = vmatpush1.msra.mxu0 %v247
    %2944 = vmatprep.subr.mxu0 0.0
    %2945 = vmatpush1.msra.mxu0 %v248
    %2946 = vmatprep.subr.mxu0 0.0
    %2947 = vmatpush1.msra.mxu0 %v249
    %2948 = vmatprep.subr.mxu0 0.0
    %2949 = vmatpush1.msra.mxu0 %v250
    %2950 = vmatprep.subr.mxu0 0.0
    %2951 = vmatpush1.msra.mxu0 %v251
    %2952 = vmatprep.subr.mxu0 0.0
    %2953 = vmatpush1.msra.mxu0 %v252
    %2954 = vmatprep.subr.mxu0 0.0
    %2955 = vmatpush1.msra.mxu0 %v253
    %2956 = vmatprep.subr.mxu0 0.0
    %2957 = vmatpush1.msra.mxu0 %v254
    %2958 = vmatprep.subr.mxu0 0.0
    %2959 = vmatpush1.msra.mxu0 %v255
    %2960 = vmatprep.subr.mxu0 0.0
    %2961 = vmatpush1.msra.mxu0 %v256
    %2962 = vmatprep.subr.mxu0 0.0
    %2963 = vmatpush1.msra.mxu0 %v257
    %2964 = vmatprep.subr.mxu0 0.0
    %2965 = vmatpush1.msra.mxu0 0.0
    %2966 = vmatprep.subr.mxu0 0.0
    %2967 = vmatpush1.msra.mxu0 0.0
    %2968 = vmatprep.subr.mxu0 0.0
    %2969 = vmatpush1.msra.mxu0 0.0
    %2970 = vmatprep.subr.mxu0 0.0
    %2971 = vmatpush1.msra.mxu0 0.0
    %2972 = vmatprep.subr.mxu0 0.0
    %2973 = vmatpush1.msra.mxu0 0.0
    %2974 = vmatprep.subr.mxu0 0.0
    %2975 = vmatpush1.msra.mxu0 0.0
    %2976 = vmatprep.subr.mxu0 0.0
    %2977 = vmatpush1.msra.mxu0 0.0
    %2978 = vmatprep.subr.mxu0 0.0
    %2979 = vmatpush1.msra.mxu0 0.0
    %2980 = vmatprep.subr.mxu0 0.0
    %2981 = vmatpush1.msra.mxu0 0.0
    %2982 = vmatprep.subr.mxu0 0.0
    %2983 = vmatpush1.msra.mxu0 0.0
    %2984 = vmatprep.subr.mxu0 0.0
    %2985 = vmatpush1.msra.mxu0 0.0
    %2986 = vmatprep.subr.mxu0 0.0
    %2987 = vmatpush1.msra.mxu0 0.0
    %2988 = vmatprep.subr.mxu0 0.0
    %2989 = vmatpush1.msra.mxu0 0.0
    %2990 = vmatprep.subr.mxu0 0.0
    %2991 = vmatpush1.msra.mxu0 0.0
    %2992 = vmatprep.subr.mxu0 0.0
    %2993 = vmatpush1.msra.mxu0 0.0
    %2994 = vmatprep.subr.mxu0 0.0
    %2995 = vmatpush1.msra.mxu0 0.0
    %2996 = vmatprep.mubr.f32.mxu0 0.0
    %2997 = vmatmul.mubr.f32.gmra.mrb[0].mxu0 %v2931
    %v2998 = vpop.f32.mrb[0].mxu0
    %v2999 = vadd.f32 %v258, %v2998
    %v3000 = vpop.f32.mrb[0].mxu0
    %3001 = vdwg.mxu0
    %v3002 = vtanh.pop %v2999
    %3003 = vmatprep.subr.mxu0 0.0
    %3004 = vmatpush1.msra.mxu0 %v259
    %3005 = vmatprep.subr.mxu0 0.0
    %3006 = vmatpush1.msra.mxu0 %v260
    %3007 = vmatprep.subr.mxu0 0.0
    %3008 = vmatpush1.msra.mxu0 %v261
    %3009 = vmatprep.subr.mxu0 0.0
    %3010 = vmatpush1.msra.mxu0 %v262
    %3011 = vmatprep.subr.mxu0 0.0
    %3012 = vmatpush1.msra.mxu0 %v263
    %3013 = vmatprep.subr.mxu0 0.0
    %3014 = vmatpush1.msra.mxu0 %v264
    %3015 = vmatprep.subr.mxu0 0.0
    %3016 = vmatpush1.msra.mxu0 %v265
    %3017 = vmatprep.subr.mxu0 0.0
    %3018 = vmatpush1.msra.mxu0 %v266
    %3019 = vmatprep.subr.mxu0 0.0
    %3020 = vmatpush1.msra.mxu0 %v267
    %3021 = vmatprep.subr.mxu0 0.0
    %3022 = vmatpush1.msra.mxu0 %v268
    %3023 = vmatprep.subr.mxu0 0.0
    %3024 = vmatpush1.msra.mxu0 %v269
    %3025 = vmatprep.subr.mxu0 0.0
    %3026 = vmatpush1.msra.mxu0 %v270
    %3027 = vmatprep.subr.mxu0 0.0
    %3028 = vmatpush1.msra.mxu0 %v271
    %3029 = vmatprep.subr.mxu0 0.0
    %3030 = vmatpush1.msra.mxu0 %v272
    %3031 = vmatprep.subr.mxu0 0.0
    %3032 = vmatpush1.msra.mxu0 %v273
    %3033 = vmatprep.subr.mxu0 0.0
    %3034 = vmatpush1.msra.mxu0 %v274
    %3035 = vmatprep.subr.mxu0 0.0
    %3036 = vmatpush1.msra.mxu0 0.0
    %3037 = vmatprep.subr.mxu0 0.0
    %3038 = vmatpush1.msra.mxu0 0.0
    %3039 = vmatprep.subr.mxu0 0.0
    %3040 = vmatpush1.msra.mxu0 0.0
    %3041 = vmatprep.subr.mxu0 0.0
    %3042 = vmatpush1.msra.mxu0 0.0
    %3043 = vmatprep.subr.mxu0 0.0
    %3044 = vmatpush1.msra.mxu0 0.0
    %3045 = vmatprep.subr.mxu0 0.0
    %3046 = vmatpush1.msra.mxu0 0.0
    %3047 = vmatprep.subr.mxu0 0.0
    %3048 = vmatpush1.msra.mxu0 0.0
    %3049 = vmatprep.subr.mxu0 0.0
    %3050 = vmatpush1.msra.mxu0 0.0
    %3051 = vmatprep.subr.mxu0 0.0
    %3052 = vmatpush1.msra.mxu0 0.0
    %3053 = vmatprep.subr.mxu0 0.0
    %3054 = vmatpush1.msra.mxu0 0.0
    %3055 = vmatprep.subr.mxu0 0.0
    %3056 = vmatpush1.msra.mxu0 0.0
    %3057 = vmatprep.subr.mxu0 0.0
    %3058 = vmatpush1.msra.mxu0 0.0
    %3059 = vmatprep.subr.mxu0 0.0
    %3060 = vmatpush1.msra.mxu0 0.0
    %3061 = vmatprep.subr.mxu0 0.0
    %3062 = vmatpush1.msra.mxu0 0.0
    %3063 = vmatprep.subr.mxu0 0.0
    %3064 = vmatpush1.msra.mxu0 0.0
    %3065 = vmatprep.subr.mxu0 0.0
    %3066 = vmatpush1.msra.mxu0 0.0
    %3067 = vmatprep.mubr.f32.mxu0 0.0
    %3068 = vmatmul.mubr.f32.gmra.mrb[0].mxu0 %v3002
    %v3069 = vpop.f32.mrb[0].mxu0
    %v3070 = vadd.f32 %v275, %v3069
    %v3071 = vpop.f32.mrb[0].mxu0
    %3072 = vdwg.mxu0
    %3073 = vst [vmem:[#allocation14 + $0x9] sm:$0x1] %v3070
    %3074 = vmatprep.subr.mxu0 0.0
    %3075 = vmatpush1.msra.mxu0 %v276
    %3076 = vmatprep.subr.mxu0 0.0
    %3077 = vmatpush1.msra.mxu0 %v277
    %3078 = vmatprep.subr.mxu0 0.0
    %3079 = vmatpush1.msra.mxu0 %v278
    %3080 = vmatprep.subr.mxu0 0.0
    %3081 = vmatpush1.msra.mxu0 %v279
    %3082 = vmatprep.subr.mxu0 0.0
    %3083 = vmatpush1.msra.mxu0 %v280
    %3084 = vmatprep.subr.mxu0 0.0
    %3085 = vmatpush1.msra.mxu0 %v281
    %3086 = vmatprep.subr.mxu0 0.0
    %3087 = vmatpush1.msra.mxu0 %v282
    %3088 = vmatprep.subr.mxu0 0.0
    %3089 = vmatpush1.msra.mxu0 %v283
    %3090 = vmatprep.subr.mxu0 0.0
    %3091 = vmatpush1.msra.mxu0 %v284
    %3092 = vmatprep.subr.mxu0 0.0
    %3093 = vmatpush1.msra.mxu0 %v285
    %3094 = vmatprep.subr.mxu0 0.0
    %3095 = vmatpush1.msra.mxu0 %v286
    %3096 = vmatprep.subr.mxu0 0.0
    %3097 = vmatpush1.msra.mxu0 %v287
    %3098 = vmatprep.subr.mxu0 0.0
    %3099 = vmatpush1.msra.mxu0 %v288
    %3100 = vmatprep.subr.mxu0 0.0
    %3101 = vmatpush1.msra.mxu0 %v289
    %3102 = vmatprep.subr.mxu0 0.0
    %3103 = vmatpush1.msra.mxu0 %v290
    %3104 = vmatprep.subr.mxu0 0.0
    %3105 = vmatpush1.msra.mxu0 %v291
    %3106 = vmatprep.subr.mxu0 0.0
    %3107 = vmatpush1.msra.mxu0 0.0
    %3108 = vmatprep.subr.mxu0 0.0
    %3109 = vmatpush1.msra.mxu0 0.0
    %3110 = vmatprep.subr.mxu0 0.0
    %3111 = vmatpush1.msra.mxu0 0.0
    %3112 = vmatprep.subr.mxu0 0.0
    %3113 = vmatpush1.msra.mxu0 0.0
    %3114 = vmatprep.subr.mxu0 0.0
    %3115 = vmatpush1.msra.mxu0 0.0
    %3116 = vmatprep.subr.mxu0 0.0
    %3117 = vmatpush1.msra.mxu0 0.0
    %3118 = vmatprep.subr.mxu0 0.0
    %3119 = vmatpush1.msra.mxu0 0.0
    %3120 = vmatprep.subr.mxu0 0.0
    %3121 = vmatpush1.msra.mxu0 0.0
    %3122 = vmatprep.subr.mxu0 0.0
    %3123 = vmatpush1.msra.mxu0 0.0
    %3124 = vmatprep.subr.mxu0 0.0
    %3125 = vmatpush1.msra.mxu0 0.0
    %3126 = vmatprep.subr.mxu0 0.0
    %3127 = vmatpush1.msra.mxu0 0.0
    %3128 = vmatprep.subr.mxu0 0.0
    %3129 = vmatpush1.msra.mxu0 0.0
    %3130 = vmatprep.subr.mxu0 0.0
    %3131 = vmatpush1.msra.mxu0 0.0
    %3132 = vmatprep.subr.mxu0 0.0
    %3133 = vmatpush1.msra.mxu0 0.0
    %3134 = vmatprep.subr.mxu0 0.0
    %3135 = vmatpush1.msra.mxu0 0.0
    %3136 = vmatprep.subr.mxu0 0.0
    %3137 = vmatpush1.msra.mxu0 0.0
    %3138 = vmatprep.mubr.f32.mxu0 0.0
    %3139 = vmatmul.mubr.f32.gmra.mrb[0].mxu0 %v3002
    %v3140 = vpop.f32.mrb[0].mxu0
    %v3141 = vadd.f32 %v292, %v3140
    %v3142 = vpop.f32.mrb[0].mxu0
    %3143 = vdwg.mxu0
    %v3144 = vld [vmem:[#allocation2 + $0xa] sm:$0x1]
    %3145 = vmatprep.subr.mxu0 0.0
    %3146 = vmatpush1.msra.mxu0 %v226
    %3147 = vmatprep.subr.mxu0 0.0
    %3148 = vmatpush1.msra.mxu0 %v227
    %3149 = vmatprep.subr.mxu0 0.0
    %3150 = vmatpush1.msra.mxu0 %v228
    %3151 = vmatprep.subr.mxu0 0.0
    %3152 = vmatpush1.msra.mxu0 %v229
    %3153 = vmatprep.subr.mxu0 0.0
    %3154 = vmatpush1.msra.mxu0 %v230
    %3155 = vmatprep.subr.mxu0 0.0
    %3156 = vmatpush1.msra.mxu0 %v231
    %3157 = vmatprep.subr.mxu0 0.0
    %3158 = vmatpush1.msra.mxu0 %v232
    %3159 = vmatprep.subr.mxu0 0.0
    %3160 = vmatpush1.msra.mxu0 %v233
    %3161 = vmatprep.subr.mxu0 0.0
    %3162 = vmatpush1.msra.mxu0 %v234
    %3163 = vmatprep.subr.mxu0 0.0
    %3164 = vmatpush1.msra.mxu0 %v235
    %3165 = vmatprep.subr.mxu0 0.0
    %3166 = vmatpush1.msra.mxu0 %v236
    %3167 = vmatprep.subr.mxu0 0.0
    %3168 = vmatpush1.msra.mxu0 %v237
    %3169 = vmatprep.subr.mxu0 0.0
    %3170 = vmatpush1.msra.mxu0 %v238
    %3171 = vmatprep.subr.mxu0 0.0
    %3172 = vmatpush1.msra.mxu0 %v239
    %3173 = vmatprep.subr.mxu0 0.0
    %3174 = vmatpush1.msra.mxu0 %v240
    %3175 = vmatprep.subr.mxu0 0.0
    %3176 = vmatpush1.msra.mxu0 %v241
    %3177 = vmatprep.subr.mxu0 0.0
    %3178 = vmatpush1.msra.mxu0 0.0
    %3179 = vmatprep.subr.mxu0 0.0
    %3180 = vmatpush1.msra.mxu0 0.0
    %3181 = vmatprep.subr.mxu0 0.0
    %3182 = vmatpush1.msra.mxu0 0.0
    %3183 = vmatprep.subr.mxu0 0.0
    %3184 = vmatpush1.msra.mxu0 0.0
    %3185 = vmatprep.subr.mxu0 0.0
    %3186 = vmatpush1.msra.mxu0 0.0
    %3187 = vmatprep.subr.mxu0 0.0
    %3188 = vmatpush1.msra.mxu0 0.0
    %3189 = vmatprep.subr.mxu0 0.0
    %3190 = vmatpush1.msra.mxu0 0.0
    %3191 = vmatprep.subr.mxu0 0.0
    %3192 = vmatpush1.msra.mxu0 0.0
    %3193 = vmatprep.subr.mxu0 0.0
    %3194 = vmatpush1.msra.mxu0 0.0
    %3195 = vmatprep.subr.mxu0 0.0
    %3196 = vmatpush1.msra.mxu0 0.0
    %3197 = vmatprep.subr.mxu0 0.0
    %3198 = vmatpush1.msra.mxu0 0.0
    %3199 = vmatprep.subr.mxu0 0.0
    %3200 = vmatpush1.msra.mxu0 0.0
    %3201 = vmatprep.subr.mxu0 0.0
    %3202 = vmatpush1.msra.mxu0 0.0
    %3203 = vmatprep.subr.mxu0 0.0
    %3204 = vmatpush1.msra.mxu0 0.0
    %3205 = vmatprep.subr.mxu0 0.0
    %3206 = vmatpush1.msra.mxu0 0.0
    %3207 = vmatprep.subr.mxu0 0.0
    %3208 = vmatpush1.msra.mxu0 0.0
    %3209 = vmatprep.mubr.f32.mxu0 0.0
    %3210 = vmatmul.mubr.f32.gmra.mrb[0].mxu0 %v3141
    %v3211 = vpop.f32.mrb[0].mxu0
    %v3212 = vadd.f32 0.0, %v3211
    %v3213 = vpop.f32.mrb[0].mxu0
    %3214 = vdwg.mxu0
    %v3215 = vadd.f32 %v3144, %v3212
    %v3216 = vtanh.pop %v3215
    %3217 = vmatprep.subr.mxu0 0.0
    %3218 = vmatpush1.msra.mxu0 %v242
    %3219 = vmatprep.subr.mxu0 0.0
    %3220 = vmatpush1.msra.mxu0 %v243
    %3221 = vmatprep.subr.mxu0 0.0
    %3222 = vmatpush1.msra.mxu0 %v244
    %3223 = vmatprep.subr.mxu0 0.0
    %3224 = vmatpush1.msra.mxu0 %v245
    %3225 = vmatprep.subr.mxu0 0.0
    %3226 = vmatpush1.msra.mxu0 %v246
    %3227 = vmatprep.subr.mxu0 0.0
    %3228 = vmatpush1.msra.mxu0 %v247
    %3229 = vmatprep.subr.mxu0 0.0
    %3230 = vmatpush1.msra.mxu0 %v248
    %3231 = vmatprep.subr.mxu0 0.0
    %3232 = vmatpush1.msra.mxu0 %v249
    %3233 = vmatprep.subr.mxu0 0.0
    %3234 = vmatpush1.msra.mxu0 %v250
    %3235 = vmatprep.subr.mxu0 0.0
    %3236 = vmatpush1.msra.mxu0 %v251
    %3237 = vmatprep.subr.mxu0 0.0
    %3238 = vmatpush1.msra.mxu0 %v252
    %3239 = vmatprep.subr.mxu0 0.0
    %3240 = vmatpush1.msra.mxu0 %v253
    %3241 = vmatprep.subr.mxu0 0.0
    %3242 = vmatpush1.msra.mxu0 %v254
    %3243 = vmatprep.subr.mxu0 0.0
    %3244 = vmatpush1.msra.mxu0 %v255
    %3245 = vmatprep.subr.mxu0 0.0
    %3246 = vmatpush1.msra.mxu0 %v256
    %3247 = vmatprep.subr.mxu0 0.0
    %3248 = vmatpush1.msra.mxu0 %v257
    %3249 = vmatprep.subr.mxu0 0.0
    %3250 = vmatpush1.msra.mxu0 0.0
    %3251 = vmatprep.subr.mxu0 0.0
    %3252 = vmatpush1.msra.mxu0 0.0
    %3253 = vmatprep.subr.mxu0 0.0
    %3254 = vmatpush1.msra.mxu0 0.0
    %3255 = vmatprep.subr.mxu0 0.0
    %3256 = vmatpush1.msra.mxu0 0.0
    %3257 = vmatprep.subr.mxu0 0.0
    %3258 = vmatpush1.msra.mxu0 0.0
    %3259 = vmatprep.subr.mxu0 0.0
    %3260 = vmatpush1.msra.mxu0 0.0
    %3261 = vmatprep.subr.mxu0 0.0
    %3262 = vmatpush1.msra.mxu0 0.0
    %3263 = vmatprep.subr.mxu0 0.0
    %3264 = vmatpush1.msra.mxu0 0.0
    %3265 = vmatprep.subr.mxu0 0.0
    %3266 = vmatpush1.msra.mxu0 0.0
    %3267 = vmatprep.subr.mxu0 0.0
    %3268 = vmatpush1.msra.mxu0 0.0
    %3269 = vmatprep.subr.mxu0 0.0
    %3270 = vmatpush1.msra.mxu0 0.0
    %3271 = vmatprep.subr.mxu0 0.0
    %3272 = vmatpush1.msra.mxu0 0.0
    %3273 = vmatprep.subr.mxu0 0.0
    %3274 = vmatpush1.msra.mxu0 0.0
    %3275 = vmatprep.subr.mxu0 0.0
    %3276 = vmatpush1.msra.mxu0 0.0
    %3277 = vmatprep.subr.mxu0 0.0
    %3278 = vmatpush1.msra.mxu0 0.0
    %3279 = vmatprep.subr.mxu0 0.0
    %3280 = vmatpush1.msra.mxu0 0.0
    %3281 = vmatprep.mubr.f32.mxu0 0.0
    %3282 = vmatmul.mubr.f32.gmra.mrb[0].mxu0 %v3216
    %v3283 = vpop.f32.mrb[0].mxu0
    %v3284 = vadd.f32 %v258, %v3283
    %v3285 = vpop.f32.mrb[0].mxu0
    %3286 = vdwg.mxu0
    %v3287 = vtanh.pop %v3284
    %3288 = vmatprep.subr.mxu0 0.0
    %3289 = vmatpush1.msra.mxu0 %v259
    %3290 = vmatprep.subr.mxu0 0.0
    %3291 = vmatpush1.msra.mxu0 %v260
    %3292 = vmatprep.subr.mxu0 0.0
    %3293 = vmatpush1.msra.mxu0 %v261
    %3294 = vmatprep.subr.mxu0 0.0
    %3295 = vmatpush1.msra.mxu0 %v262
    %3296 = vmatprep.subr.mxu0 0.0
    %3297 = vmatpush1.msra.mxu0 %v263
    %3298 = vmatprep.subr.mxu0 0.0
    %3299 = vmatpush1.msra.mxu0 %v264
    %3300 = vmatprep.subr.mxu0 0.0
    %3301 = vmatpush1.msra.mxu0 %v265
    %3302 = vmatprep.subr.mxu0 0.0
    %3303 = vmatpush1.msra.mxu0 %v266
    %3304 = vmatprep.subr.mxu0 0.0
    %3305 = vmatpush1.msra.mxu0 %v267
    %3306 = vmatprep.subr.mxu0 0.0
    %3307 = vmatpush1.msra.mxu0 %v268
    %3308 = vmatprep.subr.mxu0 0.0
    %3309 = vmatpush1.msra.mxu0 %v269
    %3310 = vmatprep.subr.mxu0 0.0
    %3311 = vmatpush1.msra.mxu0 %v270
    %3312 = vmatprep.subr.mxu0 0.0
    %3313 = vmatpush1.msra.mxu0 %v271
    %3314 = vmatprep.subr.mxu0 0.0
    %3315 = vmatpush1.msra.mxu0 %v272
    %3316 = vmatprep.subr.mxu0 0.0
    %3317 = vmatpush1.msra.mxu0 %v273
    %3318 = vmatprep.subr.mxu0 0.0
    %3319 = vmatpush1.msra.mxu0 %v274
    %3320 = vmatprep.subr.mxu0 0.0
    %3321 = vmatpush1.msra.mxu0 0.0
    %3322 = vmatprep.subr.mxu0 0.0
    %3323 = vmatpush1.msra.mxu0 0.0
    %3324 = vmatprep.subr.mxu0 0.0
    %3325 = vmatpush1.msra.mxu0 0.0
    %3326 = vmatprep.subr.mxu0 0.0
    %3327 = vmatpush1.msra.mxu0 0.0
    %3328 = vmatprep.subr.mxu0 0.0
    %3329 = vmatpush1.msra.mxu0 0.0
    %3330 = vmatprep.subr.mxu0 0.0
    %3331 = vmatpush1.msra.mxu0 0.0
    %3332 = vmatprep.subr.mxu0 0.0
    %3333 = vmatpush1.msra.mxu0 0.0
    %3334 = vmatprep.subr.mxu0 0.0
    %3335 = vmatpush1.msra.mxu0 0.0
    %3336 = vmatprep.subr.mxu0 0.0
    %3337 = vmatpush1.msra.mxu0 0.0
    %3338 = vmatprep.subr.mxu0 0.0
    %3339 = vmatpush1.msra.mxu0 0.0
    %3340 = vmatprep.subr.mxu0 0.0
    %3341 = vmatpush1.msra.mxu0 0.0
    %3342 = vmatprep.subr.mxu0 0.0
    %3343 = vmatpush1.msra.mxu0 0.0
    %3344 = vmatprep.subr.mxu0 0.0
    %3345 = vmatpush1.msra.mxu0 0.0
    %3346 = vmatprep.subr.mxu0 0.0
    %3347 = vmatpush1.msra.mxu0 0.0
    %3348 = vmatprep.subr.mxu0 0.0
    %3349 = vmatpush1.msra.mxu0 0.0
    %3350 = vmatprep.subr.mxu0 0.0
    %3351 = vmatpush1.msra.mxu0 0.0
    %3352 = vmatprep.mubr.f32.mxu0 0.0
    %3353 = vmatmul.mubr.f32.gmra.mrb[0].mxu0 %v3287
    %v3354 = vpop.f32.mrb[0].mxu0
    %v3355 = vadd.f32 %v275, %v3354
    %v3356 = vpop.f32.mrb[0].mxu0
    %3357 = vdwg.mxu0
    %3358 = vst [vmem:[#allocation14 + $0xa] sm:$0x1] %v3355
    %3359 = vmatprep.subr.mxu0 0.0
    %3360 = vmatpush1.msra.mxu0 %v276
    %3361 = vmatprep.subr.mxu0 0.0
    %3362 = vmatpush1.msra.mxu0 %v277
    %3363 = vmatprep.subr.mxu0 0.0
    %3364 = vmatpush1.msra.mxu0 %v278
    %3365 = vmatprep.subr.mxu0 0.0
    %3366 = vmatpush1.msra.mxu0 %v279
    %3367 = vmatprep.subr.mxu0 0.0
    %3368 = vmatpush1.msra.mxu0 %v280
    %3369 = vmatprep.subr.mxu0 0.0
    %3370 = vmatpush1.msra.mxu0 %v281
    %3371 = vmatprep.subr.mxu0 0.0
    %3372 = vmatpush1.msra.mxu0 %v282
    %3373 = vmatprep.subr.mxu0 0.0
    %3374 = vmatpush1.msra.mxu0 %v283
    %3375 = vmatprep.subr.mxu0 0.0
    %3376 = vmatpush1.msra.mxu0 %v284
    %3377 = vmatprep.subr.mxu0 0.0
    %3378 = vmatpush1.msra.mxu0 %v285
    %3379 = vmatprep.subr.mxu0 0.0
    %3380 = vmatpush1.msra.mxu0 %v286
    %3381 = vmatprep.subr.mxu0 0.0
    %3382 = vmatpush1.msra.mxu0 %v287
    %3383 = vmatprep.subr.mxu0 0.0
    %3384 = vmatpush1.msra.mxu0 %v288
    %3385 = vmatprep.subr.mxu0 0.0
    %3386 = vmatpush1.msra.mxu0 %v289
    %3387 = vmatprep.subr.mxu0 0.0
    %3388 = vmatpush1.msra.mxu0 %v290
    %3389 = vmatprep.subr.mxu0 0.0
    %3390 = vmatpush1.msra.mxu0 %v291
    %3391 = vmatprep.subr.mxu0 0.0
    %3392 = vmatpush1.msra.mxu0 0.0
    %3393 = vmatprep.subr.mxu0 0.0
    %3394 = vmatpush1.msra.mxu0 0.0
    %3395 = vmatprep.subr.mxu0 0.0
    %3396 = vmatpush1.msra.mxu0 0.0
    %3397 = vmatprep.subr.mxu0 0.0
    %3398 = vmatpush1.msra.mxu0 0.0
    %3399 = vmatprep.subr.mxu0 0.0
    %3400 = vmatpush1.msra.mxu0 0.0
    %3401 = vmatprep.subr.mxu0 0.0
    %3402 = vmatpush1.msra.mxu0 0.0
    %3403 = vmatprep.subr.mxu0 0.0
    %3404 = vmatpush1.msra.mxu0 0.0
    %3405 = vmatprep.subr.mxu0 0.0
    %3406 = vmatpush1.msra.mxu0 0.0
    %3407 = vmatprep.subr.mxu0 0.0
    %3408 = vmatpush1.msra.mxu0 0.0
    %3409 = vmatprep.subr.mxu0 0.0
    %3410 = vmatpush1.msra.mxu0 0.0
    %3411 = vmatprep.subr.mxu0 0.0
    %3412 = vmatpush1.msra.mxu0 0.0
    %3413 = vmatprep.subr.mxu0 0.0
    %3414 = vmatpush1.msra.mxu0 0.0
    %3415 = vmatprep.subr.mxu0 0.0
    %3416 = vmatpush1.msra.mxu0 0.0
    %3417 = vmatprep.subr.mxu0 0.0
    %3418 = vmatpush1.msra.mxu0 0.0
    %3419 = vmatprep.subr.mxu0 0.0
    %3420 = vmatpush1.msra.mxu0 0.0
    %3421 = vmatprep.subr.mxu0 0.0
    %3422 = vmatpush1.msra.mxu0 0.0
    %3423 = vmatprep.mubr.f32.mxu0 0.0
    %3424 = vmatmul.mubr.f32.gmra.mrb[0].mxu0 %v3287
    %v3425 = vpop.f32.mrb[0].mxu0
    %v3426 = vadd.f32 %v292, %v3425
    %v3427 = vpop.f32.mrb[0].mxu0
    %3428 = vdwg.mxu0
    %v3429 = vld [vmem:[#allocation2 + $0xb] sm:$0x1]
    %3430 = vmatprep.subr.mxu0 0.0
    %3431 = vmatpush1.msra.mxu0 %v226
    %3432 = vmatprep.subr.mxu0 0.0
    %3433 = vmatpush1.msra.mxu0 %v227
    %3434 = vmatprep.subr.mxu0 0.0
    %3435 = vmatpush1.msra.mxu0 %v228
    %3436 = vmatprep.subr.mxu0 0.0
    %3437 = vmatpush1.msra.mxu0 %v229
    %3438 = vmatprep.subr.mxu0 0.0
    %3439 = vmatpush1.msra.mxu0 %v230
    %3440 = vmatprep.subr.mxu0 0.0
    %3441 = vmatpush1.msra.mxu0 %v231
    %3442 = vmatprep.subr.mxu0 0.0
    %3443 = vmatpush1.msra.mxu0 %v232
    %3444 = vmatprep.subr.mxu0 0.0
    %3445 = vmatpush1.msra.mxu0 %v233
    %3446 = vmatprep.subr.mxu0 0.0
    %3447 = vmatpush1.msra.mxu0 %v234
    %3448 = vmatprep.subr.mxu0 0.0
    %3449 = vmatpush1.msra.mxu0 %v235
    %3450 = vmatprep.subr.mxu0 0.0
    %3451 = vmatpush1.msra.mxu0 %v236
    %3452 = vmatprep.subr.mxu0 0.0
    %3453 = vmatpush1.msra.mxu0 %v237
    %3454 = vmatprep.subr.mxu0 0.0
    %3455 = vmatpush1.msra.mxu0 %v238
    %3456 = vmatprep.subr.mxu0 0.0
    %3457 = vmatpush1.msra.mxu0 %v239
    %3458 = vmatprep.subr.mxu0 0.0
    %3459 = vmatpush1.msra.mxu0 %v240
    %3460 = vmatprep.subr.mxu0 0.0
    %3461 = vmatpush1.msra.mxu0 %v241
    %3462 = vmatprep.subr.mxu0 0.0
    %3463 = vmatpush1.msra.mxu0 0.0
    %3464 = vmatprep.subr.mxu0 0.0
    %3465 = vmatpush1.msra.mxu0 0.0
    %3466 = vmatprep.subr.mxu0 0.0
    %3467 = vmatpush1.msra.mxu0 0.0
    %3468 = vmatprep.subr.mxu0 0.0
    %3469 = vmatpush1.msra.mxu0 0.0
    %3470 = vmatprep.subr.mxu0 0.0
    %3471 = vmatpush1.msra.mxu0 0.0
    %3472 = vmatprep.subr.mxu0 0.0
    %3473 = vmatpush1.msra.mxu0 0.0
    %3474 = vmatprep.subr.mxu0 0.0
    %3475 = vmatpush1.msra.mxu0 0.0
    %3476 = vmatprep.subr.mxu0 0.0
    %3477 = vmatpush1.msra.mxu0 0.0
    %3478 = vmatprep.subr.mxu0 0.0
    %3479 = vmatpush1.msra.mxu0 0.0
    %3480 = vmatprep.subr.mxu0 0.0
    %3481 = vmatpush1.msra.mxu0 0.0
    %3482 = vmatprep.subr.mxu0 0.0
    %3483 = vmatpush1.msra.mxu0 0.0
    %3484 = vmatprep.subr.mxu0 0.0
    %3485 = vmatpush1.msra.mxu0 0.0
    %3486 = vmatprep.subr.mxu0 0.0
    %3487 = vmatpush1.msra.mxu0 0.0
    %3488 = vmatprep.subr.mxu0 0.0
    %3489 = vmatpush1.msra.mxu0 0.0
    %3490 = vmatprep.subr.mxu0 0.0
    %3491 = vmatpush1.msra.mxu0 0.0
    %3492 = vmatprep.subr.mxu0 0.0
    %3493 = vmatpush1.msra.mxu0 0.0
    %3494 = vmatprep.mubr.f32.mxu0 0.0
    %3495 = vmatmul.mubr.f32.gmra.mrb[0].mxu0 %v3426
    %v3496 = vpop.f32.mrb[0].mxu0
    %v3497 = vadd.f32 0.0, %v3496
    %v3498 = vpop.f32.mrb[0].mxu0
    %3499 = vdwg.mxu0
    %v3500 = vadd.f32 %v3429, %v3497
    %v3501 = vtanh.pop %v3500
    %3502 = vmatprep.subr.mxu0 0.0
    %3503 = vmatpush1.msra.mxu0 %v242
    %3504 = vmatprep.subr.mxu0 0.0
    %3505 = vmatpush1.msra.mxu0 %v243
    %3506 = vmatprep.subr.mxu0 0.0
    %3507 = vmatpush1.msra.mxu0 %v244
    %3508 = vmatprep.subr.mxu0 0.0
    %3509 = vmatpush1.msra.mxu0 %v245
    %3510 = vmatprep.subr.mxu0 0.0
    %3511 = vmatpush1.msra.mxu0 %v246
    %3512 = vmatprep.subr.mxu0 0.0
    %3513 = vmatpush1.msra.mxu0 %v247
    %3514 = vmatprep.subr.mxu0 0.0
    %3515 = vmatpush1.msra.mxu0 %v248
    %3516 = vmatprep.subr.mxu0 0.0
    %3517 = vmatpush1.msra.mxu0 %v249
    %3518 = vmatprep.subr.mxu0 0.0
    %3519 = vmatpush1.msra.mxu0 %v250
    %3520 = vmatprep.subr.mxu0 0.0
    %3521 = vmatpush1.msra.mxu0 %v251
    %3522 = vmatprep.subr.mxu0 0.0
    %3523 = vmatpush1.msra.mxu0 %v252
    %3524 = vmatprep.subr.mxu0 0.0
    %3525 = vmatpush1.msra.mxu0 %v253
    %3526 = vmatprep.subr.mxu0 0.0
    %3527 = vmatpush1.msra.mxu0 %v254
    %3528 = vmatprep.subr.mxu0 0.0
    %3529 = vmatpush1.msra.mxu0 %v255
    %3530 = vmatprep.subr.mxu0 0.0
    %3531 = vmatpush1.msra.mxu0 %v256
    %3532 = vmatprep.subr.mxu0 0.0
    %3533 = vmatpush1.msra.mxu0 %v257
    %3534 = vmatprep.subr.mxu0 0.0
    %3535 = vmatpush1.msra.mxu0 0.0
    %3536 = vmatprep.subr.mxu0 0.0
    %3537 = vmatpush1.msra.mxu0 0.0
    %3538 = vmatprep.subr.mxu0 0.0
    %3539 = vmatpush1.msra.mxu0 0.0
    %3540 = vmatprep.subr.mxu0 0.0
    %3541 = vmatpush1.msra.mxu0 0.0
    %3542 = vmatprep.subr.mxu0 0.0
    %3543 = vmatpush1.msra.mxu0 0.0
    %3544 = vmatprep.subr.mxu0 0.0
    %3545 = vmatpush1.msra.mxu0 0.0
    %3546 = vmatprep.subr.mxu0 0.0
    %3547 = vmatpush1.msra.mxu0 0.0
    %3548 = vmatprep.subr.mxu0 0.0
    %3549 = vmatpush1.msra.mxu0 0.0
    %3550 = vmatprep.subr.mxu0 0.0
    %3551 = vmatpush1.msra.mxu0 0.0
    %3552 = vmatprep.subr.mxu0 0.0
    %3553 = vmatpush1.msra.mxu0 0.0
    %3554 = vmatprep.subr.mxu0 0.0
    %3555 = vmatpush1.msra.mxu0 0.0
    %3556 = vmatprep.subr.mxu0 0.0
    %3557 = vmatpush1.msra.mxu0 0.0
    %3558 = vmatprep.subr.mxu0 0.0
    %3559 = vmatpush1.msra.mxu0 0.0
    %3560 = vmatprep.subr.mxu0 0.0
    %3561 = vmatpush1.msra.mxu0 0.0
    %3562 = vmatprep.subr.mxu0 0.0
    %3563 = vmatpush1.msra.mxu0 0.0
    %3564 = vmatprep.subr.mxu0 0.0
    %3565 = vmatpush1.msra.mxu0 0.0
    %3566 = vmatprep.mubr.f32.mxu0 0.0
    %3567 = vmatmul.mubr.f32.gmra.mrb[0].mxu0 %v3501
    %v3568 = vpop.f32.mrb[0].mxu0
    %v3569 = vadd.f32 %v258, %v3568
    %v3570 = vpop.f32.mrb[0].mxu0
    %3571 = vdwg.mxu0
    %v3572 = vtanh.pop %v3569
    %3573 = vmatprep.subr.mxu0 0.0
    %3574 = vmatpush1.msra.mxu0 %v259
    %3575 = vmatprep.subr.mxu0 0.0
    %3576 = vmatpush1.msra.mxu0 %v260
    %3577 = vmatprep.subr.mxu0 0.0
    %3578 = vmatpush1.msra.mxu0 %v261
    %3579 = vmatprep.subr.mxu0 0.0
    %3580 = vmatpush1.msra.mxu0 %v262
    %3581 = vmatprep.subr.mxu0 0.0
    %3582 = vmatpush1.msra.mxu0 %v263
    %3583 = vmatprep.subr.mxu0 0.0
    %3584 = vmatpush1.msra.mxu0 %v264
    %3585 = vmatprep.subr.mxu0 0.0
    %3586 = vmatpush1.msra.mxu0 %v265
    %3587 = vmatprep.subr.mxu0 0.0
    %3588 = vmatpush1.msra.mxu0 %v266
    %3589 = vmatprep.subr.mxu0 0.0
    %3590 = vmatpush1.msra.mxu0 %v267
    %3591 = vmatprep.subr.mxu0 0.0
    %3592 = vmatpush1.msra.mxu0 %v268
    %3593 = vmatprep.subr.mxu0 0.0
    %3594 = vmatpush1.msra.mxu0 %v269
    %3595 = vmatprep.subr.mxu0 0.0
    %3596 = vmatpush1.msra.mxu0 %v270
    %3597 = vmatprep.subr.mxu0 0.0
    %3598 = vmatpush1.msra.mxu0 %v271
    %3599 = vmatprep.subr.mxu0 0.0
    %3600 = vmatpush1.msra.mxu0 %v272
    %3601 = vmatprep.subr.mxu0 0.0
    %3602 = vmatpush1.msra.mxu0 %v273
    %3603 = vmatprep.subr.mxu0 0.0
    %3604 = vmatpush1.msra.mxu0 %v274
    %3605 = vmatprep.subr.mxu0 0.0
    %3606 = vmatpush1.msra.mxu0 0.0
    %3607 = vmatprep.subr.mxu0 0.0
    %3608 = vmatpush1.msra.mxu0 0.0
    %3609 = vmatprep.subr.mxu0 0.0
    %3610 = vmatpush1.msra.mxu0 0.0
    %3611 = vmatprep.subr.mxu0 0.0
    %3612 = vmatpush1.msra.mxu0 0.0
    %3613 = vmatprep.subr.mxu0 0.0
    %3614 = vmatpush1.msra.mxu0 0.0
    %3615 = vmatprep.subr.mxu0 0.0
    %3616 = vmatpush1.msra.mxu0 0.0
    %3617 = vmatprep.subr.mxu0 0.0
    %3618 = vmatpush1.msra.mxu0 0.0
    %3619 = vmatprep.subr.mxu0 0.0
    %3620 = vmatpush1.msra.mxu0 0.0
    %3621 = vmatprep.subr.mxu0 0.0
    %3622 = vmatpush1.msra.mxu0 0.0
    %3623 = vmatprep.subr.mxu0 0.0
    %3624 = vmatpush1.msra.mxu0 0.0
    %3625 = vmatprep.subr.mxu0 0.0
    %3626 = vmatpush1.msra.mxu0 0.0
    %3627 = vmatprep.subr.mxu0 0.0
    %3628 = vmatpush1.msra.mxu0 0.0
    %3629 = vmatprep.subr.mxu0 0.0
    %3630 = vmatpush1.msra.mxu0 0.0
    %3631 = vmatprep.subr.mxu0 0.0
    %3632 = vmatpush1.msra.mxu0 0.0
    %3633 = vmatprep.subr.mxu0 0.0
    %3634 = vmatpush1.msra.mxu0 0.0
    %3635 = vmatprep.subr.mxu0 0.0
    %3636 = vmatpush1.msra.mxu0 0.0
    %3637 = vmatprep.mubr.f32.mxu0 0.0
    %3638 = vmatmul.mubr.f32.gmra.mrb[0].mxu0 %v3572
    %v3639 = vpop.f32.mrb[0].mxu0
    %v3640 = vadd.f32 %v275, %v3639
    %v3641 = vpop.f32.mrb[0].mxu0
    %3642 = vdwg.mxu0
    %3643 = vst [vmem:[#allocation14 + $0xb] sm:$0x1] %v3640
    %3644 = vmatprep.subr.mxu0 0.0
    %3645 = vmatpush1.msra.mxu0 %v276
    %3646 = vmatprep.subr.mxu0 0.0
    %3647 = vmatpush1.msra.mxu0 %v277
    %3648 = vmatprep.subr.mxu0 0.0
    %3649 = vmatpush1.msra.mxu0 %v278
    %3650 = vmatprep.subr.mxu0 0.0
    %3651 = vmatpush1.msra.mxu0 %v279
    %3652 = vmatprep.subr.mxu0 0.0
    %3653 = vmatpush1.msra.mxu0 %v280
    %3654 = vmatprep.subr.mxu0 0.0
    %3655 = vmatpush1.msra.mxu0 %v281
    %3656 = vmatprep.subr.mxu0 0.0
    %3657 = vmatpush1.msra.mxu0 %v282
    %3658 = vmatprep.subr.mxu0 0.0
    %3659 = vmatpush1.msra.mxu0 %v283
    %3660 = vmatprep.subr.mxu0 0.0
    %3661 = vmatpush1.msra.mxu0 %v284
    %3662 = vmatprep.subr.mxu0 0.0
    %3663 = vmatpush1.msra.mxu0 %v285
    %3664 = vmatprep.subr.mxu0 0.0
    %3665 = vmatpush1.msra.mxu0 %v286
    %3666 = vmatprep.subr.mxu0 0.0
    %3667 = vmatpush1.msra.mxu0 %v287
    %3668 = vmatprep.subr.mxu0 0.0
    %3669 = vmatpush1.msra.mxu0 %v288
    %3670 = vmatprep.subr.mxu0 0.0
    %3671 = vmatpush1.msra.mxu0 %v289
    %3672 = vmatprep.subr.mxu0 0.0
    %3673 = vmatpush1.msra.mxu0 %v290
    %3674 = vmatprep.subr.mxu0 0.0
    %3675 = vmatpush1.msra.mxu0 %v291
    %3676 = vmatprep.subr.mxu0 0.0
    %3677 = vmatpush1.msra.mxu0 0.0
    %3678 = vmatprep.subr.mxu0 0.0
    %3679 = vmatpush1.msra.mxu0 0.0
    %3680 = vmatprep.subr.mxu0 0.0
    %3681 = vmatpush1.msra.mxu0 0.0
    %3682 = vmatprep.subr.mxu0 0.0
    %3683 = vmatpush1.msra.mxu0 0.0
    %3684 = vmatprep.subr.mxu0 0.0
    %3685 = vmatpush1.msra.mxu0 0.0
    %3686 = vmatprep.subr.mxu0 0.0
    %3687 = vmatpush1.msra.mxu0 0.0
    %3688 = vmatprep.subr.mxu0 0.0
    %3689 = vmatpush1.msra.mxu0 0.0
    %3690 = vmatprep.subr.mxu0 0.0
    %3691 = vmatpush1.msra.mxu0 0.0
    %3692 = vmatprep.subr.mxu0 0.0
    %3693 = vmatpush1.msra.mxu0 0.0
    %3694 = vmatprep.subr.mxu0 0.0
    %3695 = vmatpush1.msra.mxu0 0.0
    %3696 = vmatprep.subr.mxu0 0.0
    %3697 = vmatpush1.msra.mxu0 0.0
    %3698 = vmatprep.subr.mxu0 0.0
    %3699 = vmatpush1.msra.mxu0 0.0
    %3700 = vmatprep.subr.mxu0 0.0
    %3701 = vmatpush1.msra.mxu0 0.0
    %3702 = vmatprep.subr.mxu0 0.0
    %3703 = vmatpush1.msra.mxu0 0.0
    %3704 = vmatprep.subr.mxu0 0.0
    %3705 = vmatpush1.msra.mxu0 0.0
    %3706 = vmatprep.subr.mxu0 0.0
    %3707 = vmatpush1.msra.mxu0 0.0
    %3708 = vmatprep.mubr.f32.mxu0 0.0
    %3709 = vmatmul.mubr.f32.gmra.mrb[0].mxu0 %v3572
    %v3710 = vpop.f32.mrb[0].mxu0
    %v3711 = vadd.f32 %v292, %v3710
    %v3712 = vpop.f32.mrb[0].mxu0
    %3713 = vdwg.mxu0
    %v3714 = vld [vmem:[#allocation2 + $0xc] sm:$0x1]
    %3715 = vmatprep.subr.mxu0 0.0
    %3716 = vmatpush1.msra.mxu0 %v226
    %3717 = vmatprep.subr.mxu0 0.0
    %3718 = vmatpush1.msra.mxu0 %v227
    %3719 = vmatprep.subr.mxu0 0.0
    %3720 = vmatpush1.msra.mxu0 %v228
    %3721 = vmatprep.subr.mxu0 0.0
    %3722 = vmatpush1.msra.mxu0 %v229
    %3723 = vmatprep.subr.mxu0 0.0
    %3724 = vmatpush1.msra.mxu0 %v230
    %3725 = vmatprep.subr.mxu0 0.0
    %3726 = vmatpush1.msra.mxu0 %v231
    %3727 = vmatprep.subr.mxu0 0.0
    %3728 = vmatpush1.msra.mxu0 %v232
    %3729 = vmatprep.subr.mxu0 0.0
    %3730 = vmatpush1.msra.mxu0 %v233
    %3731 = vmatprep.subr.mxu0 0.0
    %3732 = vmatpush1.msra.mxu0 %v234
    %3733 = vmatprep.subr.mxu0 0.0
    %3734 = vmatpush1.msra.mxu0 %v235
    %3735 = vmatprep.subr.mxu0 0.0
    %3736 = vmatpush1.msra.mxu0 %v236
    %3737 = vmatprep.subr.mxu0 0.0
    %3738 = vmatpush1.msra.mxu0 %v237
    %3739 = vmatprep.subr.mxu0 0.0
    %3740 = vmatpush1.msra.mxu0 %v238
    %3741 = vmatprep.subr.mxu0 0.0
    %3742 = vmatpush1.msra.mxu0 %v239
    %3743 = vmatprep.subr.mxu0 0.0
    %3744 = vmatpush1.msra.mxu0 %v240
    %3745 = vmatprep.subr.mxu0 0.0
    %3746 = vmatpush1.msra.mxu0 %v241
    %3747 = vmatprep.subr.mxu0 0.0
    %3748 = vmatpush1.msra.mxu0 0.0
    %3749 = vmatprep.subr.mxu0 0.0
    %3750 = vmatpush1.msra.mxu0 0.0
    %3751 = vmatprep.subr.mxu0 0.0
    %3752 = vmatpush1.msra.mxu0 0.0
    %3753 = vmatprep.subr.mxu0 0.0
    %3754 = vmatpush1.msra.mxu0 0.0
    %3755 = vmatprep.subr.mxu0 0.0
    %3756 = vmatpush1.msra.mxu0 0.0
    %3757 = vmatprep.subr.mxu0 0.0
    %3758 = vmatpush1.msra.mxu0 0.0
    %3759 = vmatprep.subr.mxu0 0.0
    %3760 = vmatpush1.msra.mxu0 0.0
    %3761 = vmatprep.subr.mxu0 0.0
    %3762 = vmatpush1.msra.mxu0 0.0
    %3763 = vmatprep.subr.mxu0 0.0
    %3764 = vmatpush1.msra.mxu0 0.0
    %3765 = vmatprep.subr.mxu0 0.0
    %3766 = vmatpush1.msra.mxu0 0.0
    %3767 = vmatprep.subr.mxu0 0.0
    %3768 = vmatpush1.msra.mxu0 0.0
    %3769 = vmatprep.subr.mxu0 0.0
    %3770 = vmatpush1.msra.mxu0 0.0
    %3771 = vmatprep.subr.mxu0 0.0
    %3772 = vmatpush1.msra.mxu0 0.0
    %3773 = vmatprep.subr.mxu0 0.0
    %3774 = vmatpush1.msra.mxu0 0.0
    %3775 = vmatprep.subr.mxu0 0.0
    %3776 = vmatpush1.msra.mxu0 0.0
    %3777 = vmatprep.subr.mxu0 0.0
    %3778 = vmatpush1.msra.mxu0 0.0
    %3779 = vmatprep.mubr.f32.mxu0 0.0
    %3780 = vmatmul.mubr.f32.gmra.mrb[0].mxu0 %v3711
    %v3781 = vpop.f32.mrb[0].mxu0
    %v3782 = vadd.f32 0.0, %v3781
    %v3783 = vpop.f32.mrb[0].mxu0
    %3784 = vdwg.mxu0
    %v3785 = vadd.f32 %v3714, %v3782
    %v3786 = vtanh.pop %v3785
    %3787 = vmatprep.subr.mxu0 0.0
    %3788 = vmatpush1.msra.mxu0 %v242
    %3789 = vmatprep.subr.mxu0 0.0
    %3790 = vmatpush1.msra.mxu0 %v243
    %3791 = vmatprep.subr.mxu0 0.0
    %3792 = vmatpush1.msra.mxu0 %v244
    %3793 = vmatprep.subr.mxu0 0.0
    %3794 = vmatpush1.msra.mxu0 %v245
    %3795 = vmatprep.subr.mxu0 0.0
    %3796 = vmatpush1.msra.mxu0 %v246
    %3797 = vmatprep.subr.mxu0 0.0
    %3798 = vmatpush1.msra.mxu0 %v247
    %3799 = vmatprep.subr.mxu0 0.0
    %3800 = vmatpush1.msra.mxu0 %v248
    %3801 = vmatprep.subr.mxu0 0.0
    %3802 = vmatpush1.msra.mxu0 %v249
    %3803 = vmatprep.subr.mxu0 0.0
    %3804 = vmatpush1.msra.mxu0 %v250
    %3805 = vmatprep.subr.mxu0 0.0
    %3806 = vmatpush1.msra.mxu0 %v251
    %3807 = vmatprep.subr.mxu0 0.0
    %3808 = vmatpush1.msra.mxu0 %v252
    %3809 = vmatprep.subr.mxu0 0.0
    %3810 = vmatpush1.msra.mxu0 %v253
    %3811 = vmatprep.subr.mxu0 0.0
    %3812 = vmatpush1.msra.mxu0 %v254
    %3813 = vmatprep.subr.mxu0 0.0
    %3814 = vmatpush1.msra.mxu0 %v255
    %3815 = vmatprep.subr.mxu0 0.0
    %3816 = vmatpush1.msra.mxu0 %v256
    %3817 = vmatprep.subr.mxu0 0.0
    %3818 = vmatpush1.msra.mxu0 %v257
    %3819 = vmatprep.subr.mxu0 0.0
    %3820 = vmatpush1.msra.mxu0 0.0
    %3821 = vmatprep.subr.mxu0 0.0
    %3822 = vmatpush1.msra.mxu0 0.0
    %3823 = vmatprep.subr.mxu0 0.0
    %3824 = vmatpush1.msra.mxu0 0.0
    %3825 = vmatprep.subr.mxu0 0.0
    %3826 = vmatpush1.msra.mxu0 0.0
    %3827 = vmatprep.subr.mxu0 0.0
    %3828 = vmatpush1.msra.mxu0 0.0
    %3829 = vmatprep.subr.mxu0 0.0
    %3830 = vmatpush1.msra.mxu0 0.0
    %3831 = vmatprep.subr.mxu0 0.0
    %3832 = vmatpush1.msra.mxu0 0.0
    %3833 = vmatprep.subr.mxu0 0.0
    %3834 = vmatpush1.msra.mxu0 0.0
    %3835 = vmatprep.subr.mxu0 0.0
    %3836 = vmatpush1.msra.mxu0 0.0
    %3837 = vmatprep.subr.mxu0 0.0
    %3838 = vmatpush1.msra.mxu0 0.0
    %3839 = vmatprep.subr.mxu0 0.0
    %3840 = vmatpush1.msra.mxu0 0.0
    %3841 = vmatprep.subr.mxu0 0.0
    %3842 = vmatpush1.msra.mxu0 0.0
    %3843 = vmatprep.subr.mxu0 0.0
    %3844 = vmatpush1.msra.mxu0 0.0
    %3845 = vmatprep.subr.mxu0 0.0
    %3846 = vmatpush1.msra.mxu0 0.0
    %3847 = vmatprep.subr.mxu0 0.0
    %3848 = vmatpush1.msra.mxu0 0.0
    %3849 = vmatprep.subr.mxu0 0.0
    %3850 = vmatpush1.msra.mxu0 0.0
    %3851 = vmatprep.mubr.f32.mxu0 0.0
    %3852 = vmatmul.mubr.f32.gmra.mrb[0].mxu0 %v3786
    %v3853 = vpop.f32.mrb[0].mxu0
    %v3854 = vadd.f32 %v258, %v3853
    %v3855 = vpop.f32.mrb[0].mxu0
    %3856 = vdwg.mxu0
    %v3857 = vtanh.pop %v3854
    %3858 = vmatprep.subr.mxu0 0.0
    %3859 = vmatpush1.msra.mxu0 %v259
    %3860 = vmatprep.subr.mxu0 0.0
    %3861 = vmatpush1.msra.mxu0 %v260
    %3862 = vmatprep.subr.mxu0 0.0
    %3863 = vmatpush1.msra.mxu0 %v261
    %3864 = vmatprep.subr.mxu0 0.0
    %3865 = vmatpush1.msra.mxu0 %v262
    %3866 = vmatprep.subr.mxu0 0.0
    %3867 = vmatpush1.msra.mxu0 %v263
    %3868 = vmatprep.subr.mxu0 0.0
    %3869 = vmatpush1.msra.mxu0 %v264
    %3870 = vmatprep.subr.mxu0 0.0
    %3871 = vmatpush1.msra.mxu0 %v265
    %3872 = vmatprep.subr.mxu0 0.0
    %3873 = vmatpush1.msra.mxu0 %v266
    %3874 = vmatprep.subr.mxu0 0.0
    %3875 = vmatpush1.msra.mxu0 %v267
    %3876 = vmatprep.subr.mxu0 0.0
    %3877 = vmatpush1.msra.mxu0 %v268
    %3878 = vmatprep.subr.mxu0 0.0
    %3879 = vmatpush1.msra.mxu0 %v269
    %3880 = vmatprep.subr.mxu0 0.0
    %3881 = vmatpush1.msra.mxu0 %v270
    %3882 = vmatprep.subr.mxu0 0.0
    %3883 = vmatpush1.msra.mxu0 %v271
    %3884 = vmatprep.subr.mxu0 0.0
    %3885 = vmatpush1.msra.mxu0 %v272
    %3886 = vmatprep.subr.mxu0 0.0
    %3887 = vmatpush1.msra.mxu0 %v273
    %3888 = vmatprep.subr.mxu0 0.0
    %3889 = vmatpush1.msra.mxu0 %v274
    %3890 = vmatprep.subr.mxu0 0.0
    %3891 = vmatpush1.msra.mxu0 0.0
    %3892 = vmatprep.subr.mxu0 0.0
    %3893 = vmatpush1.msra.mxu0 0.0
    %3894 = vmatprep.subr.mxu0 0.0
    %3895 = vmatpush1.msra.mxu0 0.0
    %3896 = vmatprep.subr.mxu0 0.0
    %3897 = vmatpush1.msra.mxu0 0.0
    %3898 = vmatprep.subr.mxu0 0.0
    %3899 = vmatpush1.msra.mxu0 0.0
    %3900 = vmatprep.subr.mxu0 0.0
    %3901 = vmatpush1.msra.mxu0 0.0
    %3902 = vmatprep.subr.mxu0 0.0
    %3903 = vmatpush1.msra.mxu0 0.0
    %3904 = vmatprep.subr.mxu0 0.0
    %3905 = vmatpush1.msra.mxu0 0.0
    %3906 = vmatprep.subr.mxu0 0.0
    %3907 = vmatpush1.msra.mxu0 0.0
    %3908 = vmatprep.subr.mxu0 0.0
    %3909 = vmatpush1.msra.mxu0 0.0
    %3910 = vmatprep.subr.mxu0 0.0
    %3911 = vmatpush1.msra.mxu0 0.0
    %3912 = vmatprep.subr.mxu0 0.0
    %3913 = vmatpush1.msra.mxu0 0.0
    %3914 = vmatprep.subr.mxu0 0.0
    %3915 = vmatpush1.msra.mxu0 0.0
    %3916 = vmatprep.subr.mxu0 0.0
    %3917 = vmatpush1.msra.mxu0 0.0
    %3918 = vmatprep.subr.mxu0 0.0
    %3919 = vmatpush1.msra.mxu0 0.0
    %3920 = vmatprep.subr.mxu0 0.0
    %3921 = vmatpush1.msra.mxu0 0.0
    %3922 = vmatprep.mubr.f32.mxu0 0.0
    %3923 = vmatmul.mubr.f32.gmra.mrb[0].mxu0 %v3857
    %v3924 = vpop.f32.mrb[0].mxu0
    %v3925 = vadd.f32 %v275, %v3924
    %v3926 = vpop.f32.mrb[0].mxu0
    %3927 = vdwg.mxu0
    %3928 = vst [vmem:[#allocation14 + $0xc] sm:$0x1] %v3925
    %3929 = vmatprep.subr.mxu0 0.0
    %3930 = vmatpush1.msra.mxu0 %v276
    %3931 = vmatprep.subr.mxu0 0.0
    %3932 = vmatpush1.msra.mxu0 %v277
    %3933 = vmatprep.subr.mxu0 0.0
    %3934 = vmatpush1.msra.mxu0 %v278
    %3935 = vmatprep.subr.mxu0 0.0
    %3936 = vmatpush1.msra.mxu0 %v279
    %3937 = vmatprep.subr.mxu0 0.0
    %3938 = vmatpush1.msra.mxu0 %v280
    %3939 = vmatprep.subr.mxu0 0.0
    %3940 = vmatpush1.msra.mxu0 %v281
    %3941 = vmatprep.subr.mxu0 0.0
    %3942 = vmatpush1.msra.mxu0 %v282
    %3943 = vmatprep.subr.mxu0 0.0
    %3944 = vmatpush1.msra.mxu0 %v283
    %3945 = vmatprep.subr.mxu0 0.0
    %3946 = vmatpush1.msra.mxu0 %v284
    %3947 = vmatprep.subr.mxu0 0.0
    %3948 = vmatpush1.msra.mxu0 %v285
    %3949 = vmatprep.subr.mxu0 0.0
    %3950 = vmatpush1.msra.mxu0 %v286
    %3951 = vmatprep.subr.mxu0 0.0
    %3952 = vmatpush1.msra.mxu0 %v287
    %3953 = vmatprep.subr.mxu0 0.0
    %3954 = vmatpush1.msra.mxu0 %v288
    %3955 = vmatprep.subr.mxu0 0.0
    %3956 = vmatpush1.msra.mxu0 %v289
    %3957 = vmatprep.subr.mxu0 0.0
    %3958 = vmatpush1.msra.mxu0 %v290
    %3959 = vmatprep.subr.mxu0 0.0
    %3960 = vmatpush1.msra.mxu0 %v291
    %3961 = vmatprep.subr.mxu0 0.0
    %3962 = vmatpush1.msra.mxu0 0.0
    %3963 = vmatprep.subr.mxu0 0.0
    %3964 = vmatpush1.msra.mxu0 0.0
    %3965 = vmatprep.subr.mxu0 0.0
    %3966 = vmatpush1.msra.mxu0 0.0
    %3967 = vmatprep.subr.mxu0 0.0
    %3968 = vmatpush1.msra.mxu0 0.0
    %3969 = vmatprep.subr.mxu0 0.0
    %3970 = vmatpush1.msra.mxu0 0.0
    %3971 = vmatprep.subr.mxu0 0.0
    %3972 = vmatpush1.msra.mxu0 0.0
    %3973 = vmatprep.subr.mxu0 0.0
    %3974 = vmatpush1.msra.mxu0 0.0
    %3975 = vmatprep.subr.mxu0 0.0
    %3976 = vmatpush1.msra.mxu0 0.0
    %3977 = vmatprep.subr.mxu0 0.0
    %3978 = vmatpush1.msra.mxu0 0.0
    %3979 = vmatprep.subr.mxu0 0.0
    %3980 = vmatpush1.msra.mxu0 0.0
    %3981 = vmatprep.subr.mxu0 0.0
    %3982 = vmatpush1.msra.mxu0 0.0
    %3983 = vmatprep.subr.mxu0 0.0
    %3984 = vmatpush1.msra.mxu0 0.0
    %3985 = vmatprep.subr.mxu0 0.0
    %3986 = vmatpush1.msra.mxu0 0.0
    %3987 = vmatprep.subr.mxu0 0.0
    %3988 = vmatpush1.msra.mxu0 0.0
    %3989 = vmatprep.subr.mxu0 0.0
    %3990 = vmatpush1.msra.mxu0 0.0
    %3991 = vmatprep.subr.mxu0 0.0
    %3992 = vmatpush1.msra.mxu0 0.0
    %3993 = vmatprep.mubr.f32.mxu0 0.0
    %3994 = vmatmul.mubr.f32.gmra.mrb[0].mxu0 %v3857
    %v3995 = vpop.f32.mrb[0].mxu0
    %v3996 = vadd.f32 %v292, %v3995
    %v3997 = vpop.f32.mrb[0].mxu0
    %3998 = vdwg.mxu0
    %v3999 = vld [vmem:[#allocation2 + $0xd] sm:$0x1]
    %4000 = vmatprep.subr.mxu0 0.0
    %4001 = vmatpush1.msra.mxu0 %v226
    %4002 = vmatprep.subr.mxu0 0.0
    %4003 = vmatpush1.msra.mxu0 %v227
    %4004 = vmatprep.subr.mxu0 0.0
    %4005 = vmatpush1.msra.mxu0 %v228
    %4006 = vmatprep.subr.mxu0 0.0
    %4007 = vmatpush1.msra.mxu0 %v229
    %4008 = vmatprep.subr.mxu0 0.0
    %4009 = vmatpush1.msra.mxu0 %v230
    %4010 = vmatprep.subr.mxu0 0.0
    %4011 = vmatpush1.msra.mxu0 %v231
    %4012 = vmatprep.subr.mxu0 0.0
    %4013 = vmatpush1.msra.mxu0 %v232
    %4014 = vmatprep.subr.mxu0 0.0
    %4015 = vmatpush1.msra.mxu0 %v233
    %4016 = vmatprep.subr.mxu0 0.0
    %4017 = vmatpush1.msra.mxu0 %v234
    %4018 = vmatprep.subr.mxu0 0.0
    %4019 = vmatpush1.msra.mxu0 %v235
    %4020 = vmatprep.subr.mxu0 0.0
    %4021 = vmatpush1.msra.mxu0 %v236
    %4022 = vmatprep.subr.mxu0 0.0
    %4023 = vmatpush1.msra.mxu0 %v237
    %4024 = vmatprep.subr.mxu0 0.0
    %4025 = vmatpush1.msra.mxu0 %v238
    %4026 = vmatprep.subr.mxu0 0.0
    %4027 = vmatpush1.msra.mxu0 %v239
    %4028 = vmatprep.subr.mxu0 0.0
    %4029 = vmatpush1.msra.mxu0 %v240
    %4030 = vmatprep.subr.mxu0 0.0
    %4031 = vmatpush1.msra.mxu0 %v241
    %4032 = vmatprep.subr.mxu0 0.0
    %4033 = vmatpush1.msra.mxu0 0.0
    %4034 = vmatprep.subr.mxu0 0.0
    %4035 = vmatpush1.msra.mxu0 0.0
    %4036 = vmatprep.subr.mxu0 0.0
    %4037 = vmatpush1.msra.mxu0 0.0
    %4038 = vmatprep.subr.mxu0 0.0
    %4039 = vmatpush1.msra.mxu0 0.0
    %4040 = vmatprep.subr.mxu0 0.0
    %4041 = vmatpush1.msra.mxu0 0.0
    %4042 = vmatprep.subr.mxu0 0.0
    %4043 = vmatpush1.msra.mxu0 0.0
    %4044 = vmatprep.subr.mxu0 0.0
    %4045 = vmatpush1.msra.mxu0 0.0
    %4046 = vmatprep.subr.mxu0 0.0
    %4047 = vmatpush1.msra.mxu0 0.0
    %4048 = vmatprep.subr.mxu0 0.0
    %4049 = vmatpush1.msra.mxu0 0.0
    %4050 = vmatprep.subr.mxu0 0.0
    %4051 = vmatpush1.msra.mxu0 0.0
    %4052 = vmatprep.subr.mxu0 0.0
    %4053 = vmatpush1.msra.mxu0 0.0
    %4054 = vmatprep.subr.mxu0 0.0
    %4055 = vmatpush1.msra.mxu0 0.0
    %4056 = vmatprep.subr.mxu0 0.0
    %4057 = vmatpush1.msra.mxu0 0.0
    %4058 = vmatprep.subr.mxu0 0.0
    %4059 = vmatpush1.msra.mxu0 0.0
    %4060 = vmatprep.subr.mxu0 0.0
    %4061 = vmatpush1.msra.mxu0 0.0
    %4062 = vmatprep.subr.mxu0 0.0
    %4063 = vmatpush1.msra.mxu0 0.0
    %4064 = vmatprep.mubr.f32.mxu0 0.0
    %4065 = vmatmul.mubr.f32.gmra.mrb[0].mxu0 %v3996
    %v4066 = vpop.f32.mrb[0].mxu0
    %v4067 = vadd.f32 0.0, %v4066
    %v4068 = vpop.f32.mrb[0].mxu0
    %4069 = vdwg.mxu0
    %v4070 = vadd.f32 %v3999, %v4067
    %v4071 = vtanh.pop %v4070
    %4072 = vmatprep.subr.mxu0 0.0
    %4073 = vmatpush1.msra.mxu0 %v242
    %4074 = vmatprep.subr.mxu0 0.0
    %4075 = vmatpush1.msra.mxu0 %v243
    %4076 = vmatprep.subr.mxu0 0.0
    %4077 = vmatpush1.msra.mxu0 %v244
    %4078 = vmatprep.subr.mxu0 0.0
    %4079 = vmatpush1.msra.mxu0 %v245
    %4080 = vmatprep.subr.mxu0 0.0
    %4081 = vmatpush1.msra.mxu0 %v246
    %4082 = vmatprep.subr.mxu0 0.0
    %4083 = vmatpush1.msra.mxu0 %v247
    %4084 = vmatprep.subr.mxu0 0.0
    %4085 = vmatpush1.msra.mxu0 %v248
    %4086 = vmatprep.subr.mxu0 0.0
    %4087 = vmatpush1.msra.mxu0 %v249
    %4088 = vmatprep.subr.mxu0 0.0
    %4089 = vmatpush1.msra.mxu0 %v250
    %4090 = vmatprep.subr.mxu0 0.0
    %4091 = vmatpush1.msra.mxu0 %v251
    %4092 = vmatprep.subr.mxu0 0.0
    %4093 = vmatpush1.msra.mxu0 %v252
    %4094 = vmatprep.subr.mxu0 0.0
    %4095 = vmatpush1.msra.mxu0 %v253
    %4096 = vmatprep.subr.mxu0 0.0
    %4097 = vmatpush1.msra.mxu0 %v254
    %4098 = vmatprep.subr.mxu0 0.0
    %4099 = vmatpush1.msra.mxu0 %v255
    %4100 = vmatprep.subr.mxu0 0.0
    %4101 = vmatpush1.msra.mxu0 %v256
    %4102 = vmatprep.subr.mxu0 0.0
    %4103 = vmatpush1.msra.mxu0 %v257
    %4104 = vmatprep.subr.mxu0 0.0
    %4105 = vmatpush1.msra.mxu0 0.0
    %4106 = vmatprep.subr.mxu0 0.0
    %4107 = vmatpush1.msra.mxu0 0.0
    %4108 = vmatprep.subr.mxu0 0.0
    %4109 = vmatpush1.msra.mxu0 0.0
    %4110 = vmatprep.subr.mxu0 0.0
    %4111 = vmatpush1.msra.mxu0 0.0
    %4112 = vmatprep.subr.mxu0 0.0
    %4113 = vmatpush1.msra.mxu0 0.0
    %4114 = vmatprep.subr.mxu0 0.0
    %4115 = vmatpush1.msra.mxu0 0.0
    %4116 = vmatprep.subr.mxu0 0.0
    %4117 = vmatpush1.msra.mxu0 0.0
    %4118 = vmatprep.subr.mxu0 0.0
    %4119 = vmatpush1.msra.mxu0 0.0
    %4120 = vmatprep.subr.mxu0 0.0
    %4121 = vmatpush1.msra.mxu0 0.0
    %4122 = vmatprep.subr.mxu0 0.0
    %4123 = vmatpush1.msra.mxu0 0.0
    %4124 = vmatprep.subr.mxu0 0.0
    %4125 = vmatpush1.msra.mxu0 0.0
    %4126 = vmatprep.subr.mxu0 0.0
    %4127 = vmatpush1.msra.mxu0 0.0
    %4128 = vmatprep.subr.mxu0 0.0
    %4129 = vmatpush1.msra.mxu0 0.0
    %4130 = vmatprep.subr.mxu0 0.0
    %4131 = vmatpush1.msra.mxu0 0.0
    %4132 = vmatprep.subr.mxu0 0.0
    %4133 = vmatpush1.msra.mxu0 0.0
    %4134 = vmatprep.subr.mxu0 0.0
    %4135 = vmatpush1.msra.mxu0 0.0
    %4136 = vmatprep.mubr.f32.mxu0 0.0
    %4137 = vmatmul.mubr.f32.gmra.mrb[0].mxu0 %v4071
    %v4138 = vpop.f32.mrb[0].mxu0
    %v4139 = vadd.f32 %v258, %v4138
    %v4140 = vpop.f32.mrb[0].mxu0
    %4141 = vdwg.mxu0
    %v4142 = vtanh.pop %v4139
    %4143 = vmatprep.subr.mxu0 0.0
    %4144 = vmatpush1.msra.mxu0 %v259
    %4145 = vmatprep.subr.mxu0 0.0
    %4146 = vmatpush1.msra.mxu0 %v260
    %4147 = vmatprep.subr.mxu0 0.0
    %4148 = vmatpush1.msra.mxu0 %v261
    %4149 = vmatprep.subr.mxu0 0.0
    %4150 = vmatpush1.msra.mxu0 %v262
    %4151 = vmatprep.subr.mxu0 0.0
    %4152 = vmatpush1.msra.mxu0 %v263
    %4153 = vmatprep.subr.mxu0 0.0
    %4154 = vmatpush1.msra.mxu0 %v264
    %4155 = vmatprep.subr.mxu0 0.0
    %4156 = vmatpush1.msra.mxu0 %v265
    %4157 = vmatprep.subr.mxu0 0.0
    %4158 = vmatpush1.msra.mxu0 %v266
    %4159 = vmatprep.subr.mxu0 0.0
    %4160 = vmatpush1.msra.mxu0 %v267
    %4161 = vmatprep.subr.mxu0 0.0
    %4162 = vmatpush1.msra.mxu0 %v268
    %4163 = vmatprep.subr.mxu0 0.0
    %4164 = vmatpush1.msra.mxu0 %v269
    %4165 = vmatprep.subr.mxu0 0.0
    %4166 = vmatpush1.msra.mxu0 %v270
    %4167 = vmatprep.subr.mxu0 0.0
    %4168 = vmatpush1.msra.mxu0 %v271
    %4169 = vmatprep.subr.mxu0 0.0
    %4170 = vmatpush1.msra.mxu0 %v272
    %4171 = vmatprep.subr.mxu0 0.0
    %4172 = vmatpush1.msra.mxu0 %v273
    %4173 = vmatprep.subr.mxu0 0.0
    %4174 = vmatpush1.msra.mxu0 %v274
    %4175 = vmatprep.subr.mxu0 0.0
    %4176 = vmatpush1.msra.mxu0 0.0
    %4177 = vmatprep.subr.mxu0 0.0
    %4178 = vmatpush1.msra.mxu0 0.0
    %4179 = vmatprep.subr.mxu0 0.0
    %4180 = vmatpush1.msra.mxu0 0.0
    %4181 = vmatprep.subr.mxu0 0.0
    %4182 = vmatpush1.msra.mxu0 0.0
    %4183 = vmatprep.subr.mxu0 0.0
    %4184 = vmatpush1.msra.mxu0 0.0
    %4185 = vmatprep.subr.mxu0 0.0
    %4186 = vmatpush1.msra.mxu0 0.0
    %4187 = vmatprep.subr.mxu0 0.0
    %4188 = vmatpush1.msra.mxu0 0.0
    %4189 = vmatprep.subr.mxu0 0.0
    %4190 = vmatpush1.msra.mxu0 0.0
    %4191 = vmatprep.subr.mxu0 0.0
    %4192 = vmatpush1.msra.mxu0 0.0
    %4193 = vmatprep.subr.mxu0 0.0
    %4194 = vmatpush1.msra.mxu0 0.0
    %4195 = vmatprep.subr.mxu0 0.0
    %4196 = vmatpush1.msra.mxu0 0.0
    %4197 = vmatprep.subr.mxu0 0.0
    %4198 = vmatpush1.msra.mxu0 0.0
    %4199 = vmatprep.subr.mxu0 0.0
    %4200 = vmatpush1.msra.mxu0 0.0
    %4201 = vmatprep.subr.mxu0 0.0
    %4202 = vmatpush1.msra.mxu0 0.0
    %4203 = vmatprep.subr.mxu0 0.0
    %4204 = vmatpush1.msra.mxu0 0.0
    %4205 = vmatprep.subr.mxu0 0.0
    %4206 = vmatpush1.msra.mxu0 0.0
    %4207 = vmatprep.mubr.f32.mxu0 0.0
    %4208 = vmatmul.mubr.f32.gmra.mrb[0].mxu0 %v4142
    %v4209 = vpop.f32.mrb[0].mxu0
    %v4210 = vadd.f32 %v275, %v4209
    %v4211 = vpop.f32.mrb[0].mxu0
    %4212 = vdwg.mxu0
    %4213 = vst [vmem:[#allocation14 + $0xd] sm:$0x1] %v4210
    %4214 = vmatprep.subr.mxu0 0.0
    %4215 = vmatpush1.msra.mxu0 %v276
    %4216 = vmatprep.subr.mxu0 0.0
    %4217 = vmatpush1.msra.mxu0 %v277
    %4218 = vmatprep.subr.mxu0 0.0
    %4219 = vmatpush1.msra.mxu0 %v278
    %4220 = vmatprep.subr.mxu0 0.0
    %4221 = vmatpush1.msra.mxu0 %v279
    %4222 = vmatprep.subr.mxu0 0.0
    %4223 = vmatpush1.msra.mxu0 %v280
    %4224 = vmatprep.subr.mxu0 0.0
    %4225 = vmatpush1.msra.mxu0 %v281
    %4226 = vmatprep.subr.mxu0 0.0
    %4227 = vmatpush1.msra.mxu0 %v282
    %4228 = vmatprep.subr.mxu0 0.0
    %4229 = vmatpush1.msra.mxu0 %v283
    %4230 = vmatprep.subr.mxu0 0.0
    %4231 = vmatpush1.msra.mxu0 %v284
    %4232 = vmatprep.subr.mxu0 0.0
    %4233 = vmatpush1.msra.mxu0 %v285
    %4234 = vmatprep.subr.mxu0 0.0
    %4235 = vmatpush1.msra.mxu0 %v286
    %4236 = vmatprep.subr.mxu0 0.0
    %4237 = vmatpush1.msra.mxu0 %v287
    %4238 = vmatprep.subr.mxu0 0.0
    %4239 = vmatpush1.msra.mxu0 %v288
    %4240 = vmatprep.subr.mxu0 0.0
    %4241 = vmatpush1.msra.mxu0 %v289
    %4242 = vmatprep.subr.mxu0 0.0
    %4243 = vmatpush1.msra.mxu0 %v290
    %4244 = vmatprep.subr.mxu0 0.0
    %4245 = vmatpush1.msra.mxu0 %v291
    %4246 = vmatprep.subr.mxu0 0.0
    %4247 = vmatpush1.msra.mxu0 0.0
    %4248 = vmatprep.subr.mxu0 0.0
    %4249 = vmatpush1.msra.mxu0 0.0
    %4250 = vmatprep.subr.mxu0 0.0
    %4251 = vmatpush1.msra.mxu0 0.0
    %4252 = vmatprep.subr.mxu0 0.0
    %4253 = vmatpush1.msra.mxu0 0.0
    %4254 = vmatprep.subr.mxu0 0.0
    %4255 = vmatpush1.msra.mxu0 0.0
    %4256 = vmatprep.subr.mxu0 0.0
    %4257 = vmatpush1.msra.mxu0 0.0
    %4258 = vmatprep.subr.mxu0 0.0
    %4259 = vmatpush1.msra.mxu0 0.0
    %4260 = vmatprep.subr.mxu0 0.0
    %4261 = vmatpush1.msra.mxu0 0.0
    %4262 = vmatprep.subr.mxu0 0.0
    %4263 = vmatpush1.msra.mxu0 0.0
    %4264 = vmatprep.subr.mxu0 0.0
    %4265 = vmatpush1.msra.mxu0 0.0
    %4266 = vmatprep.subr.mxu0 0.0
    %4267 = vmatpush1.msra.mxu0 0.0
    %4268 = vmatprep.subr.mxu0 0.0
    %4269 = vmatpush1.msra.mxu0 0.0
    %4270 = vmatprep.subr.mxu0 0.0
    %4271 = vmatpush1.msra.mxu0 0.0
    %4272 = vmatprep.subr.mxu0 0.0
    %4273 = vmatpush1.msra.mxu0 0.0
    %4274 = vmatprep.subr.mxu0 0.0
    %4275 = vmatpush1.msra.mxu0 0.0
    %4276 = vmatprep.subr.mxu0 0.0
    %4277 = vmatpush1.msra.mxu0 0.0
    %4278 = vmatprep.mubr.f32.mxu0 0.0
    %4279 = vmatmul.mubr.f32.gmra.mrb[0].mxu0 %v4142
    %v4280 = vpop.f32.mrb[0].mxu0
    %v4281 = vadd.f32 %v292, %v4280
    %v4282 = vpop.f32.mrb[0].mxu0
    %4283 = vdwg.mxu0
    %v4284 = vld [vmem:[#allocation2 + $0xe] sm:$0x1]
    %4285 = vmatprep.subr.mxu0 0.0
    %4286 = vmatpush1.msra.mxu0 %v226
    %4287 = vmatprep.subr.mxu0 0.0
    %4288 = vmatpush1.msra.mxu0 %v227
    %4289 = vmatprep.subr.mxu0 0.0
    %4290 = vmatpush1.msra.mxu0 %v228
    %4291 = vmatprep.subr.mxu0 0.0
    %4292 = vmatpush1.msra.mxu0 %v229
    %4293 = vmatprep.subr.mxu0 0.0
    %4294 = vmatpush1.msra.mxu0 %v230
    %4295 = vmatprep.subr.mxu0 0.0
    %4296 = vmatpush1.msra.mxu0 %v231
    %4297 = vmatprep.subr.mxu0 0.0
    %4298 = vmatpush1.msra.mxu0 %v232
    %4299 = vmatprep.subr.mxu0 0.0
    %4300 = vmatpush1.msra.mxu0 %v233
    %4301 = vmatprep.subr.mxu0 0.0
    %4302 = vmatpush1.msra.mxu0 %v234
    %4303 = vmatprep.subr.mxu0 0.0
    %4304 = vmatpush1.msra.mxu0 %v235
    %4305 = vmatprep.subr.mxu0 0.0
    %4306 = vmatpush1.msra.mxu0 %v236
    %4307 = vmatprep.subr.mxu0 0.0
    %4308 = vmatpush1.msra.mxu0 %v237
    %4309 = vmatprep.subr.mxu0 0.0
    %4310 = vmatpush1.msra.mxu0 %v238
    %4311 = vmatprep.subr.mxu0 0.0
    %4312 = vmatpush1.msra.mxu0 %v239
    %4313 = vmatprep.subr.mxu0 0.0
    %4314 = vmatpush1.msra.mxu0 %v240
    %4315 = vmatprep.subr.mxu0 0.0
    %4316 = vmatpush1.msra.mxu0 %v241
    %4317 = vmatprep.subr.mxu0 0.0
    %4318 = vmatpush1.msra.mxu0 0.0
    %4319 = vmatprep.subr.mxu0 0.0
    %4320 = vmatpush1.msra.mxu0 0.0
    %4321 = vmatprep.subr.mxu0 0.0
    %4322 = vmatpush1.msra.mxu0 0.0
    %4323 = vmatprep.subr.mxu0 0.0
    %4324 = vmatpush1.msra.mxu0 0.0
    %4325 = vmatprep.subr.mxu0 0.0
    %4326 = vmatpush1.msra.mxu0 0.0
    %4327 = vmatprep.subr.mxu0 0.0
    %4328 = vmatpush1.msra.mxu0 0.0
    %4329 = vmatprep.subr.mxu0 0.0
    %4330 = vmatpush1.msra.mxu0 0.0
    %4331 = vmatprep.subr.mxu0 0.0
    %4332 = vmatpush1.msra.mxu0 0.0
    %4333 = vmatprep.subr.mxu0 0.0
    %4334 = vmatpush1.msra.mxu0 0.0
    %4335 = vmatprep.subr.mxu0 0.0
    %4336 = vmatpush1.msra.mxu0 0.0
    %4337 = vmatprep.subr.mxu0 0.0
    %4338 = vmatpush1.msra.mxu0 0.0
    %4339 = vmatprep.subr.mxu0 0.0
    %4340 = vmatpush1.msra.mxu0 0.0
    %4341 = vmatprep.subr.mxu0 0.0
    %4342 = vmatpush1.msra.mxu0 0.0
    %4343 = vmatprep.subr.mxu0 0.0
    %4344 = vmatpush1.msra.mxu0 0.0
    %4345 = vmatprep.subr.mxu0 0.0
    %4346 = vmatpush1.msra.mxu0 0.0
    %4347 = vmatprep.subr.mxu0 0.0
    %4348 = vmatpush1.msra.mxu0 0.0
    %4349 = vmatprep.mubr.f32.mxu0 0.0
    %4350 = vmatmul.mubr.f32.gmra.mrb[0].mxu0 %v4281
    %v4351 = vpop.f32.mrb[0].mxu0
    %v4352 = vadd.f32 0.0, %v4351
    %v4353 = vpop.f32.mrb[0].mxu0
    %4354 = vdwg.mxu0
    %v4355 = vadd.f32 %v4284, %v4352
    %v4356 = vtanh.pop %v4355
    %4357 = vmatprep.subr.mxu0 0.0
    %4358 = vmatpush1.msra.mxu0 %v242
    %4359 = vmatprep.subr.mxu0 0.0
    %4360 = vmatpush1.msra.mxu0 %v243
    %4361 = vmatprep.subr.mxu0 0.0
    %4362 = vmatpush1.msra.mxu0 %v244
    %4363 = vmatprep.subr.mxu0 0.0
    %4364 = vmatpush1.msra.mxu0 %v245
    %4365 = vmatprep.subr.mxu0 0.0
    %4366 = vmatpush1.msra.mxu0 %v246
    %4367 = vmatprep.subr.mxu0 0.0
    %4368 = vmatpush1.msra.mxu0 %v247
    %4369 = vmatprep.subr.mxu0 0.0
    %4370 = vmatpush1.msra.mxu0 %v248
    %4371 = vmatprep.subr.mxu0 0.0
    %4372 = vmatpush1.msra.mxu0 %v249
    %4373 = vmatprep.subr.mxu0 0.0
    %4374 = vmatpush1.msra.mxu0 %v250
    %4375 = vmatprep.subr.mxu0 0.0
    %4376 = vmatpush1.msra.mxu0 %v251
    %4377 = vmatprep.subr.mxu0 0.0
    %4378 = vmatpush1.msra.mxu0 %v252
    %4379 = vmatprep.subr.mxu0 0.0
    %4380 = vmatpush1.msra.mxu0 %v253
    %4381 = vmatprep.subr.mxu0 0.0
    %4382 = vmatpush1.msra.mxu0 %v254
    %4383 = vmatprep.subr.mxu0 0.0
    %4384 = vmatpush1.msra.mxu0 %v255
    %4385 = vmatprep.subr.mxu0 0.0
    %4386 = vmatpush1.msra.mxu0 %v256
    %4387 = vmatprep.subr.mxu0 0.0
    %4388 = vmatpush1.msra.mxu0 %v257
    %4389 = vmatprep.subr.mxu0 0.0
    %4390 = vmatpush1.msra.mxu0 0.0
    %4391 = vmatprep.subr.mxu0 0.0
    %4392 = vmatpush1.msra.mxu0 0.0
    %4393 = vmatprep.subr.mxu0 0.0
    %4394 = vmatpush1.msra.mxu0 0.0
    %4395 = vmatprep.subr.mxu0 0.0
    %4396 = vmatpush1.msra.mxu0 0.0
    %4397 = vmatprep.subr.mxu0 0.0
    %4398 = vmatpush1.msra.mxu0 0.0
    %4399 = vmatprep.subr.mxu0 0.0
    %4400 = vmatpush1.msra.mxu0 0.0
    %4401 = vmatprep.subr.mxu0 0.0
    %4402 = vmatpush1.msra.mxu0 0.0
    %4403 = vmatprep.subr.mxu0 0.0
    %4404 = vmatpush1.msra.mxu0 0.0
    %4405 = vmatprep.subr.mxu0 0.0
    %4406 = vmatpush1.msra.mxu0 0.0
    %4407 = vmatprep.subr.mxu0 0.0
    %4408 = vmatpush1.msra.mxu0 0.0
    %4409 = vmatprep.subr.mxu0 0.0
    %4410 = vmatpush1.msra.mxu0 0.0
    %4411 = vmatprep.subr.mxu0 0.0
    %4412 = vmatpush1.msra.mxu0 0.0
    %4413 = vmatprep.subr.mxu0 0.0
    %4414 = vmatpush1.msra.mxu0 0.0
    %4415 = vmatprep.subr.mxu0 0.0
    %4416 = vmatpush1.msra.mxu0 0.0
    %4417 = vmatprep.subr.mxu0 0.0
    %4418 = vmatpush1.msra.mxu0 0.0
    %4419 = vmatprep.subr.mxu0 0.0
    %4420 = vmatpush1.msra.mxu0 0.0
    %4421 = vmatprep.mubr.f32.mxu0 0.0
    %4422 = vmatmul.mubr.f32.gmra.mrb[0].mxu0 %v4356
    %v4423 = vpop.f32.mrb[0].mxu0
    %v4424 = vadd.f32 %v258, %v4423
    %v4425 = vpop.f32.mrb[0].mxu0
    %4426 = vdwg.mxu0
    %v4427 = vtanh.pop %v4424
    %4428 = vmatprep.subr.mxu0 0.0
    %4429 = vmatpush1.msra.mxu0 %v259
    %4430 = vmatprep.subr.mxu0 0.0
    %4431 = vmatpush1.msra.mxu0 %v260
    %4432 = vmatprep.subr.mxu0 0.0
    %4433 = vmatpush1.msra.mxu0 %v261
    %4434 = vmatprep.subr.mxu0 0.0
    %4435 = vmatpush1.msra.mxu0 %v262
    %4436 = vmatprep.subr.mxu0 0.0
    %4437 = vmatpush1.msra.mxu0 %v263
    %4438 = vmatprep.subr.mxu0 0.0
    %4439 = vmatpush1.msra.mxu0 %v264
    %4440 = vmatprep.subr.mxu0 0.0
    %4441 = vmatpush1.msra.mxu0 %v265
    %4442 = vmatprep.subr.mxu0 0.0
    %4443 = vmatpush1.msra.mxu0 %v266
    %4444 = vmatprep.subr.mxu0 0.0
    %4445 = vmatpush1.msra.mxu0 %v267
    %4446 = vmatprep.subr.mxu0 0.0
    %4447 = vmatpush1.msra.mxu0 %v268
    %4448 = vmatprep.subr.mxu0 0.0
    %4449 = vmatpush1.msra.mxu0 %v269
    %4450 = vmatprep.subr.mxu0 0.0
    %4451 = vmatpush1.msra.mxu0 %v270
    %4452 = vmatprep.subr.mxu0 0.0
    %4453 = vmatpush1.msra.mxu0 %v271
    %4454 = vmatprep.subr.mxu0 0.0
    %4455 = vmatpush1.msra.mxu0 %v272
    %4456 = vmatprep.subr.mxu0 0.0
    %4457 = vmatpush1.msra.mxu0 %v273
    %4458 = vmatprep.subr.mxu0 0.0
    %4459 = vmatpush1.msra.mxu0 %v274
    %4460 = vmatprep.subr.mxu0 0.0
    %4461 = vmatpush1.msra.mxu0 0.0
    %4462 = vmatprep.subr.mxu0 0.0
    %4463 = vmatpush1.msra.mxu0 0.0
    %4464 = vmatprep.subr.mxu0 0.0
    %4465 = vmatpush1.msra.mxu0 0.0
    %4466 = vmatprep.subr.mxu0 0.0
    %4467 = vmatpush1.msra.mxu0 0.0
    %4468 = vmatprep.subr.mxu0 0.0
    %4469 = vmatpush1.msra.mxu0 0.0
    %4470 = vmatprep.subr.mxu0 0.0
    %4471 = vmatpush1.msra.mxu0 0.0
    %4472 = vmatprep.subr.mxu0 0.0
    %4473 = vmatpush1.msra.mxu0 0.0
    %4474 = vmatprep.subr.mxu0 0.0
    %4475 = vmatpush1.msra.mxu0 0.0
    %4476 = vmatprep.subr.mxu0 0.0
    %4477 = vmatpush1.msra.mxu0 0.0
    %4478 = vmatprep.subr.mxu0 0.0
    %4479 = vmatpush1.msra.mxu0 0.0
    %4480 = vmatprep.subr.mxu0 0.0
    %4481 = vmatpush1.msra.mxu0 0.0
    %4482 = vmatprep.subr.mxu0 0.0
    %4483 = vmatpush1.msra.mxu0 0.0
    %4484 = vmatprep.subr.mxu0 0.0
    %4485 = vmatpush1.msra.mxu0 0.0
    %4486 = vmatprep.subr.mxu0 0.0
    %4487 = vmatpush1.msra.mxu0 0.0
    %4488 = vmatprep.subr.mxu0 0.0
    %4489 = vmatpush1.msra.mxu0 0.0
    %4490 = vmatprep.subr.mxu0 0.0
    %4491 = vmatpush1.msra.mxu0 0.0
    %4492 = vmatprep.mubr.f32.mxu0 0.0
    %4493 = vmatmul.mubr.f32.gmra.mrb[0].mxu0 %v4427
    %v4494 = vpop.f32.mrb[0].mxu0
    %v4495 = vadd.f32 %v275, %v4494
    %v4496 = vpop.f32.mrb[0].mxu0
    %4497 = vdwg.mxu0
    %4498 = vst [vmem:[#allocation14 + $0xe] sm:$0x1] %v4495
    %4499 = vmatprep.subr.mxu0 0.0
    %4500 = vmatpush1.msra.mxu0 %v276
    %4501 = vmatprep.subr.mxu0 0.0
    %4502 = vmatpush1.msra.mxu0 %v277
    %4503 = vmatprep.subr.mxu0 0.0
    %4504 = vmatpush1.msra.mxu0 %v278
    %4505 = vmatprep.subr.mxu0 0.0
    %4506 = vmatpush1.msra.mxu0 %v279
    %4507 = vmatprep.subr.mxu0 0.0
    %4508 = vmatpush1.msra.mxu0 %v280
    %4509 = vmatprep.subr.mxu0 0.0
    %4510 = vmatpush1.msra.mxu0 %v281
    %4511 = vmatprep.subr.mxu0 0.0
    %4512 = vmatpush1.msra.mxu0 %v282
    %4513 = vmatprep.subr.mxu0 0.0
    %4514 = vmatpush1.msra.mxu0 %v283
    %4515 = vmatprep.subr.mxu0 0.0
    %4516 = vmatpush1.msra.mxu0 %v284
    %4517 = vmatprep.subr.mxu0 0.0
    %4518 = vmatpush1.msra.mxu0 %v285
    %4519 = vmatprep.subr.mxu0 0.0
    %4520 = vmatpush1.msra.mxu0 %v286
    %4521 = vmatprep.subr.mxu0 0.0
    %4522 = vmatpush1.msra.mxu0 %v287
    %4523 = vmatprep.subr.mxu0 0.0
    %4524 = vmatpush1.msra.mxu0 %v288
    %4525 = vmatprep.subr.mxu0 0.0
    %4526 = vmatpush1.msra.mxu0 %v289
    %4527 = vmatprep.subr.mxu0 0.0
    %4528 = vmatpush1.msra.mxu0 %v290
    %4529 = vmatprep.subr.mxu0 0.0
    %4530 = vmatpush1.msra.mxu0 %v291
    %4531 = vmatprep.subr.mxu0 0.0
    %4532 = vmatpush1.msra.mxu0 0.0
    %4533 = vmatprep.subr.mxu0 0.0
    %4534 = vmatpush1.msra.mxu0 0.0
    %4535 = vmatprep.subr.mxu0 0.0
    %4536 = vmatpush1.msra.mxu0 0.0
    %4537 = vmatprep.subr.mxu0 0.0
    %4538 = vmatpush1.msra.mxu0 0.0
    %4539 = vmatprep.subr.mxu0 0.0
    %4540 = vmatpush1.msra.mxu0 0.0
    %4541 = vmatprep.subr.mxu0 0.0
    %4542 = vmatpush1.msra.mxu0 0.0
    %4543 = vmatprep.subr.mxu0 0.0
    %4544 = vmatpush1.msra.mxu0 0.0
    %4545 = vmatprep.subr.mxu0 0.0
    %4546 = vmatpush1.msra.mxu0 0.0
    %4547 = vmatprep.subr.mxu0 0.0
    %4548 = vmatpush1.msra.mxu0 0.0
    %4549 = vmatprep.subr.mxu0 0.0
    %4550 = vmatpush1.msra.mxu0 0.0
    %4551 = vmatprep.subr.mxu0 0.0
    %4552 = vmatpush1.msra.mxu0 0.0
    %4553 = vmatprep.subr.mxu0 0.0
    %4554 = vmatpush1.msra.mxu0 0.0
    %4555 = vmatprep.subr.mxu0 0.0
    %4556 = vmatpush1.msra.mxu0 0.0
    %4557 = vmatprep.subr.mxu0 0.0
    %4558 = vmatpush1.msra.mxu0 0.0
    %4559 = vmatprep.subr.mxu0 0.0
    %4560 = vmatpush1.msra.mxu0 0.0
    %4561 = vmatprep.subr.mxu0 0.0
    %4562 = vmatpush1.msra.mxu0 0.0
    %4563 = vmatprep.mubr.f32.mxu0 0.0
    %4564 = vmatmul.mubr.f32.gmra.mrb[0].mxu0 %v4427
    %v4565 = vpop.f32.mrb[0].mxu0
    %v4566 = vadd.f32 %v292, %v4565
    %v4567 = vpop.f32.mrb[0].mxu0
    %4568 = vdwg.mxu0
    %v4569 = vld [vmem:[#allocation2 + $0xf] sm:$0x1]
    %4570 = vmatprep.subr.mxu0 0.0
    %4571 = vmatpush1.msra.mxu0 %v226
    %4572 = vmatprep.subr.mxu0 0.0
    %4573 = vmatpush1.msra.mxu0 %v227
    %4574 = vmatprep.subr.mxu0 0.0
    %4575 = vmatpush1.msra.mxu0 %v228
    %4576 = vmatprep.subr.mxu0 0.0
    %4577 = vmatpush1.msra.mxu0 %v229
    %4578 = vmatprep.subr.mxu0 0.0
    %4579 = vmatpush1.msra.mxu0 %v230
    %4580 = vmatprep.subr.mxu0 0.0
    %4581 = vmatpush1.msra.mxu0 %v231
    %4582 = vmatprep.subr.mxu0 0.0
    %4583 = vmatpush1.msra.mxu0 %v232
    %4584 = vmatprep.subr.mxu0 0.0
    %4585 = vmatpush1.msra.mxu0 %v233
    %4586 = vmatprep.subr.mxu0 0.0
    %4587 = vmatpush1.msra.mxu0 %v234
    %4588 = vmatprep.subr.mxu0 0.0
    %4589 = vmatpush1.msra.mxu0 %v235
    %4590 = vmatprep.subr.mxu0 0.0
    %4591 = vmatpush1.msra.mxu0 %v236
    %4592 = vmatprep.subr.mxu0 0.0
    %4593 = vmatpush1.msra.mxu0 %v237
    %4594 = vmatprep.subr.mxu0 0.0
    %4595 = vmatpush1.msra.mxu0 %v238
    %4596 = vmatprep.subr.mxu0 0.0
    %4597 = vmatpush1.msra.mxu0 %v239
    %4598 = vmatprep.subr.mxu0 0.0
    %4599 = vmatpush1.msra.mxu0 %v240
    %4600 = vmatprep.subr.mxu0 0.0
    %4601 = vmatpush1.msra.mxu0 %v241
    %4602 = vmatprep.subr.mxu0 0.0
    %4603 = vmatpush1.msra.mxu0 0.0
    %4604 = vmatprep.subr.mxu0 0.0
    %4605 = vmatpush1.msra.mxu0 0.0
    %4606 = vmatprep.subr.mxu0 0.0
    %4607 = vmatpush1.msra.mxu0 0.0
    %4608 = vmatprep.subr.mxu0 0.0
    %4609 = vmatpush1.msra.mxu0 0.0
    %4610 = vmatprep.subr.mxu0 0.0
    %4611 = vmatpush1.msra.mxu0 0.0
    %4612 = vmatprep.subr.mxu0 0.0
    %4613 = vmatpush1.msra.mxu0 0.0
    %4614 = vmatprep.subr.mxu0 0.0
    %4615 = vmatpush1.msra.mxu0 0.0
    %4616 = vmatprep.subr.mxu0 0.0
    %4617 = vmatpush1.msra.mxu0 0.0
    %4618 = vmatprep.subr.mxu0 0.0
    %4619 = vmatpush1.msra.mxu0 0.0
    %4620 = vmatprep.subr.mxu0 0.0
    %4621 = vmatpush1.msra.mxu0 0.0
    %4622 = vmatprep.subr.mxu0 0.0
    %4623 = vmatpush1.msra.mxu0 0.0
    %4624 = vmatprep.subr.mxu0 0.0
    %4625 = vmatpush1.msra.mxu0 0.0
    %4626 = vmatprep.subr.mxu0 0.0
    %4627 = vmatpush1.msra.mxu0 0.0
    %4628 = vmatprep.subr.mxu0 0.0
    %4629 = vmatpush1.msra.mxu0 0.0
    %4630 = vmatprep.subr.mxu0 0.0
    %4631 = vmatpush1.msra.mxu0 0.0
    %4632 = vmatprep.subr.mxu0 0.0
    %4633 = vmatpush1.msra.mxu0 0.0
    %4634 = vmatprep.mubr.f32.mxu0 0.0
    %4635 = vmatmul.mubr.f32.gmra.mrb[0].mxu0 %v4566
    %v4636 = vpop.f32.mrb[0].mxu0
    %v4637 = vadd.f32 0.0, %v4636
    %v4638 = vpop.f32.mrb[0].mxu0
    %4639 = vdwg.mxu0
    %v4640 = vadd.f32 %v4569, %v4637
    %v4641 = vtanh.pop %v4640
    %4642 = vmatprep.subr.mxu0 0.0
    %4643 = vmatpush1.msra.mxu0 %v242
    %4644 = vmatprep.subr.mxu0 0.0
    %4645 = vmatpush1.msra.mxu0 %v243
    %4646 = vmatprep.subr.mxu0 0.0
    %4647 = vmatpush1.msra.mxu0 %v244
    %4648 = vmatprep.subr.mxu0 0.0
    %4649 = vmatpush1.msra.mxu0 %v245
    %4650 = vmatprep.subr.mxu0 0.0
    %4651 = vmatpush1.msra.mxu0 %v246
    %4652 = vmatprep.subr.mxu0 0.0
    %4653 = vmatpush1.msra.mxu0 %v247
    %4654 = vmatprep.subr.mxu0 0.0
    %4655 = vmatpush1.msra.mxu0 %v248
    %4656 = vmatprep.subr.mxu0 0.0
    %4657 = vmatpush1.msra.mxu0 %v249
    %4658 = vmatprep.subr.mxu0 0.0
    %4659 = vmatpush1.msra.mxu0 %v250
    %4660 = vmatprep.subr.mxu0 0.0
    %4661 = vmatpush1.msra.mxu0 %v251
    %4662 = vmatprep.subr.mxu0 0.0
    %4663 = vmatpush1.msra.mxu0 %v252
    %4664 = vmatprep.subr.mxu0 0.0
    %4665 = vmatpush1.msra.mxu0 %v253
    %4666 = vmatprep.subr.mxu0 0.0
    %4667 = vmatpush1.msra.mxu0 %v254
    %4668 = vmatprep.subr.mxu0 0.0
    %4669 = vmatpush1.msra.mxu0 %v255
    %4670 = vmatprep.subr.mxu0 0.0
    %4671 = vmatpush1.msra.mxu0 %v256
    %4672 = vmatprep.subr.mxu0 0.0
    %4673 = vmatpush1.msra.mxu0 %v257
    %4674 = vmatprep.subr.mxu0 0.0
    %4675 = vmatpush1.msra.mxu0 0.0
    %4676 = vmatprep.subr.mxu0 0.0
    %4677 = vmatpush1.msra.mxu0 0.0
    %4678 = vmatprep.subr.mxu0 0.0
    %4679 = vmatpush1.msra.mxu0 0.0
    %4680 = vmatprep.subr.mxu0 0.0
    %4681 = vmatpush1.msra.mxu0 0.0
    %4682 = vmatprep.subr.mxu0 0.0
    %4683 = vmatpush1.msra.mxu0 0.0
    %4684 = vmatprep.subr.mxu0 0.0
    %4685 = vmatpush1.msra.mxu0 0.0
    %4686 = vmatprep.subr.mxu0 0.0
    %4687 = vmatpush1.msra.mxu0 0.0
    %4688 = vmatprep.subr.mxu0 0.0
    %4689 = vmatpush1.msra.mxu0 0.0
    %4690 = vmatprep.subr.mxu0 0.0
    %4691 = vmatpush1.msra.mxu0 0.0
    %4692 = vmatprep.subr.mxu0 0.0
    %4693 = vmatpush1.msra.mxu0 0.0
    %4694 = vmatprep.subr.mxu0 0.0
    %4695 = vmatpush1.msra.mxu0 0.0
    %4696 = vmatprep.subr.mxu0 0.0
    %4697 = vmatpush1.msra.mxu0 0.0
    %4698 = vmatprep.subr.mxu0 0.0
    %4699 = vmatpush1.msra.mxu0 0.0
    %4700 = vmatprep.subr.mxu0 0.0
    %4701 = vmatpush1.msra.mxu0 0.0
    %4702 = vmatprep.subr.mxu0 0.0
    %4703 = vmatpush1.msra.mxu0 0.0
    %4704 = vmatprep.subr.mxu0 0.0
    %4705 = vmatpush1.msra.mxu0 0.0
    %4706 = vmatprep.mubr.f32.mxu0 0.0
    %4707 = vmatmul.mubr.f32.gmra.mrb[0].mxu0 %v4641
    %v4708 = vpop.f32.mrb[0].mxu0
    %v4709 = vadd.f32 %v258, %v4708
    %v4710 = vpop.f32.mrb[0].mxu0
    %4711 = vdwg.mxu0
    %v4712 = vtanh.pop %v4709
    %4713 = vmatprep.subr.mxu0 0.0
    %4714 = vmatpush1.msra.mxu0 %v259
    %4715 = vmatprep.subr.mxu0 0.0
    %4716 = vmatpush1.msra.mxu0 %v260
    %4717 = vmatprep.subr.mxu0 0.0
    %4718 = vmatpush1.msra.mxu0 %v261
    %4719 = vmatprep.subr.mxu0 0.0
    %4720 = vmatpush1.msra.mxu0 %v262
    %4721 = vmatprep.subr.mxu0 0.0
    %4722 = vmatpush1.msra.mxu0 %v263
    %4723 = vmatprep.subr.mxu0 0.0
    %4724 = vmatpush1.msra.mxu0 %v264
    %4725 = vmatprep.subr.mxu0 0.0
    %4726 = vmatpush1.msra.mxu0 %v265
    %4727 = vmatprep.subr.mxu0 0.0
    %4728 = vmatpush1.msra.mxu0 %v266
    %4729 = vmatprep.subr.mxu0 0.0
    %4730 = vmatpush1.msra.mxu0 %v267
    %4731 = vmatprep.subr.mxu0 0.0
    %4732 = vmatpush1.msra.mxu0 %v268
    %4733 = vmatprep.subr.mxu0 0.0
    %4734 = vmatpush1.msra.mxu0 %v269
    %4735 = vmatprep.subr.mxu0 0.0
    %4736 = vmatpush1.msra.mxu0 %v270
    %4737 = vmatprep.subr.mxu0 0.0
    %4738 = vmatpush1.msra.mxu0 %v271
    %4739 = vmatprep.subr.mxu0 0.0
    %4740 = vmatpush1.msra.mxu0 %v272
    %4741 = vmatprep.subr.mxu0 0.0
    %4742 = vmatpush1.msra.mxu0 %v273
    %4743 = vmatprep.subr.mxu0 0.0
    %4744 = vmatpush1.msra.mxu0 %v274
    %4745 = vmatprep.subr.mxu0 0.0
    %4746 = vmatpush1.msra.mxu0 0.0
    %4747 = vmatprep.subr.mxu0 0.0
    %4748 = vmatpush1.msra.mxu0 0.0
    %4749 = vmatprep.subr.mxu0 0.0
    %4750 = vmatpush1.msra.mxu0 0.0
    %4751 = vmatprep.subr.mxu0 0.0
    %4752 = vmatpush1.msra.mxu0 0.0
    %4753 = vmatprep.subr.mxu0 0.0
    %4754 = vmatpush1.msra.mxu0 0.0
    %4755 = vmatprep.subr.mxu0 0.0
    %4756 = vmatpush1.msra.mxu0 0.0
    %4757 = vmatprep.subr.mxu0 0.0
    %4758 = vmatpush1.msra.mxu0 0.0
    %4759 = vmatprep.subr.mxu0 0.0
    %4760 = vmatpush1.msra.mxu0 0.0
    %4761 = vmatprep.subr.mxu0 0.0
    %4762 = vmatpush1.msra.mxu0 0.0
    %4763 = vmatprep.subr.mxu0 0.0
    %4764 = vmatpush1.msra.mxu0 0.0
    %4765 = vmatprep.subr.mxu0 0.0
    %4766 = vmatpush1.msra.mxu0 0.0
    %4767 = vmatprep.subr.mxu0 0.0
    %4768 = vmatpush1.msra.mxu0 0.0
    %4769 = vmatprep.subr.mxu0 0.0
    %4770 = vmatpush1.msra.mxu0 0.0
    %4771 = vmatprep.subr.mxu0 0.0
    %4772 = vmatpush1.msra.mxu0 0.0
    %4773 = vmatprep.subr.mxu0 0.0
    %4774 = vmatpush1.msra.mxu0 0.0
    %4775 = vmatprep.subr.mxu0 0.0
    %4776 = vmatpush1.msra.mxu0 0.0
    %4777 = vmatprep.mubr.f32.mxu0 0.0
    %4778 = vmatmul.mubr.f32.gmra.mrb[0].mxu0 %v4712
    %v4779 = vpop.f32.mrb[0].mxu0
    %v4780 = vadd.f32 %v275, %v4779
    %v4781 = vpop.f32.mrb[0].mxu0
    %4782 = vdwg.mxu0
    %4783 = vst [vmem:[#allocation14 + $0xf] sm:$0x1] %v4780
    %4784 = vmatprep.subr.mxu0 0.0
    %4785 = vmatpush1.msra.mxu0 %v276
    %4786 = vmatprep.subr.mxu0 0.0
    %4787 = vmatpush1.msra.mxu0 %v277
    %4788 = vmatprep.subr.mxu0 0.0
    %4789 = vmatpush1.msra.mxu0 %v278
    %4790 = vmatprep.subr.mxu0 0.0
    %4791 = vmatpush1.msra.mxu0 %v279
    %4792 = vmatprep.subr.mxu0 0.0
    %4793 = vmatpush1.msra.mxu0 %v280
    %4794 = vmatprep.subr.mxu0 0.0
    %4795 = vmatpush1.msra.mxu0 %v281
    %4796 = vmatprep.subr.mxu0 0.0
    %4797 = vmatpush1.msra.mxu0 %v282
    %4798 = vmatprep.subr.mxu0 0.0
    %4799 = vmatpush1.msra.mxu0 %v283
    %4800 = vmatprep.subr.mxu0 0.0
    %4801 = vmatpush1.msra.mxu0 %v284
    %4802 = vmatprep.subr.mxu0 0.0
    %4803 = vmatpush1.msra.mxu0 %v285
    %4804 = vmatprep.subr.mxu0 0.0
    %4805 = vmatpush1.msra.mxu0 %v286
    %4806 = vmatprep.subr.mxu0 0.0
    %4807 = vmatpush1.msra.mxu0 %v287
    %4808 = vmatprep.subr.mxu0 0.0
    %4809 = vmatpush1.msra.mxu0 %v288
    %4810 = vmatprep.subr.mxu0 0.0
    %4811 = vmatpush1.msra.mxu0 %v289
    %4812 = vmatprep.subr.mxu0 0.0
    %4813 = vmatpush1.msra.mxu0 %v290
    %4814 = vmatprep.subr.mxu0 0.0
    %4815 = vmatpush1.msra.mxu0 %v291
    %4816 = vmatprep.subr.mxu0 0.0
    %4817 = vmatpush1.msra.mxu0 0.0
    %4818 = vmatprep.subr.mxu0 0.0
    %4819 = vmatpush1.msra.mxu0 0.0
    %4820 = vmatprep.subr.mxu0 0.0
    %4821 = vmatpush1.msra.mxu0 0.0
    %4822 = vmatprep.subr.mxu0 0.0
    %4823 = vmatpush1.msra.mxu0 0.0
    %4824 = vmatprep.subr.mxu0 0.0
    %4825 = vmatpush1.msra.mxu0 0.0
    %4826 = vmatprep.subr.mxu0 0.0
    %4827 = vmatpush1.msra.mxu0 0.0
    %4828 = vmatprep.subr.mxu0 0.0
    %4829 = vmatpush1.msra.mxu0 0.0
    %4830 = vmatprep.subr.mxu0 0.0
    %4831 = vmatpush1.msra.mxu0 0.0
    %4832 = vmatprep.subr.mxu0 0.0
    %4833 = vmatpush1.msra.mxu0 0.0
    %4834 = vmatprep.subr.mxu0 0.0
    %4835 = vmatpush1.msra.mxu0 0.0
    %4836 = vmatprep.subr.mxu0 0.0
    %4837 = vmatpush1.msra.mxu0 0.0
    %4838 = vmatprep.subr.mxu0 0.0
    %4839 = vmatpush1.msra.mxu0 0.0
    %4840 = vmatprep.subr.mxu0 0.0
    %4841 = vmatpush1.msra.mxu0 0.0
    %4842 = vmatprep.subr.mxu0 0.0
    %4843 = vmatpush1.msra.mxu0 0.0
    %4844 = vmatprep.subr.mxu0 0.0
    %4845 = vmatpush1.msra.mxu0 0.0
    %4846 = vmatprep.subr.mxu0 0.0
    %4847 = vmatpush1.msra.mxu0 0.0
    %4848 = vmatprep.mubr.f32.mxu0 0.0
    %4849 = vmatmul.mubr.f32.gmra.mrb[0].mxu0 %v4712
    %v4850 = vpop.f32.mrb[0].mxu0
    %v4851 = vadd.f32 %v292, %v4850
    %v4852 = vpop.f32.mrb[0].mxu0
    %4853 = vdwg.mxu0
    %4854 = vst [vmem:[#allocation15] sm:$0x1] %v4851
    // Predicated region
    $region70: #{tpu_custom_call.1} parent=1 // pred_check
      _
    $region71: #{tpu_custom_call.1} parent=1 // pred_check_branch
      %4856 = sbr.rel (0) target = $region73
    $region72: #{tpu_custom_call.1} parent=1 // pred_region
      %s4858 = ssub.s32 256, 256
      %4859 = vsyncadd [#allocation5], %s4858
      %s4860 = sshll.u32 [#allocation14], 4
      %s4861 = int_to_ptr.vmem [resolvable:$true] %s4860
      %4866 = dma.vmem_to_hbm [thread:$0]  %s4861, 256, %s11, [#allocation5], 128, 128, 8
    $region73: #{tpu_custom_call.1} parent=1 // pred_fallthru
      _
    // Predicated region
    $region74: #{tpu_custom_call.1} parent=1 // pred_check
      _
    $region75: #{tpu_custom_call.1} parent=1 // pred_check_branch
      %4868 = sbr.rel (0) target = $region77
    $region76: #{tpu_custom_call.1} parent=1 // pred_region
      %s4870 = ssub.s32 16, 16
      %4871 = vsyncadd [#allocation16], %s4870
      %s4873 = sshll.u32 [#allocation15], 4
      %s4874 = int_to_ptr.vmem [resolvable:$true] %s4873
      %4876 = dma.vmem_to_hbm [thread:$0]  %s4874, 16, %s12, [#allocation16]
    $region77: #{tpu_custom_call.1} parent=1 // pred_fallthru
      _
    // Predicated region
    $region78: #{tpu_custom_call.1} parent=1 // pred_check
      _
    $region79: #{tpu_custom_call.1} parent=1 // pred_check_branch
      %4878 = sbr.rel (0) target = $region81
    $region80: #{tpu_custom_call.1} parent=1 // pred_region
      %4879 = dma.done [#allocation5], 256
    $region81: #{tpu_custom_call.1} parent=1 // pred_fallthru
      _
    // Predicated region
    $region82: #{tpu_custom_call.1} parent=1 // pred_check
      _
    $region83: #{tpu_custom_call.1} parent=1 // pred_check_branch
      %4881 = sbr.rel (0) target = $region85
    $region84: #{tpu_custom_call.1} parent=1 // pred_region
      %4882 = dma.done [#allocation16], 16
    $region85: #{tpu_custom_call.1} parent=1 // pred_fallthru
      _
    %4883 = vsyncpa [#allocation4], 1
    %4884 = vsyncpa [#allocation7], 1
    %4885 = vsyncpa [#allocation10], 1
    %4886 = vsyncpa [#allocation13], 1
    %4887 = vsyncpa [#allocation5], 1
    %4888 = vsyncpa [#allocation16], 1

</llo_original>
